<compile_context>
chip_gen: v7x
topology: tpu7x:2x2x1
jax: 0.10.0
libtpu: 0.0.40
codegen_flags: <defaults>
</compile_context>

<pallas_src>
import functools
import math

import jax
import jax.numpy as jnp
from jax.experimental import pallas as pl
from jax.experimental.pallas import tpu as pltpu


def _soft_attn_kernel(q_ref, v_ref, w_ref, mavg_ref, g_ref, b_ref, mconv_ref,
                      o_ref, *, nhead, head_dim, ln_eps):
    """One batch element: landmark projection -> LayerNorm -> GELU -> symmetric
    Gaussian-kernel attention fused with the precomputed depthwise-conv operator."""
    f32 = jnp.float32
    S = q_ref.shape[1]
    D = head_dim

    q = q_ref[0]                                             # (S, nhead*D) bf16

    # ----- Qlandmark_op: one block-diagonal MXU matmul, heads packed in lanes -----
    qlm = jnp.dot(q, w_ref[...], preferred_element_type=f32)  # (S, HD) f32

    # ----- per-head LayerNorm(head_dim), lane-dense via a block-averaging matmul:
    # mavg has 1/D in each DxD diagonal block, so x @ mavg is the per-head mean
    # broadcast over that head's lanes. -----
    mavg = mavg_ref[...]
    mu = jnp.dot(qlm, mavg, preferred_element_type=f32)
    xc = qlm - mu
    var = jnp.dot(xc * xc, mavg, preferred_element_type=f32)
    qn = xc * jax.lax.rsqrt(var + ln_eps) * g_ref[...] + b_ref[...]

    # ----- GELU (tanh approximation -> EUP) -----
    qg = 0.5 * qn * (1.0 + jnp.tanh(0.7978845608028654 *
                                    (qn + 0.044715 * qn * qn * qn)))
    qgb = qg.astype(jnp.bfloat16)                            # (S, HD)

    ones_sd = jnp.ones((S, D), f32)                          # hoisted out of the loop

    # ----- per-head Gaussian-kernel attention fused with the conv operator:
    #   x_h = (exp(-(sq_i + sq_j - 2*gram_ij)/2) + conv_op_h) @ v_h  -----
    xs = []
    for h in range(nhead):
        qh = qgb[:, h * D:(h + 1) * D]                       # (S, D) bf16
        qhf = qh.astype(f32)                                 # same rounded values
        qsq = qhf * qhf
        sq_col = jnp.sum(qsq, axis=-1, keepdims=True)        # (S, 1)
        # Row form of sq via a ones-matmul (mirrors matB_square in the reference);
        # stays >= 2-D, consistent with sq_col / gram, MXU has slack here.
        sq_row = jnp.einsum("sd,td->st", ones_sd, qsq,
                            preferred_element_type=f32)      # (S, S)
        gram = jnp.einsum("sd,td->st", qh, qh,
                          preferred_element_type=f32)        # (S, S) f32 acc
        attn = jnp.exp(gram - 0.5 * sq_col - 0.5 * sq_row)   # bounded by ~1
        op = (attn + mconv_ref[h].astype(f32)).astype(jnp.bfloat16)
        xs.append(jnp.dot(op, v_ref[0, h], preferred_element_type=f32))  # (S, D)

    # ----- lane-dense (S, nhead*D) output store -----
    o_ref[0] = jnp.concatenate(xs, axis=-1)


def _conv_operator(H, W, w_conv, kk):
    """(nhead, S, S) linear operator equivalent to the depthwise kk x kk conv
    (cross-correlation, zero padding) on the HxW token grid, with the cls token
    (sequence index 0) passed straight through.  Computed once in the wrapper."""
    nhead = w_conv.shape[0]
    pad = kk // 2
    hw = H * W
    ys = jnp.arange(hw, dtype=jnp.int32) // W
    xs = jnp.arange(hw, dtype=jnp.int32) % W
    dy = ys[None, :] - ys[:, None]                 # (out, in): y_in - y_out
    dx = xs[None, :] - xs[:, None]
    valid = (jnp.abs(dy) <= pad) & (jnp.abs(dx) <= pad)
    iy = jnp.clip(dy + pad, 0, kk - 1)
    ix = jnp.clip(dx + pad, 0, kk - 1)
    m_hw = jnp.where(valid[None], w_conv.astype(jnp.float32)[:, iy, ix], 0.0)
    m = jnp.zeros((nhead, hw + 1, hw + 1), jnp.float32)
    m = m.at[:, 1:, 1:].set(m_hw)
    m = m.at[:, 0, 0].set(1.0)                     # cls passthrough
    return m


def softmax_free_attention(Q, V, H, W, params, *, use_conv=3, ln_eps=1e-5):
    """Pallas wrapper reproducing SoftmaxFreeAttentionKernel.forward (ratio=1)."""
    b, nhead, S, D = Q.shape
    assert S == H * W + 1, "seq must be H*W + 1 (cls token at position 0)"
    HD = nhead * D
    scale = 1.0 / math.sqrt(math.sqrt(D))

    # Lane-dense packed Q (layout plumbing in the wrapper); V stays (b,nhead,S,D)
    # since it is only consumed by the per-head attention matmul.  Both ship bf16.
    q_packed = jnp.transpose(Q, (0, 2, 1, 3)).reshape(b, S, HD).astype(jnp.bfloat16)
    v_b = V.astype(jnp.bfloat16)

    # Block-diagonal landmark weight (the same Linear is shared by all heads) with
    # the 1/sqrt(sqrt(head_dim)) Q-scale folded in; passed once (constant index_map).
    wlm_t = jnp.transpose(params["w_lm"]).astype(jnp.float32) * scale   # (D, D)
    eye = jnp.eye(nhead, dtype=jnp.float32)
    w_blk = jnp.kron(eye, wlm_t).astype(jnp.bfloat16)                   # (HD, HD)

    # Block-averaging matrix for lane-dense per-head LayerNorm statistics.
    m_avg = jnp.kron(eye, jnp.full((D, D), 1.0 / D, jnp.float32))       # (HD, HD)

    gamma = jnp.tile(params["ln_gamma"].astype(jnp.float32), nhead).reshape(1, HD)
    beta = jnp.tile(params["ln_beta"].astype(jnp.float32), nhead).reshape(1, HD)

    m_conv = _conv_operator(H, W, params["w_conv"], use_conv).astype(jnp.bfloat16)

    kern = functools.partial(_soft_attn_kernel, nhead=nhead, head_dim=D,
                             ln_eps=ln_eps)

    out_packed = pl.pallas_call(
        kern,
        out_shape=jax.ShapeDtypeStruct((b, S, HD), jnp.float32),
        grid=(b,),
        in_specs=[
            pl.BlockSpec((1, S, HD), lambda i: (i, 0, 0)),           # Q packed
            pl.BlockSpec((1, nhead, S, D), lambda i: (i, 0, 0, 0)),  # V
            pl.BlockSpec((HD, HD), lambda i: (0, 0)),                # W block-diag
            pl.BlockSpec((HD, HD), lambda i: (0, 0)),                # block-avg (LN)
            pl.BlockSpec((1, HD), lambda i: (0, 0)),                 # LN gamma
            pl.BlockSpec((1, HD), lambda i: (0, 0)),                 # LN beta
            pl.BlockSpec((nhead, S, S), lambda i: (0, 0, 0)),        # conv operator
        ],
        out_specs=pl.BlockSpec((1, S, HD), lambda i: (i, 0, 0)),
        compiler_params=pltpu.CompilerParams(
            dimension_semantics=("parallel",)),   # batch axis shards across TCs
    )(q_packed, v_b, w_blk, m_avg, gamma, beta, m_conv)
    # TODO(synk): on v7x with tiny batches a (b, nhead) grid would load-balance the
    # two TensorCores better, but it gives up the 128-lane head packing; not worth
    # it at these shapes.

    # layout plumbing back to the module's (b, nhead, S, D) output
    return jnp.transpose(out_packed.reshape(b, S, nhead, D), (0, 2, 1, 3))


def reference_forward(Q, V, H, W, params, *, use_conv=3, ln_eps=1e-5):
    """Plain-JAX f32 reference matching the PyTorch forward (ratio=1 branch)."""
    b, nhead, S, D = Q.shape
    kk = use_conv
    pad = kk // 2
    q = Q / math.sqrt(math.sqrt(D))
    qlm = jnp.einsum("bhsd,ed->bhse", q, params["w_lm"])
    mu = jnp.mean(qlm, axis=-1, keepdims=True)
    var = jnp.mean((qlm - mu) ** 2, axis=-1, keepdims=True)
    qn = (qlm - mu) / jnp.sqrt(var + ln_eps) * params["ln_gamma"] + params["ln_beta"]
    qg = 0.5 * qn * (1.0 + jax.scipy.special.erf(qn / jnp.sqrt(2.0)))
    sq = jnp.sum(qg * qg, axis=-1, keepdims=True)
    gram = jnp.einsum("bhsd,bhtd->bhst", qg, qg)
    attn = jnp.exp(-0.5 * (sq + jnp.swapaxes(sq, -1, -2) - 2.0 * gram))
    X = jnp.einsum("bhst,bhtd->bhsd", attn, V)
    # depthwise conv on non-cls tokens, cls token added unchanged
    Vsp = V[:, :, 1:, :].reshape(b, nhead, H, W, D)
    Vc = jnp.transpose(Vsp, (0, 4, 1, 2, 3)).reshape(b * D, nhead, H, W)
    out = jax.lax.conv_general_dilated(
        Vc, params["w_conv"][:, None, :, :], window_strides=(1, 1),
        padding=((pad, pad), (pad, pad)),
        dimension_numbers=("NCHW", "OIHW", "NCHW"),
        feature_group_count=nhead)
    out = out.reshape(b, D, nhead, H * W)
    out = jnp.transpose(out, (0, 2, 3, 1))
    X = X.at[:, :, 1:, :].add(out)
    X = X.at[:, :, 0:1, :].add(V[:, :, 0:1, :])
    return X


if __name__ == "__main__":
    b, nhead, D = 2, 4, 32          # dim = 128, num_heads = 4 -> head_dim = 32
    H = W = 8
    S = H * W + 1                    # 65 (H*W tokens + cls token)
    KK = 3                           # use_conv = 3

    key = jax.random.PRNGKey(0)
    kq, kv, kw, kc = jax.random.split(key, 4)
    Q = jax.random.normal(kq, (b, nhead, S, D), jnp.float32)
    V = jax.random.normal(kv, (b, nhead, S, D), jnp.float32)
    params = {
        "w_lm": jax.random.normal(kw, (D, D), jnp.float32) * 0.2,   # Linear weight (out,in)
        "ln_gamma": jnp.ones((D,), jnp.float32),                    # LayerNorm init
        "ln_beta": jnp.zeros((D,), jnp.float32),
        "w_conv": jax.random.normal(kc, (nhead, KK, KK), jnp.float32) * 0.1,
    }

    out = jax.block_until_ready(softmax_free_attention(Q, V, H, W, params, use_conv=KK))
    ref = jax.block_until_ready(reference_forward(Q, V, H, W, params, use_conv=KK))

    assert out.shape == (b, nhead, S, D)
    abs_err = float(jnp.max(jnp.abs(out - ref)))
    mix_err = float(jnp.max(jnp.abs(out - ref) / (1.0 + jnp.abs(ref))))
    # bf16 MXU inputs + tanh-GELU vs the exact f32 erf reference: bf16-level slack.
    assert abs_err < 1e-1 and mix_err < 5e-2, (
        f"error too large: abs={abs_err} mixed={mix_err}")
    print("KERNEL_OK")
</pallas_src>

<mosaic_0001>
module attributes {stable_mosaic.version = 11 : i64} {
  func.func @_soft_attn_kernel(%arg0: i32, %arg1: memref<1x65x128xbf16, #tpu.memory_space<vmem>>, %arg2: memref<1x4x65x32xbf16, #tpu.memory_space<vmem>>, %arg3: memref<128x128xbf16, #tpu.memory_space<vmem>>, %arg4: memref<128x128xf32, #tpu.memory_space<vmem>>, %arg5: memref<1x128xf32, #tpu.memory_space<vmem>>, %arg6: memref<1x128xf32, #tpu.memory_space<vmem>>, %arg7: memref<4x65x65xbf16, #tpu.memory_space<vmem>>, %arg8: memref<1x65x128xf32, #tpu.memory_space<vmem>>) attributes {dimension_semantics = [#tpu.dimension_semantics<parallel>], iteration_bounds = array<i64: 2>, scalar_prefetch = 0 : i64, scratch_operands = 0 : i64, tpu.core_type = #tpu.core_type<tc>, window_params = [{transform_indices = @transform_0, window_bounds = array<i64: 1, 65, 128>}, {transform_indices = @transform_1, window_bounds = array<i64: 1, 4, 65, 32>}, {pipeline_mode = #tpu.pipeline_mode<synchronous>, transform_indices = @transform_2, window_bounds = array<i64: 128, 128>}, {pipeline_mode = #tpu.pipeline_mode<synchronous>, transform_indices = @transform_3, window_bounds = array<i64: 128, 128>}, {pipeline_mode = #tpu.pipeline_mode<synchronous>, transform_indices = @transform_4, window_bounds = array<i64: 1, 128>}, {pipeline_mode = #tpu.pipeline_mode<synchronous>, transform_indices = @transform_5, window_bounds = array<i64: 1, 128>}, {pipeline_mode = #tpu.pipeline_mode<synchronous>, transform_indices = @transform_6, window_bounds = array<i64: 4, 65, 65>}, {transform_indices = @transform_7, window_bounds = array<i64: 1, 65, 128>}]} {
    %c0 = arith.constant 0 : index
    %c0_0 = arith.constant 0 : index
    %c0_1 = arith.constant 0 : index
    %0 = vector.load %arg1[%c0, %c0_0, %c0_1] : memref<1x65x128xbf16, #tpu.memory_space<vmem>>, vector<1x65x128xbf16>
    %1 = vector.shape_cast %0 : vector<1x65x128xbf16> to vector<65x128xbf16>
    %c0_2 = arith.constant 0 : index
    %c0_3 = arith.constant 0 : index
    %2 = vector.load %arg3[%c0_2, %c0_3] : memref<128x128xbf16, #tpu.memory_space<vmem>>, vector<128x128xbf16>
    %cst = arith.constant dense<0.000000e+00> : vector<65x128xf32>
    %3 = tpu.matmul %1, %2, %cst {dimension_numbers = #tpu.dot_dimension_numbers<[1], [0], [0], [1], [0, 0, 1, 1], [], []>} : vector<65x128xbf16>, vector<128x128xbf16>, vector<65x128xf32> -> vector<65x128xf32>
    %c0_4 = arith.constant 0 : index
    %c0_5 = arith.constant 0 : index
    %4 = vector.load %arg4[%c0_4, %c0_5] : memref<128x128xf32, #tpu.memory_space<vmem>>, vector<128x128xf32>
    %cst_6 = arith.constant dense<0.000000e+00> : vector<65x128xf32>
    %5 = tpu.matmul %3, %4, %cst_6 {dimension_numbers = #tpu.dot_dimension_numbers<[1], [0], [0], [1], [0, 0, 1, 1], [], []>} : vector<65x128xf32>, vector<128x128xf32>, vector<65x128xf32> -> vector<65x128xf32>
    %6 = arith.subf %3, %5 : vector<65x128xf32>
    %7 = arith.mulf %6, %6 : vector<65x128xf32>
    %cst_7 = arith.constant dense<0.000000e+00> : vector<65x128xf32>
    %8 = tpu.matmul %7, %4, %cst_7 {dimension_numbers = #tpu.dot_dimension_numbers<[1], [0], [0], [1], [0, 0, 1, 1], [], []>} : vector<65x128xf32>, vector<128x128xf32>, vector<65x128xf32> -> vector<65x128xf32>
    %cst_8 = arith.constant 9.99999974E-6 : f32
    %9 = vector.broadcast %cst_8 : f32 to vector<65x128xf32>
    %10 = arith.addf %8, %9 : vector<65x128xf32>
    %11 = math.rsqrt %10 : vector<65x128xf32>
    %12 = arith.mulf %6, %11 : vector<65x128xf32>
    %c0_9 = arith.constant 0 : index
    %c0_10 = arith.constant 0 : index
    %13 = vector.load %arg5[%c0_9, %c0_10] : memref<1x128xf32, #tpu.memory_space<vmem>>, vector<1x128xf32>
    %14 = vector.broadcast %13 : vector<1x128xf32> to vector<65x128xf32>
    %15 = arith.mulf %12, %14 : vector<65x128xf32>
    %c0_11 = arith.constant 0 : index
    %c0_12 = arith.constant 0 : index
    %16 = vector.load %arg6[%c0_11, %c0_12] : memref<1x128xf32, #tpu.memory_space<vmem>>, vector<1x128xf32>
    %17 = vector.broadcast %16 : vector<1x128xf32> to vector<65x128xf32>
    %18 = arith.addf %15, %17 : vector<65x128xf32>
    %cst_13 = arith.constant 5.000000e-01 : f32
    %19 = vector.broadcast %cst_13 : f32 to vector<65x128xf32>
    %20 = arith.mulf %19, %18 : vector<65x128xf32>
    %cst_14 = arith.constant 4.471500e-02 : f32
    %21 = vector.broadcast %cst_14 : f32 to vector<65x128xf32>
    %22 = arith.mulf %21, %18 : vector<65x128xf32>
    %23 = arith.mulf %22, %18 : vector<65x128xf32>
    %24 = arith.mulf %23, %18 : vector<65x128xf32>
    %25 = arith.addf %18, %24 : vector<65x128xf32>
    %cst_15 = arith.constant 0.797884583 : f32
    %26 = vector.broadcast %cst_15 : f32 to vector<65x128xf32>
    %27 = arith.mulf %26, %25 : vector<65x128xf32>
    %28 = math.tanh %27 : vector<65x128xf32>
    %cst_16 = arith.constant 1.000000e+00 : f32
    %29 = vector.broadcast %cst_16 : f32 to vector<65x128xf32>
    %30 = arith.addf %29, %28 : vector<65x128xf32>
    %31 = arith.mulf %20, %30 : vector<65x128xf32>
    %32 = arith.truncf %31 : vector<65x128xf32> to vector<65x128xbf16>
    %cst_17 = arith.constant 1.000000e+00 : f32
    %33 = vector.broadcast %cst_17 : f32 to vector<65x32xf32>
    %34 = vector.extract_strided_slice %32 {offsets = [0, 0], sizes = [65, 32], strides = [1, 1]} : vector<65x128xbf16> to vector<65x32xbf16>
    %35 = arith.extf %34 : vector<65x32xbf16> to vector<65x32xf32>
    %36 = arith.mulf %35, %35 : vector<65x32xf32>
    %cst_18 = arith.constant dense<0.000000e+00> : vector<65xf32>
    %37 = vector.multi_reduction <add>, %36, %cst_18 [1] : vector<65x32xf32> to vector<65xf32>
    %38 = vector.shape_cast %37 : vector<65xf32> to vector<65x1xf32>
    "tpu.trace_start"() <{level = 10 : i32, message = "sd,td->st"}> : () -> ()
    %cst_19 = arith.constant dense<0.000000e+00> : vector<65x65xf32>
    %39 = tpu.matmul %33, %36, %cst_19 {dimension_numbers = #tpu.dot_dimension_numbers<[1], [1], [0], [0], [0, 0, 1, 0], [], []>} : vector<65x32xf32>, vector<65x32xf32>, vector<65x65xf32> -> vector<65x65xf32>
    %cst_20 = arith.constant dense<0.000000e+00> : vector<65x65xf32>
    %40 = tpu.matmul %34, %34, %cst_20 {dimension_numbers = #tpu.dot_dimension_numbers<[1], [1], [0], [0], [0, 0, 1, 0], [], []>} : vector<65x32xbf16>, vector<65x32xbf16>, vector<65x65xf32> -> vector<65x65xf32>
    "tpu.trace_stop"() : () -> ()
    %cst_21 = arith.constant 5.000000e-01 : f32
    %41 = vector.broadcast %cst_21 : f32 to vector<65x1xf32>
    %42 = arith.mulf %41, %38 : vector<65x1xf32>
    %43 = vector.broadcast %42 : vector<65x1xf32> to vector<65x65xf32>
    %44 = arith.subf %40, %43 : vector<65x65xf32>
    %cst_22 = arith.constant 5.000000e-01 : f32
    %45 = vector.broadcast %cst_22 : f32 to vector<65x65xf32>
    %46 = arith.mulf %45, %39 : vector<65x65xf32>
    %47 = arith.subf %44, %46 : vector<65x65xf32>
    %48 = math.exp %47 : vector<65x65xf32>
    %c0_23 = arith.constant 0 : index
    %c0_24 = arith.constant 0 : index
    %c0_25 = arith.constant 0 : index
    %49 = vector.load %arg7[%c0_23, %c0_24, %c0_25] : memref<4x65x65xbf16, #tpu.memory_space<vmem>>, vector<1x65x65xbf16>
    %50 = vector.shape_cast %49 : vector<1x65x65xbf16> to vector<65x65xbf16>
    %51 = arith.extf %50 : vector<65x65xbf16> to vector<65x65xf32>
    %52 = arith.addf %48, %51 : vector<65x65xf32>
    %53 = arith.truncf %52 : vector<65x65xf32> to vector<65x65xbf16>
    %c0_26 = arith.constant 0 : index
    %c0_27 = arith.constant 0 : index
    %c0_28 = arith.constant 0 : index
    %c0_29 = arith.constant 0 : index
    %54 = vector.load %arg2[%c0_26, %c0_27, %c0_28, %c0_29] : memref<1x4x65x32xbf16, #tpu.memory_space<vmem>>, vector<1x1x65x32xbf16>
    %55 = vector.shape_cast %54 : vector<1x1x65x32xbf16> to vector<65x32xbf16>
    %cst_30 = arith.constant dense<0.000000e+00> : vector<65x32xf32>
    %56 = tpu.matmul %53, %55, %cst_30 {dimension_numbers = #tpu.dot_dimension_numbers<[1], [0], [0], [1], [0, 0, 1, 1], [], []>} : vector<65x65xbf16>, vector<65x32xbf16>, vector<65x32xf32> -> vector<65x32xf32>
    %57 = vector.extract_strided_slice %32 {offsets = [0, 32], sizes = [65, 32], strides = [1, 1]} : vector<65x128xbf16> to vector<65x32xbf16>
    %58 = arith.extf %57 : vector<65x32xbf16> to vector<65x32xf32>
    %59 = arith.mulf %58, %58 : vector<65x32xf32>
    %cst_31 = arith.constant dense<0.000000e+00> : vector<65xf32>
    %60 = vector.multi_reduction <add>, %59, %cst_31 [1] : vector<65x32xf32> to vector<65xf32>
    %61 = vector.shape_cast %60 : vector<65xf32> to vector<65x1xf32>
    "tpu.trace_start"() <{level = 10 : i32, message = "sd,td->st"}> : () -> ()
    %cst_32 = arith.constant dense<0.000000e+00> : vector<65x65xf32>
    %62 = tpu.matmul %33, %59, %cst_32 {dimension_numbers = #tpu.dot_dimension_numbers<[1], [1], [0], [0], [0, 0, 1, 0], [], []>} : vector<65x32xf32>, vector<65x32xf32>, vector<65x65xf32> -> vector<65x65xf32>
    %cst_33 = arith.constant dense<0.000000e+00> : vector<65x65xf32>
    %63 = tpu.matmul %57, %57, %cst_33 {dimension_numbers = #tpu.dot_dimension_numbers<[1], [1], [0], [0], [0, 0, 1, 0], [], []>} : vector<65x32xbf16>, vector<65x32xbf16>, vector<65x65xf32> -> vector<65x65xf32>
    "tpu.trace_stop"() : () -> ()
    %cst_34 = arith.constant 5.000000e-01 : f32
    %64 = vector.broadcast %cst_34 : f32 to vector<65x1xf32>
    %65 = arith.mulf %64, %61 : vector<65x1xf32>
    %66 = vector.broadcast %65 : vector<65x1xf32> to vector<65x65xf32>
    %67 = arith.subf %63, %66 : vector<65x65xf32>
    %cst_35 = arith.constant 5.000000e-01 : f32
    %68 = vector.broadcast %cst_35 : f32 to vector<65x65xf32>
    %69 = arith.mulf %68, %62 : vector<65x65xf32>
    %70 = arith.subf %67, %69 : vector<65x65xf32>
    %71 = math.exp %70 : vector<65x65xf32>
    %c1 = arith.constant 1 : index
    %c0_36 = arith.constant 0 : index
    %c0_37 = arith.constant 0 : index
    %72 = vector.load %arg7[%c1, %c0_36, %c0_37] : memref<4x65x65xbf16, #tpu.memory_space<vmem>>, vector<1x65x65xbf16>
    %73 = vector.shape_cast %72 : vector<1x65x65xbf16> to vector<65x65xbf16>
    %74 = arith.extf %73 : vector<65x65xbf16> to vector<65x65xf32>
    %75 = arith.addf %71, %74 : vector<65x65xf32>
    %76 = arith.truncf %75 : vector<65x65xf32> to vector<65x65xbf16>
    %c0_38 = arith.constant 0 : index
    %c1_39 = arith.constant 1 : index
    %c0_40 = arith.constant 0 : index
    %c0_41 = arith.constant 0 : index
    %77 = vector.load %arg2[%c0_38, %c1_39, %c0_40, %c0_41] : memref<1x4x65x32xbf16, #tpu.memory_space<vmem>>, vector<1x1x65x32xbf16>
    %78 = vector.shape_cast %77 : vector<1x1x65x32xbf16> to vector<65x32xbf16>
    %cst_42 = arith.constant dense<0.000000e+00> : vector<65x32xf32>
    %79 = tpu.matmul %76, %78, %cst_42 {dimension_numbers = #tpu.dot_dimension_numbers<[1], [0], [0], [1], [0, 0, 1, 1], [], []>} : vector<65x65xbf16>, vector<65x32xbf16>, vector<65x32xf32> -> vector<65x32xf32>
    %80 = vector.extract_strided_slice %32 {offsets = [0, 64], sizes = [65, 32], strides = [1, 1]} : vector<65x128xbf16> to vector<65x32xbf16>
    %81 = arith.extf %80 : vector<65x32xbf16> to vector<65x32xf32>
    %82 = arith.mulf %81, %81 : vector<65x32xf32>
    %cst_43 = arith.constant dense<0.000000e+00> : vector<65xf32>
    %83 = vector.multi_reduction <add>, %82, %cst_43 [1] : vector<65x32xf32> to vector<65xf32>
    %84 = vector.shape_cast %83 : vector<65xf32> to vector<65x1xf32>
    "tpu.trace_start"() <{level = 10 : i32, message = "sd,td->st"}> : () -> ()
    %cst_44 = arith.constant dense<0.000000e+00> : vector<65x65xf32>
    %85 = tpu.matmul %33, %82, %cst_44 {dimension_numbers = #tpu.dot_dimension_numbers<[1], [1], [0], [0], [0, 0, 1, 0], [], []>} : vector<65x32xf32>, vector<65x32xf32>, vector<65x65xf32> -> vector<65x65xf32>
    %cst_45 = arith.constant dense<0.000000e+00> : vector<65x65xf32>
    %86 = tpu.matmul %80, %80, %cst_45 {dimension_numbers = #tpu.dot_dimension_numbers<[1], [1], [0], [0], [0, 0, 1, 0], [], []>} : vector<65x32xbf16>, vector<65x32xbf16>, vector<65x65xf32> -> vector<65x65xf32>
    "tpu.trace_stop"() : () -> ()
    %cst_46 = arith.constant 5.000000e-01 : f32
    %87 = vector.broadcast %cst_46 : f32 to vector<65x1xf32>
    %88 = arith.mulf %87, %84 : vector<65x1xf32>
    %89 = vector.broadcast %88 : vector<65x1xf32> to vector<65x65xf32>
    %90 = arith.subf %86, %89 : vector<65x65xf32>
    %cst_47 = arith.constant 5.000000e-01 : f32
    %91 = vector.broadcast %cst_47 : f32 to vector<65x65xf32>
    %92 = arith.mulf %91, %85 : vector<65x65xf32>
    %93 = arith.subf %90, %92 : vector<65x65xf32>
    %94 = math.exp %93 : vector<65x65xf32>
    %c2 = arith.constant 2 : index
    %c0_48 = arith.constant 0 : index
    %c0_49 = arith.constant 0 : index
    %95 = vector.load %arg7[%c2, %c0_48, %c0_49] : memref<4x65x65xbf16, #tpu.memory_space<vmem>>, vector<1x65x65xbf16>
    %96 = vector.shape_cast %95 : vector<1x65x65xbf16> to vector<65x65xbf16>
    %97 = arith.extf %96 : vector<65x65xbf16> to vector<65x65xf32>
    %98 = arith.addf %94, %97 : vector<65x65xf32>
    %99 = arith.truncf %98 : vector<65x65xf32> to vector<65x65xbf16>
    %c0_50 = arith.constant 0 : index
    %c2_51 = arith.constant 2 : index
    %c0_52 = arith.constant 0 : index
    %c0_53 = arith.constant 0 : index
    %100 = vector.load %arg2[%c0_50, %c2_51, %c0_52, %c0_53] : memref<1x4x65x32xbf16, #tpu.memory_space<vmem>>, vector<1x1x65x32xbf16>
    %101 = vector.shape_cast %100 : vector<1x1x65x32xbf16> to vector<65x32xbf16>
    %cst_54 = arith.constant dense<0.000000e+00> : vector<65x32xf32>
    %102 = tpu.matmul %99, %101, %cst_54 {dimension_numbers = #tpu.dot_dimension_numbers<[1], [0], [0], [1], [0, 0, 1, 1], [], []>} : vector<65x65xbf16>, vector<65x32xbf16>, vector<65x32xf32> -> vector<65x32xf32>
    %103 = vector.extract_strided_slice %32 {offsets = [0, 96], sizes = [65, 32], strides = [1, 1]} : vector<65x128xbf16> to vector<65x32xbf16>
    %104 = arith.extf %103 : vector<65x32xbf16> to vector<65x32xf32>
    %105 = arith.mulf %104, %104 : vector<65x32xf32>
    %cst_55 = arith.constant dense<0.000000e+00> : vector<65xf32>
    %106 = vector.multi_reduction <add>, %105, %cst_55 [1] : vector<65x32xf32> to vector<65xf32>
    %107 = vector.shape_cast %106 : vector<65xf32> to vector<65x1xf32>
    "tpu.trace_start"() <{level = 10 : i32, message = "sd,td->st"}> : () -> ()
    %cst_56 = arith.constant dense<0.000000e+00> : vector<65x65xf32>
    %108 = tpu.matmul %33, %105, %cst_56 {dimension_numbers = #tpu.dot_dimension_numbers<[1], [1], [0], [0], [0, 0, 1, 0], [], []>} : vector<65x32xf32>, vector<65x32xf32>, vector<65x65xf32> -> vector<65x65xf32>
    %cst_57 = arith.constant dense<0.000000e+00> : vector<65x65xf32>
    %109 = tpu.matmul %103, %103, %cst_57 {dimension_numbers = #tpu.dot_dimension_numbers<[1], [1], [0], [0], [0, 0, 1, 0], [], []>} : vector<65x32xbf16>, vector<65x32xbf16>, vector<65x65xf32> -> vector<65x65xf32>
    "tpu.trace_stop"() : () -> ()
    %cst_58 = arith.constant 5.000000e-01 : f32
    %110 = vector.broadcast %cst_58 : f32 to vector<65x1xf32>
    %111 = arith.mulf %110, %107 : vector<65x1xf32>
    %112 = vector.broadcast %111 : vector<65x1xf32> to vector<65x65xf32>
    %113 = arith.subf %109, %112 : vector<65x65xf32>
    %cst_59 = arith.constant 5.000000e-01 : f32
    %114 = vector.broadcast %cst_59 : f32 to vector<65x65xf32>
    %115 = arith.mulf %114, %108 : vector<65x65xf32>
    %116 = arith.subf %113, %115 : vector<65x65xf32>
    %117 = math.exp %116 : vector<65x65xf32>
    %c3 = arith.constant 3 : index
    %c0_60 = arith.constant 0 : index
    %c0_61 = arith.constant 0 : index
    %118 = vector.load %arg7[%c3, %c0_60, %c0_61] : memref<4x65x65xbf16, #tpu.memory_space<vmem>>, vector<1x65x65xbf16>
    %119 = vector.shape_cast %118 : vector<1x65x65xbf16> to vector<65x65xbf16>
    %120 = arith.extf %119 : vector<65x65xbf16> to vector<65x65xf32>
    %121 = arith.addf %117, %120 : vector<65x65xf32>
    %122 = arith.truncf %121 : vector<65x65xf32> to vector<65x65xbf16>
    %c0_62 = arith.constant 0 : index
    %c3_63 = arith.constant 3 : index
    %c0_64 = arith.constant 0 : index
    %c0_65 = arith.constant 0 : index
    %123 = vector.load %arg2[%c0_62, %c3_63, %c0_64, %c0_65] : memref<1x4x65x32xbf16, #tpu.memory_space<vmem>>, vector<1x1x65x32xbf16>
    %124 = vector.shape_cast %123 : vector<1x1x65x32xbf16> to vector<65x32xbf16>
    %cst_66 = arith.constant dense<0.000000e+00> : vector<65x32xf32>
    %125 = tpu.matmul %122, %124, %cst_66 {dimension_numbers = #tpu.dot_dimension_numbers<[1], [0], [0], [1], [0, 0, 1, 1], [], []>} : vector<65x65xbf16>, vector<65x32xbf16>, vector<65x32xf32> -> vector<65x32xf32>
    %126 = tpu.concatenate %56, %79, %102, %125 in 1 : vector<65x32xf32>, vector<65x32xf32>, vector<65x32xf32>, vector<65x32xf32> -> vector<65x128xf32>
    %c0_67 = arith.constant 0 : index
    %c0_68 = arith.constant 0 : index
    %c0_69 = arith.constant 0 : index
    %127 = vector.load %arg8[%c0_67, %c0_68, %c0_69] : memref<1x65x128xf32, #tpu.memory_space<vmem>>, vector<1x65x128xf32>
    %128 = vector.shape_cast %127 : vector<1x65x128xf32> to vector<65x128xf32>
    %129 = vector.shape_cast %126 : vector<65x128xf32> to vector<1x65x128xf32>
    tpu.vector_store %arg8[%c0_67, %c0_68, %c0_69], %129 {strides = array<i32>} : memref<1x65x128xf32, #tpu.memory_space<vmem>>, vector<1x65x128xf32>,
    return
  }
  func.func @transform_0(%arg0: i32) -> (i32, i32, i32) {
    %c0_i32 = arith.constant 0 : i32
    %c0_i32_0 = arith.constant 0 : i32
    %c0_i32_1 = arith.constant 0 : i32
    return %arg0, %c0_i32, %c0_i32_0 : i32, i32, i32
  }
  func.func @transform_1(%arg0: i32) -> (i32, i32, i32, i32) {
    %c0_i32 = arith.constant 0 : i32
    %c0_i32_0 = arith.constant 0 : i32
    %c0_i32_1 = arith.constant 0 : i32
    %c0_i32_2 = arith.constant 0 : i32
    return %arg0, %c0_i32, %c0_i32_0, %c0_i32_1 : i32, i32, i32, i32
  }
  func.func @transform_2(%arg0: i32) -> (i32, i32) {
    %c0_i32 = arith.constant 0 : i32
    %c0_i32_0 = arith.constant 0 : i32
    %c0_i32_1 = arith.constant 0 : i32
    return %c0_i32, %c0_i32_0 : i32, i32
  }
  func.func @transform_3(%arg0: i32) -> (i32, i32) {
    %c0_i32 = arith.constant 0 : i32
    %c0_i32_0 = arith.constant 0 : i32
    %c0_i32_1 = arith.constant 0 : i32
    return %c0_i32, %c0_i32_0 : i32, i32
  }
  func.func @transform_4(%arg0: i32) -> (i32, i32) {
    %c0_i32 = arith.constant 0 : i32
    %c0_i32_0 = arith.constant 0 : i32
    %c0_i32_1 = arith.constant 0 : i32
    return %c0_i32, %c0_i32_0 : i32, i32
  }
  func.func @transform_5(%arg0: i32) -> (i32, i32) {
    %c0_i32 = arith.constant 0 : i32
    %c0_i32_0 = arith.constant 0 : i32
    %c0_i32_1 = arith.constant 0 : i32
    return %c0_i32, %c0_i32_0 : i32, i32
  }
  func.func @transform_6(%arg0: i32) -> (i32, i32, i32) {
    %c0_i32 = arith.constant 0 : i32
    %c0_i32_0 = arith.constant 0 : i32
    %c0_i32_1 = arith.constant 0 : i32
    %c0_i32_2 = arith.constant 0 : i32
    return %c0_i32, %c0_i32_0, %c0_i32_1 : i32, i32, i32
  }
  func.func @transform_7(%arg0: i32) -> (i32, i32, i32) {
    %c0_i32 = arith.constant 0 : i32
    %c0_i32_0 = arith.constant 0 : i32
    %c0_i32_1 = arith.constant 0 : i32
    return %arg0, %c0_i32, %c0_i32_0 : i32, i32, i32
  }
}

</mosaic_0001>

<llo_original>
// kernel: tpu_custom_call.1
$region0: #{tpu_custom_call.1}
  #allocation0 [shape = 'u32[]', space=smem, size = 0x4, offset = 0x4, fixed_abs, tag = 'smem constant byte address 0x4 - core index']
  #allocation1 [shape = 'u32[144,128]{1,0:T(1,128)}', space=vmem, size = 0x12000, scoped, tag = 'internal scratch']
  %s0 = inlined_call_operand.vmem [shape: bf16[2,65,128], index: 0, kind: input, shape index: {}]
  %s1 = inlined_call_operand.vmem [shape: bf16[2,4,65,32], index: 1, kind: input, shape index: {}]
  %s2 = inlined_call_operand.vmem [shape: bf16[128,128], index: 2, kind: input, shape index: {}]
  %s3 = inlined_call_operand.vmem [shape: f32[128,128], index: 3, kind: input, shape index: {}]
  %s4 = inlined_call_operand.vmem [shape: f32[1,128], index: 4, kind: input, shape index: {}]
  %s5 = inlined_call_operand.vmem [shape: f32[1,128], index: 5, kind: input, shape index: {}]
  %s6 = inlined_call_operand.vmem [shape: bf16[4,65,65], index: 6, kind: input, shape index: {}]
  %s7 = inlined_call_operand.vmem [shape: f32[2,65,128], index: 7, kind: output, shape index: {}]
  %s8 = sld [smem:[#allocation0]]
  $region61: #{tpu_custom_call.1} parent=0
    _
  %s10 = ssub.s32 1, %s8
  %s11 = scalar_select 0, %s10, %s8
  loop: start=0, step=1, limit=4
  $region2: #{tpu_custom_call.1} parent=0 // loop_pre_header
    _
  $region3: #{tpu_custom_call.1} parent=0 // loop_header
    %s13 = sphi 0, %s17
    %p14 = scmp.ge.s32.totalorder %s13, 4
    %s23 = sphi 0, %s25
    %s26 = sphi 0, %s23
    %s27 = sphi 0, %s26
    %s43 = sphi 0, %s27
    %s49 = sphi 0, %s51
    %s52 = sphi 0, %s49
    %s53 = sphi 0, %s52
    %s69 = sphi 0, %s53
    %s73 = sphi 0, %s73
    %s75 = sphi 0, %s73
    %s76 = sphi 0, %s75
    %s90 = sphi 0, %s76
    %s94 = sphi 0, %s94
    %s96 = sphi 0, %s94
    %s97 = sphi 0, %s96
    %s111 = sphi 0, %s97
    %s115 = sphi 0, %s115
    %s117 = sphi 0, %s115
    %s118 = sphi 0, %s117
    %s132 = sphi 0, %s118
    %s136 = sphi 0, %s136
    %s138 = sphi 0, %s136
    %s139 = sphi 0, %s138
    %s153 = sphi 0, %s139
    %s157 = sphi 0, %s157
    %s159 = sphi 0, %s157
    %s160 = sphi 0, %s159
    %s174 = sphi 0, %s160
    %s180 = sphi 0, %s182
    %s183 = sphi 0, %s180
    %s184 = sphi 0, %s183
    %s200 = sphi 0, %s184
  $region4: #{tpu_custom_call.1} parent=0 // loop_header_branch
    %16 = sbr.rel (%p14) target = $region8
  $region5: #{tpu_custom_call.1} parent=0 // loop_body
    %s18 = ssub.s32 %s13, 1
    %s19 = ssub.s32 %s13, 2
    %s20 = sadd.s32 %s13, 1
    %s21 = ssub.s32 %s13, %s20
    %p22 = scmp.eq.s32.totalorder %s21, 0
    %s24 = sadd.s32 %s23, 1
    %s25 = scalar_select %p22, %s23, %s24
    %p28 = pneg %p22
    %p29 = scmp.eq.s32.totalorder %s13, 1
    %p30 = por %p28, %p29
    %p31 = scmp.ne.s32.totalorder %s23, %s26
    %p32 = scmp.eq.s32.totalorder %s13, 0
    %p33 = por %p31, %p32
    %p34 = scmp.ne.s32.totalorder %s23, %s26
    %p35 = scmp.eq.s32.totalorder %s18, 1
    %p36 = por %p34, %p35
    %p37 = scmp.ne.s32.totalorder %s26, %s27
    %p38 = scmp.eq.s32.totalorder %s18, 0
    %p39 = por %p37, %p38
    %p40 = scmp.ne.s32.totalorder %s26, %s27
    %p41 = scmp.eq.s32.totalorder %s19, 1
    %p42 = por %p40, %p41
    %p44 = scmp.ne.s32.totalorder %s27, %s43
    %p45 = scmp.eq.s32.totalorder %s19, 0
    %p46 = por %p44, %p45
    %s47 = ssub.s32 %s13, %s20
    %p48 = scmp.eq.s32.totalorder %s47, 0
    %s50 = sadd.s32 %s49, 1
    %s51 = scalar_select %p48, %s49, %s50
    %p54 = pneg %p48
    %p55 = scmp.eq.s32.totalorder %s13, 1
    %p56 = por %p54, %p55
    %p57 = scmp.ne.s32.totalorder %s49, %s52
    %p58 = scmp.eq.s32.totalorder %s13, 0
    %p59 = por %p57, %p58
    %p60 = scmp.ne.s32.totalorder %s49, %s52
    %p61 = scmp.eq.s32.totalorder %s18, 1
    %p62 = por %p60, %p61
    %p63 = scmp.ne.s32.totalorder %s52, %s53
    %p64 = scmp.eq.s32.totalorder %s18, 0
    %p65 = por %p63, %p64
    %p66 = scmp.ne.s32.totalorder %s52, %s53
    %p67 = scmp.eq.s32.totalorder %s19, 1
    %p68 = por %p66, %p67
    %p70 = scmp.ne.s32.totalorder %s53, %s69
    %p71 = scmp.eq.s32.totalorder %s19, 0
    %p72 = por %p70, %p71
    %s74 = sadd.s32 %s73, 1
    %p77 = scmp.eq.s32.totalorder %s13, 1
    %p78 = scmp.ne.s32.totalorder %s73, %s75
    %p79 = scmp.eq.s32.totalorder %s13, 0
    %p80 = por %p78, %p79
    %p81 = scmp.ne.s32.totalorder %s73, %s75
    %p82 = scmp.eq.s32.totalorder %s18, 1
    %p83 = por %p81, %p82
    %p84 = scmp.ne.s32.totalorder %s75, %s76
    %p85 = scmp.eq.s32.totalorder %s18, 0
    %p86 = por %p84, %p85
    %p87 = scmp.ne.s32.totalorder %s75, %s76
    %p88 = scmp.eq.s32.totalorder %s19, 1
    %p89 = por %p87, %p88
    %p91 = scmp.ne.s32.totalorder %s76, %s90
    %p92 = scmp.eq.s32.totalorder %s19, 0
    %p93 = por %p91, %p92
    %s95 = sadd.s32 %s94, 1
    %p98 = scmp.eq.s32.totalorder %s13, 1
    %p99 = scmp.ne.s32.totalorder %s94, %s96
    %p100 = scmp.eq.s32.totalorder %s13, 0
    %p101 = por %p99, %p100
    %p102 = scmp.ne.s32.totalorder %s94, %s96
    %p103 = scmp.eq.s32.totalorder %s18, 1
    %p104 = por %p102, %p103
    %p105 = scmp.ne.s32.totalorder %s96, %s97
    %p106 = scmp.eq.s32.totalorder %s18, 0
    %p107 = por %p105, %p106
    %p108 = scmp.ne.s32.totalorder %s96, %s97
    %p109 = scmp.eq.s32.totalorder %s19, 1
    %p110 = por %p108, %p109
    %p112 = scmp.ne.s32.totalorder %s97, %s111
    %p113 = scmp.eq.s32.totalorder %s19, 0
    %p114 = por %p112, %p113
    %s116 = sadd.s32 %s115, 1
    %p119 = scmp.eq.s32.totalorder %s13, 1
    %p120 = scmp.ne.s32.totalorder %s115, %s117
    %p121 = scmp.eq.s32.totalorder %s13, 0
    %p122 = por %p120, %p121
    %p123 = scmp.ne.s32.totalorder %s115, %s117
    %p124 = scmp.eq.s32.totalorder %s18, 1
    %p125 = por %p123, %p124
    %p126 = scmp.ne.s32.totalorder %s117, %s118
    %p127 = scmp.eq.s32.totalorder %s18, 0
    %p128 = por %p126, %p127
    %p129 = scmp.ne.s32.totalorder %s117, %s118
    %p130 = scmp.eq.s32.totalorder %s19, 1
    %p131 = por %p129, %p130
    %p133 = scmp.ne.s32.totalorder %s118, %s132
    %p134 = scmp.eq.s32.totalorder %s19, 0
    %p135 = por %p133, %p134
    %s137 = sadd.s32 %s136, 1
    %p140 = scmp.eq.s32.totalorder %s13, 1
    %p141 = scmp.ne.s32.totalorder %s136, %s138
    %p142 = scmp.eq.s32.totalorder %s13, 0
    %p143 = por %p141, %p142
    %p144 = scmp.ne.s32.totalorder %s136, %s138
    %p145 = scmp.eq.s32.totalorder %s18, 1
    %p146 = por %p144, %p145
    %p147 = scmp.ne.s32.totalorder %s138, %s139
    %p148 = scmp.eq.s32.totalorder %s18, 0
    %p149 = por %p147, %p148
    %p150 = scmp.ne.s32.totalorder %s138, %s139
    %p151 = scmp.eq.s32.totalorder %s19, 1
    %p152 = por %p150, %p151
    %p154 = scmp.ne.s32.totalorder %s139, %s153
    %p155 = scmp.eq.s32.totalorder %s19, 0
    %p156 = por %p154, %p155
    %s158 = sadd.s32 %s157, 1
    %p161 = scmp.eq.s32.totalorder %s13, 1
    %p162 = scmp.ne.s32.totalorder %s157, %s159
    %p163 = scmp.eq.s32.totalorder %s13, 0
    %p164 = por %p162, %p163
    %p165 = scmp.ne.s32.totalorder %s157, %s159
    %p166 = scmp.eq.s32.totalorder %s18, 1
    %p167 = por %p165, %p166
    %p168 = scmp.ne.s32.totalorder %s159, %s160
    %p169 = scmp.eq.s32.totalorder %s18, 0
    %p170 = por %p168, %p169
    %p171 = scmp.ne.s32.totalorder %s159, %s160
    %p172 = scmp.eq.s32.totalorder %s19, 1
    %p173 = por %p171, %p172
    %p175 = scmp.ne.s32.totalorder %s160, %s174
    %p176 = scmp.eq.s32.totalorder %s19, 0
    %p177 = por %p175, %p176
    %s178 = ssub.s32 %s13, %s20
    %p179 = scmp.eq.s32.totalorder %s178, 0
    %s181 = sadd.s32 %s180, 1
    %s182 = scalar_select %p179, %s180, %s181
    %p185 = pneg %p179
    %p186 = scmp.eq.s32.totalorder %s13, 1
    %p187 = por %p185, %p186
    %p188 = scmp.ne.s32.totalorder %s180, %s183
    %p189 = scmp.eq.s32.totalorder %s13, 0
    %p190 = por %p188, %p189
    %p191 = scmp.ne.s32.totalorder %s180, %s183
    %p192 = scmp.eq.s32.totalorder %s18, 1
    %p193 = por %p191, %p192
    %p194 = scmp.ne.s32.totalorder %s183, %s184
    %p195 = scmp.eq.s32.totalorder %s18, 0
    %p196 = por %p194, %p195
    %p197 = scmp.ne.s32.totalorder %s183, %s184
    %p198 = scmp.eq.s32.totalorder %s19, 1
    %p199 = por %p197, %p198
    %p201 = scmp.ne.s32.totalorder %s184, %s200
    %p202 = scmp.eq.s32.totalorder %s19, 0
    %p203 = por %p201, %p202
    %p204 = scmp.le.s32.totalorder 1, %s13
    %p205 = scmp.lt.s32.totalorder %s13, 3
    %p206 = pnand %p204, %p205
    %p207 = pneg %p206
    // Predicated region
    $region9: #{tpu_custom_call.1} parent=5 // pred_check
      _
    $region10: #{tpu_custom_call.1} parent=5 // pred_check_branch
      %209 = sbr.rel (%p206) target = $region12
    $region11: #{tpu_custom_call.1} parent=5 // pred_region
      %s210 = ssub.s32 %s13, 1
      // Predicated region
      $region13: #{tpu_custom_call.1} parent=11 // pred_check
        %p211 = pneg %p86
      $region14: #{tpu_custom_call.1} parent=11 // pred_check_branch
        %213 = sbr.rel (%p211) target = $region16
      $region15: #{tpu_custom_call.1} parent=11 // pred_region
        _
      $region16: #{tpu_custom_call.1} parent=11 // pred_fallthru
        _
      // Predicated region
      $region17: #{tpu_custom_call.1} parent=11 // pred_check
        %p214 = pneg %p107
      $region18: #{tpu_custom_call.1} parent=11 // pred_check_branch
        %216 = sbr.rel (%p214) target = $region20
      $region19: #{tpu_custom_call.1} parent=11 // pred_region
        _
      $region20: #{tpu_custom_call.1} parent=11 // pred_fallthru
        _
      // Predicated region
      $region21: #{tpu_custom_call.1} parent=11 // pred_check
        %p217 = pneg %p128
      $region22: #{tpu_custom_call.1} parent=11 // pred_check_branch
        %219 = sbr.rel (%p217) target = $region24
      $region23: #{tpu_custom_call.1} parent=11 // pred_region
        _
      $region24: #{tpu_custom_call.1} parent=11 // pred_fallthru
        _
      // Predicated region
      $region25: #{tpu_custom_call.1} parent=11 // pred_check
        %p220 = pneg %p149
      $region26: #{tpu_custom_call.1} parent=11 // pred_check_branch
        %222 = sbr.rel (%p220) target = $region28
      $region27: #{tpu_custom_call.1} parent=11 // pred_region
        _
      $region28: #{tpu_custom_call.1} parent=11 // pred_fallthru
        _
      // Predicated region
      $region29: #{tpu_custom_call.1} parent=11 // pred_check
        %p223 = pneg %p170
      $region30: #{tpu_custom_call.1} parent=11 // pred_check_branch
        %225 = sbr.rel (%p223) target = $region32
      $region31: #{tpu_custom_call.1} parent=11 // pred_region
        _
      $region32: #{tpu_custom_call.1} parent=11 // pred_fallthru
        _
    $region12: #{tpu_custom_call.1} parent=5 // pred_fallthru
      _
    %p226 = scmp.lt.s32.totalorder %s13, 2
    // Predicated region
    $region33: #{tpu_custom_call.1} parent=5 // pred_check
      %p227 = pneg %p226
    $region34: #{tpu_custom_call.1} parent=5 // pred_check_branch
      %229 = sbr.rel (%p227) target = $region36
    $region35: #{tpu_custom_call.1} parent=5 // pred_region
      // Predicated region
      $region37: #{tpu_custom_call.1} parent=35 // pred_check
        %p230 = pneg %p33
      $region38: #{tpu_custom_call.1} parent=35 // pred_check_branch
        %232 = sbr.rel (%p230) target = $region40
      $region39: #{tpu_custom_call.1} parent=35 // pred_region
        %p233 = scmp.lt.s32.totalorder %s13, 1
        %s234 = scalar_select %p233, %s13, 1
        %s235 = smul.addr %s234, 9
        %s236 = smul.addr %s235, 4
        %s237 = scalar_lea.vmem %s0, %s236
      $region40: #{tpu_custom_call.1} parent=35 // pred_fallthru
        _
      // Predicated region
      $region41: #{tpu_custom_call.1} parent=35 // pred_check
        %p238 = pneg %p59
      $region42: #{tpu_custom_call.1} parent=35 // pred_check_branch
        %240 = sbr.rel (%p238) target = $region44
      $region43: #{tpu_custom_call.1} parent=35 // pred_region
        %p241 = scmp.lt.s32.totalorder %s13, 1
        %s242 = scalar_select %p241, %s13, 1
        %s243 = smul.addr %s242, 36
        %s244 = smul.addr %s243, 4
        %s245 = scalar_lea.vmem %s1, %s244
      $region44: #{tpu_custom_call.1} parent=35 // pred_fallthru
        _
    $region36: #{tpu_custom_call.1} parent=5 // pred_fallthru
      _
    %p246 = scmp.le.s32.totalorder 1, %s13
    %p247 = scmp.lt.s32.totalorder %s13, 3
    %p248 = pnand %p246, %p247
    %p249 = pneg %p248
    // Predicated region
    $region45: #{tpu_custom_call.1} parent=5 // pred_check
      _
    $region46: #{tpu_custom_call.1} parent=5 // pred_check_branch
      %251 = sbr.rel (%p248) target = $region48
    $region47: #{tpu_custom_call.1} parent=5 // pred_region
      %s252 = ssub.s32 %s13, 1
      %p253 = scmp.lt.s32.totalorder %s18, 1
      %s254 = scalar_select %p253, %s18, 1
      %s255 = smul.addr %s254, 9
      %s256 = smul.addr %s255, 4
      %s257 = scalar_lea.vmem %s0, %s256
      %p258 = pneg %p39
      %p259 = pneg %p36
      %p260 = scmp.lt.s32.totalorder %s18, 1
      %s261 = scalar_select %p260, %s18, 1
      %s262 = smul.addr %s261, 36
      %s263 = smul.addr %s262, 4
      %s264 = scalar_lea.vmem %s1, %s263
      %p265 = pneg %p65
      %p266 = pneg %p62
      %p267 = pneg %p86
      %p268 = pneg %p83
      %p269 = pneg %p107
      %p270 = pneg %p104
      %p271 = pneg %p128
      %p272 = pneg %p125
      %p273 = pneg %p149
      %p274 = pneg %p146
      %p275 = pneg %p170
      %p276 = pneg %p167
      %p277 = pneg %p196
      %p278 = pneg %p193
      %p279 = scmp.lt.s32.totalorder %s18, 1
      %s280 = scalar_select %p279, %s18, 1
      %s281 = smul.addr %s280, 9
      %s282 = smul.addr %s281, 8
      %s283 = scalar_lea.vmem %s7, %s282
      %p284 = scmp.lt.s32.totalorder %s18, 1
      %s285 = scalar_select %p284, %s18, 1
      %s286 = smul.addr %s285, 9
      %s287 = smul.addr %s286, 4
      %s288 = scalar_lea.vmem %s0, %s287
      %p289 = scmp.lt.s32.totalorder %s18, 1
      %s290 = scalar_select %p289, %s18, 1
      %s291 = smul.addr %s290, 36
      %s292 = smul.addr %s291, 4
      %s293 = scalar_lea.vmem %s1, %s292
      %p294 = scmp.lt.s32.totalorder %s18, 1
      %s295 = scalar_select %p294, %s18, 1
      %s296 = smul.addr %s295, 9
      %s297 = smul.addr %s296, 8
      %s298 = scalar_lea.vmem %s7, %s297
      %v300 = vld [vmem:[%s288] sm:$0xf]
      %v301 = vld [vmem:[%s288 + $0x4] sm:$0xf]
      %v302 = vld [vmem:[%s288 + $0x8] sm:$0xf]
      %v303 = vld [vmem:[%s288 + $0xc] sm:$0xf]
      %v304 = vld [vmem:[%s288 + $0x10] sm:$0xf]
      %v305 = vld [vmem:[%s288 + $0x14] sm:$0xf]
      %v306 = vld [vmem:[%s288 + $0x18] sm:$0xf]
      %v307 = vld [vmem:[%s288 + $0x1c] sm:$0xf]
      %v308 = vld [vmem:[%s288 + $0x20] sm:$0x1]
      %v309 = vld [vmem:[%s2] sm:$0xf]
      %v310 = vld [vmem:[%s2 + $0x4] sm:$0xf]
      %v311 = vld [vmem:[%s2 + $0x8] sm:$0xf]
      %v312 = vld [vmem:[%s2 + $0xc] sm:$0xf]
      %v313 = vld [vmem:[%s2 + $0x10] sm:$0xf]
      %v314 = vld [vmem:[%s2 + $0x14] sm:$0xf]
      %v315 = vld [vmem:[%s2 + $0x18] sm:$0xf]
      %v316 = vld [vmem:[%s2 + $0x1c] sm:$0xf]
      %v317 = vld [vmem:[%s2 + $0x20] sm:$0xf]
      %v318 = vld [vmem:[%s2 + $0x24] sm:$0xf]
      %v319 = vld [vmem:[%s2 + $0x28] sm:$0xf]
      %v320 = vld [vmem:[%s2 + $0x2c] sm:$0xf]
      %v321 = vld [vmem:[%s2 + $0x30] sm:$0xf]
      %v322 = vld [vmem:[%s2 + $0x34] sm:$0xf]
      %v323 = vld [vmem:[%s2 + $0x38] sm:$0xf]
      %v324 = vld [vmem:[%s2 + $0x3c] sm:$0xf]
      %v334 = vunpack.c.l.b16 %v300
      %v335 = vunpack.c.l.b16 %v301
      %v336 = vunpack.c.l.b16 %v302
      %v337 = vunpack.c.l.b16 %v303
      %v338 = vunpack.c.l.b16 %v304
      %v339 = vunpack.c.l.b16 %v305
      %v340 = vunpack.c.l.b16 %v306
      %v341 = vunpack.c.l.b16 %v307
      %v342 = vunpack.c.l.b16 %v308
      %v343 = vpack.c.b16 %v335, %v334
      %v344 = vpack.c.b16 %v337, %v336
      %v345 = vpack.c.b16 %v339, %v338
      %v346 = vpack.c.b16 %v341, %v340
      %v347 = vpack.c.b16 %v342, %v342
      %v369 = vunpack.c.l.b16 %v309
      %v370 = vunpack.c.l.b16 %v310
      %v371 = vunpack.c.l.b16 %v311
      %v372 = vunpack.c.l.b16 %v312
      %v373 = vunpack.c.l.b16 %v313
      %v374 = vunpack.c.l.b16 %v314
      %v375 = vunpack.c.l.b16 %v315
      %v376 = vunpack.c.l.b16 %v316
      %v377 = vunpack.c.l.b16 %v317
      %v378 = vunpack.c.l.b16 %v318
      %v379 = vunpack.c.l.b16 %v319
      %v380 = vunpack.c.l.b16 %v320
      %v381 = vunpack.c.l.b16 %v321
      %v382 = vunpack.c.l.b16 %v322
      %v383 = vunpack.c.l.b16 %v323
      %v384 = vunpack.c.l.b16 %v324
      %v385 = vpack.c.b16 %v370, %v369
      %v386 = vpack.c.b16 %v372, %v371
      %v387 = vpack.c.b16 %v374, %v373
      %v388 = vpack.c.b16 %v376, %v375
      %v389 = vpack.c.b16 %v378, %v377
      %v390 = vpack.c.b16 %v380, %v379
      %v391 = vpack.c.b16 %v382, %v381
      %v392 = vpack.c.b16 %v384, %v383
      %401 = vmatprep.subr.bf16.mxu0 0
      %402 = vmatpush1.bf16.msra.mxu0 %v385
      %403 = vmatprep.subr.bf16.mxu0 0
      %404 = vmatpush1.bf16.msra.mxu0 %v386
      %405 = vmatprep.subr.bf16.mxu0 0
      %406 = vmatpush1.bf16.msra.mxu0 %v387
      %407 = vmatprep.subr.bf16.mxu0 0
      %408 = vmatpush1.bf16.msra.mxu0 %v388
      %409 = vmatprep.subr.bf16.mxu0 0
      %410 = vmatpush1.bf16.msra.mxu0 %v389
      %411 = vmatprep.subr.bf16.mxu0 0
      %412 = vmatpush1.bf16.msra.mxu0 %v390
      %413 = vmatprep.subr.bf16.mxu0 0
      %414 = vmatpush1.bf16.msra.mxu0 %v391
      %415 = vmatprep.subr.bf16.mxu0 0
      %416 = vmatpush1.bf16.msra.mxu0 %v392
      %417 = vmatprep.subr.bf16.mxu0 0
      %418 = vmatpush1.bf16.msra.mxu0 0
      %419 = vmatprep.subr.bf16.mxu0 0
      %420 = vmatpush1.bf16.msra.mxu0 0
      %421 = vmatprep.subr.bf16.mxu0 0
      %422 = vmatpush1.bf16.msra.mxu0 0
      %423 = vmatprep.subr.bf16.mxu0 0
      %424 = vmatpush1.bf16.msra.mxu0 0
      %425 = vmatprep.subr.bf16.mxu0 0
      %426 = vmatpush1.bf16.msra.mxu0 0
      %427 = vmatprep.subr.bf16.mxu0 0
      %428 = vmatpush1.bf16.msra.mxu0 0
      %429 = vmatprep.subr.bf16.mxu0 0
      %430 = vmatpush1.bf16.msra.mxu0 0
      %431 = vmatprep.subr.bf16.mxu0 0
      %432 = vmatpush1.bf16.msra.mxu0 0
      %433 = vmatprep.mubr.bf16.mxu0 0
      %434 = vmatmul.mubr.bf16.gmra.mrb[0].mxu0 %v343
      %v435 = vpop.f32.mrb[0].mxu0
      %v436 = vadd.f32 0.0, %v435
      %v437 = vpop.f32.mrb[0].mxu0
      %v438 = vpop.f32.mrb[0].mxu0
      %v439 = vadd.f32 0.0, %v438
      %v440 = vpop.f32.mrb[0].mxu0
      %441 = vmatprep.mubr.bf16.mxu0 0
      %442 = vmatmul.mubr.bf16.gmra.mrb[0].mxu0 %v344
      %v443 = vpop.f32.mrb[0].mxu0
      %v444 = vadd.f32 0.0, %v443
      %v445 = vpop.f32.mrb[0].mxu0
      %v446 = vpop.f32.mrb[0].mxu0
      %v447 = vadd.f32 0.0, %v446
      %v448 = vpop.f32.mrb[0].mxu0
      %449 = vmatprep.mubr.bf16.mxu0 0
      %450 = vmatmul.mubr.bf16.gmra.mrb[0].mxu0 %v345
      %v451 = vpop.f32.mrb[0].mxu0
      %v452 = vadd.f32 0.0, %v451
      %v453 = vpop.f32.mrb[0].mxu0
      %v454 = vpop.f32.mrb[0].mxu0
      %v455 = vadd.f32 0.0, %v454
      %v456 = vpop.f32.mrb[0].mxu0
      %457 = vmatprep.mubr.bf16.mxu0 0
      %458 = vmatmul.mubr.bf16.gmra.mrb[0].mxu0 %v346
      %v459 = vpop.f32.mrb[0].mxu0
      %v460 = vadd.f32 0.0, %v459
      %v461 = vpop.f32.mrb[0].mxu0
      %v462 = vpop.f32.mrb[0].mxu0
      %v463 = vadd.f32 0.0, %v462
      %v464 = vpop.f32.mrb[0].mxu0
      %465 = vmatprep.mubr.bf16.mxu0 0
      %466 = vmatmul.mubr.bf16.gmra.mrb[0].mxu0 %v347
      %v467 = vpop.f32.mrb[0].mxu0
      %v468 = vadd.f32 0.0, %v467
      %v469 = vpop.f32.mrb[0].mxu0
      %v470 = vpop.f32.mrb[0].mxu0
      %v471 = vpop.f32.mrb[0].mxu0
      %472 = vdwg.mxu0
      %v473 = vld [vmem:[%s3] sm:$0xff]
      %v474 = vld [vmem:[%s3 + $0x8] sm:$0xff]
      %v475 = vld [vmem:[%s3 + $0x10] sm:$0xff]
      %v476 = vld [vmem:[%s3 + $0x18] sm:$0xff]
      %v477 = vld [vmem:[%s3 + $0x20] sm:$0xff]
      %v478 = vld [vmem:[%s3 + $0x28] sm:$0xff]
      %v479 = vld [vmem:[%s3 + $0x30] sm:$0xff]
      %v480 = vld [vmem:[%s3 + $0x38] sm:$0xff]
      %v481 = vld [vmem:[%s3 + $0x40] sm:$0xff]
      %v482 = vld [vmem:[%s3 + $0x48] sm:$0xff]
      %v483 = vld [vmem:[%s3 + $0x50] sm:$0xff]
      %v484 = vld [vmem:[%s3 + $0x58] sm:$0xff]
      %v485 = vld [vmem:[%s3 + $0x60] sm:$0xff]
      %v486 = vld [vmem:[%s3 + $0x68] sm:$0xff]
      %v487 = vld [vmem:[%s3 + $0x70] sm:$0xff]
      %v488 = vld [vmem:[%s3 + $0x78] sm:$0xff]
      %489 = vmatprep.subr.mxu0 0.0
      %490 = vmatpush1.msra.mxu0 %v473
      %491 = vmatprep.subr.mxu0 0.0
      %492 = vmatpush1.msra.mxu0 %v474
      %493 = vmatprep.subr.mxu0 0.0
      %494 = vmatpush1.msra.mxu0 %v475
      %495 = vmatprep.subr.mxu0 0.0
      %496 = vmatpush1.msra.mxu0 %v476
      %497 = vmatprep.subr.mxu0 0.0
      %498 = vmatpush1.msra.mxu0 %v477
      %499 = vmatprep.subr.mxu0 0.0
      %500 = vmatpush1.msra.mxu0 %v478
      %501 = vmatprep.subr.mxu0 0.0
      %502 = vmatpush1.msra.mxu0 %v479
      %503 = vmatprep.subr.mxu0 0.0
      %504 = vmatpush1.msra.mxu0 %v480
      %505 = vmatprep.subr.mxu0 0.0
      %506 = vmatpush1.msra.mxu0 %v481
      %507 = vmatprep.subr.mxu0 0.0
      %508 = vmatpush1.msra.mxu0 %v482
      %509 = vmatprep.subr.mxu0 0.0
      %510 = vmatpush1.msra.mxu0 %v483
      %511 = vmatprep.subr.mxu0 0.0
      %512 = vmatpush1.msra.mxu0 %v484
      %513 = vmatprep.subr.mxu0 0.0
      %514 = vmatpush1.msra.mxu0 %v485
      %515 = vmatprep.subr.mxu0 0.0
      %516 = vmatpush1.msra.mxu0 %v486
      %517 = vmatprep.subr.mxu0 0.0
      %518 = vmatpush1.msra.mxu0 %v487
      %519 = vmatprep.subr.mxu0 0.0
      %520 = vmatpush1.msra.mxu0 %v488
      %521 = vmatprep.subr.mxu0 0.0
      %522 = vmatpush1.msra.mxu0 0.0
      %523 = vmatprep.subr.mxu0 0.0
      %524 = vmatpush1.msra.mxu0 0.0
      %525 = vmatprep.subr.mxu0 0.0
      %526 = vmatpush1.msra.mxu0 0.0
      %527 = vmatprep.subr.mxu0 0.0
      %528 = vmatpush1.msra.mxu0 0.0
      %529 = vmatprep.subr.mxu0 0.0
      %530 = vmatpush1.msra.mxu0 0.0
      %531 = vmatprep.subr.mxu0 0.0
      %532 = vmatpush1.msra.mxu0 0.0
      %533 = vmatprep.subr.mxu0 0.0
      %534 = vmatpush1.msra.mxu0 0.0
      %535 = vmatprep.subr.mxu0 0.0
      %536 = vmatpush1.msra.mxu0 0.0
      %537 = vmatprep.subr.mxu0 0.0
      %538 = vmatpush1.msra.mxu0 0.0
      %539 = vmatprep.subr.mxu0 0.0
      %540 = vmatpush1.msra.mxu0 0.0
      %541 = vmatprep.subr.mxu0 0.0
      %542 = vmatpush1.msra.mxu0 0.0
      %543 = vmatprep.subr.mxu0 0.0
      %544 = vmatpush1.msra.mxu0 0.0
      %545 = vmatprep.subr.mxu0 0.0
      %546 = vmatpush1.msra.mxu0 0.0
      %547 = vmatprep.subr.mxu0 0.0
      %548 = vmatpush1.msra.mxu0 0.0
      %549 = vmatprep.subr.mxu0 0.0
      %550 = vmatpush1.msra.mxu0 0.0
      %551 = vmatprep.subr.mxu0 0.0
      %552 = vmatpush1.msra.mxu0 0.0
      %553 = vmatprep.mubr.f32.mxu0 0.0
      %554 = vmatmul.mubr.f32.gmra.mrb[0].mxu0 %v436
      %v555 = vpop.f32.mrb[0].mxu0
      %v556 = vadd.f32 0.0, %v555
      %v557 = vpop.f32.mrb[0].mxu0
      %558 = vmatprep.mubr.f32.mxu0 0.0
      %559 = vmatmul.mubr.f32.gmra.mrb[0].mxu0 %v439
      %v560 = vpop.f32.mrb[0].mxu0
      %v561 = vadd.f32 0.0, %v560
      %v562 = vpop.f32.mrb[0].mxu0
      %563 = vmatprep.mubr.f32.mxu0 0.0
      %564 = vmatmul.mubr.f32.gmra.mrb[0].mxu0 %v444
      %v565 = vpop.f32.mrb[0].mxu0
      %v566 = vadd.f32 0.0, %v565
      %v567 = vpop.f32.mrb[0].mxu0
      %568 = vmatprep.mubr.f32.mxu0 0.0
      %569 = vmatmul.mubr.f32.gmra.mrb[0].mxu0 %v447
      %v570 = vpop.f32.mrb[0].mxu0
      %v571 = vadd.f32 0.0, %v570
      %v572 = vpop.f32.mrb[0].mxu0
      %573 = vmatprep.mubr.f32.mxu0 0.0
      %574 = vmatmul.mubr.f32.gmra.mrb[0].mxu0 %v452
      %v575 = vpop.f32.mrb[0].mxu0
      %v576 = vadd.f32 0.0, %v575
      %v577 = vpop.f32.mrb[0].mxu0
      %578 = vmatprep.mubr.f32.mxu0 0.0
      %579 = vmatmul.mubr.f32.gmra.mrb[0].mxu0 %v455
      %v580 = vpop.f32.mrb[0].mxu0
      %v581 = vadd.f32 0.0, %v580
      %v582 = vpop.f32.mrb[0].mxu0
      %583 = vmatprep.mubr.f32.mxu0 0.0
      %584 = vmatmul.mubr.f32.gmra.mrb[0].mxu0 %v460
      %v585 = vpop.f32.mrb[0].mxu0
      %v586 = vadd.f32 0.0, %v585
      %v587 = vpop.f32.mrb[0].mxu0
      %588 = vmatprep.mubr.f32.mxu0 0.0
      %589 = vmatmul.mubr.f32.gmra.mrb[0].mxu0 %v463
      %v590 = vpop.f32.mrb[0].mxu0
      %v591 = vadd.f32 0.0, %v590
      %v592 = vpop.f32.mrb[0].mxu0
      %593 = vmatprep.mubr.f32.mxu0 0.0
      %594 = vmatmul.mubr.f32.gmra.mrb[0].mxu0 %v468
      %v595 = vpop.f32.mrb[0].mxu0
      %v596 = vadd.f32 0.0, %v595
      %v597 = vpop.f32.mrb[0].mxu0
      %598 = vdwg.mxu0
      %v599 = vsub.f32 %v436, %v556
      %v600 = vsub.f32 %v439, %v561
      %v601 = vsub.f32 %v444, %v566
      %v602 = vsub.f32 %v447, %v571
      %v603 = vsub.f32 %v452, %v576
      %v604 = vsub.f32 %v455, %v581
      %v605 = vsub.f32 %v460, %v586
      %v606 = vsub.f32 %v463, %v591
      %v607 = vsub.f32 %v468, %v596
      %v608 = vmul.f32 %v599, %v599
      %v609 = vmul.f32 %v600, %v600
      %v610 = vmul.f32 %v601, %v601
      %v611 = vmul.f32 %v602, %v602
      %v612 = vmul.f32 %v603, %v603
      %v613 = vmul.f32 %v604, %v604
      %v614 = vmul.f32 %v605, %v605
      %v615 = vmul.f32 %v606, %v606
      %v616 = vmul.f32 %v607, %v607
      %617 = vmatprep.subr.mxu0 0.0
      %618 = vmatpush1.msra.mxu0 %v473
      %619 = vmatprep.subr.mxu0 0.0
      %620 = vmatpush1.msra.mxu0 %v474
      %621 = vmatprep.subr.mxu0 0.0
      %622 = vmatpush1.msra.mxu0 %v475
      %623 = vmatprep.subr.mxu0 0.0
      %624 = vmatpush1.msra.mxu0 %v476
      %625 = vmatprep.subr.mxu0 0.0
      %626 = vmatpush1.msra.mxu0 %v477
      %627 = vmatprep.subr.mxu0 0.0
      %628 = vmatpush1.msra.mxu0 %v478
      %629 = vmatprep.subr.mxu0 0.0
      %630 = vmatpush1.msra.mxu0 %v479
      %631 = vmatprep.subr.mxu0 0.0
      %632 = vmatpush1.msra.mxu0 %v480
      %633 = vmatprep.subr.mxu0 0.0
      %634 = vmatpush1.msra.mxu0 %v481
      %635 = vmatprep.subr.mxu0 0.0
      %636 = vmatpush1.msra.mxu0 %v482
      %637 = vmatprep.subr.mxu0 0.0
      %638 = vmatpush1.msra.mxu0 %v483
      %639 = vmatprep.subr.mxu0 0.0
      %640 = vmatpush1.msra.mxu0 %v484
      %641 = vmatprep.subr.mxu0 0.0
      %642 = vmatpush1.msra.mxu0 %v485
      %643 = vmatprep.subr.mxu0 0.0
      %644 = vmatpush1.msra.mxu0 %v486
      %645 = vmatprep.subr.mxu0 0.0
      %646 = vmatpush1.msra.mxu0 %v487
      %647 = vmatprep.subr.mxu0 0.0
      %648 = vmatpush1.msra.mxu0 %v488
      %649 = vmatprep.subr.mxu0 0.0
      %650 = vmatpush1.msra.mxu0 0.0
      %651 = vmatprep.subr.mxu0 0.0
      %652 = vmatpush1.msra.mxu0 0.0
      %653 = vmatprep.subr.mxu0 0.0
      %654 = vmatpush1.msra.mxu0 0.0
      %655 = vmatprep.subr.mxu0 0.0
      %656 = vmatpush1.msra.mxu0 0.0
      %657 = vmatprep.subr.mxu0 0.0
      %658 = vmatpush1.msra.mxu0 0.0
      %659 = vmatprep.subr.mxu0 0.0
      %660 = vmatpush1.msra.mxu0 0.0
      %661 = vmatprep.subr.mxu0 0.0
      %662 = vmatpush1.msra.mxu0 0.0
      %663 = vmatprep.subr.mxu0 0.0
      %664 = vmatpush1.msra.mxu0 0.0
      %665 = vmatprep.subr.mxu0 0.0
      %666 = vmatpush1.msra.mxu0 0.0
      %667 = vmatprep.subr.mxu0 0.0
      %668 = vmatpush1.msra.mxu0 0.0
      %669 = vmatprep.subr.mxu0 0.0
      %670 = vmatpush1.msra.mxu0 0.0
      %671 = vmatprep.subr.mxu0 0.0
      %672 = vmatpush1.msra.mxu0 0.0
      %673 = vmatprep.subr.mxu0 0.0
      %674 = vmatpush1.msra.mxu0 0.0
      %675 = vmatprep.subr.mxu0 0.0
      %676 = vmatpush1.msra.mxu0 0.0
      %677 = vmatprep.subr.mxu0 0.0
      %678 = vmatpush1.msra.mxu0 0.0
      %679 = vmatprep.subr.mxu0 0.0
      %680 = vmatpush1.msra.mxu0 0.0
      %681 = vmatprep.mubr.f32.mxu0 0.0
      %682 = vmatmul.mubr.f32.gmra.mrb[0].mxu0 %v608
      %v683 = vpop.f32.mrb[0].mxu0
      %v684 = vadd.f32 1e-05, %v683
      %v685 = vpop.f32.mrb[0].mxu0
      %686 = vmatprep.mubr.f32.mxu0 0.0
      %687 = vmatmul.mubr.f32.gmra.mrb[0].mxu0 %v609
      %v688 = vpop.f32.mrb[0].mxu0
      %v689 = vadd.f32 1e-05, %v688
      %v690 = vpop.f32.mrb[0].mxu0
      %691 = vmatprep.mubr.f32.mxu0 0.0
      %692 = vmatmul.mubr.f32.gmra.mrb[0].mxu0 %v610
      %v693 = vpop.f32.mrb[0].mxu0
      %v694 = vadd.f32 1e-05, %v693
      %v695 = vpop.f32.mrb[0].mxu0
      %696 = vmatprep.mubr.f32.mxu0 0.0
      %697 = vmatmul.mubr.f32.gmra.mrb[0].mxu0 %v611
      %v698 = vpop.f32.mrb[0].mxu0
      %v699 = vadd.f32 1e-05, %v698
      %v700 = vpop.f32.mrb[0].mxu0
      %701 = vmatprep.mubr.f32.mxu0 0.0
      %702 = vmatmul.mubr.f32.gmra.mrb[0].mxu0 %v612
      %v703 = vpop.f32.mrb[0].mxu0
      %v704 = vadd.f32 1e-05, %v703
      %v705 = vpop.f32.mrb[0].mxu0
      %706 = vmatprep.mubr.f32.mxu0 0.0
      %707 = vmatmul.mubr.f32.gmra.mrb[0].mxu0 %v613
      %v708 = vpop.f32.mrb[0].mxu0
      %v709 = vadd.f32 1e-05, %v708
      %v710 = vpop.f32.mrb[0].mxu0
      %711 = vmatprep.mubr.f32.mxu0 0.0
      %712 = vmatmul.mubr.f32.gmra.mrb[0].mxu0 %v614
      %v713 = vpop.f32.mrb[0].mxu0
      %v714 = vadd.f32 1e-05, %v713
      %v715 = vpop.f32.mrb[0].mxu0
      %716 = vmatprep.mubr.f32.mxu0 0.0
      %717 = vmatmul.mubr.f32.gmra.mrb[0].mxu0 %v615
      %v718 = vpop.f32.mrb[0].mxu0
      %v719 = vadd.f32 1e-05, %v718
      %v720 = vpop.f32.mrb[0].mxu0
      %721 = vmatprep.mubr.f32.mxu0 0.0
      %722 = vmatmul.mubr.f32.gmra.mrb[0].mxu0 %v616
      %v723 = vpop.f32.mrb[0].mxu0
      %v724 = vadd.f32 1e-05, %v723
      %v725 = vpop.f32.mrb[0].mxu0
      %726 = vdwg.mxu0
      %v727 = vrsqrt.pop %v684
      %v728 = vrsqrt.pop %v689
      %v729 = vrsqrt.pop %v694
      %v730 = vrsqrt.pop %v699
      %v731 = vrsqrt.pop %v704
      %v732 = vrsqrt.pop %v709
      %v733 = vrsqrt.pop %v714
      %v734 = vrsqrt.pop %v719
      %v735 = vrsqrt.pop %v724
      %v736 = vmul.f32 %v599, %v727
      %v737 = vmul.f32 %v600, %v728
      %v738 = vmul.f32 %v601, %v729
      %v739 = vmul.f32 %v602, %v730
      %v740 = vmul.f32 %v603, %v731
      %v741 = vmul.f32 %v604, %v732
      %v742 = vmul.f32 %v605, %v733
      %v743 = vmul.f32 %v606, %v734
      %v744 = vmul.f32 %v607, %v735
      %v745 = vld [vmem:[%s4] sm:$0x1]
      %v747 = vlaneseq
      %v748 = vshrl.u32 %v747, 7
      %v749 = vsub.s32 0, %v748
      %v750 = vrot.slane %v745, %v749
      %v752 = vmul.f32 %v736, %v750
      %v753 = vmul.f32 %v737, %v750
      %v754 = vmul.f32 %v738, %v750
      %v755 = vmul.f32 %v739, %v750
      %v756 = vmul.f32 %v740, %v750
      %v757 = vmul.f32 %v741, %v750
      %v758 = vmul.f32 %v742, %v750
      %v759 = vmul.f32 %v743, %v750
      %v760 = vmul.f32 %v744, %v750
      %v761 = vld [vmem:[%s5] sm:$0x1]
      %v763 = vlaneseq
      %v764 = vshrl.u32 %v763, 7
      %v765 = vsub.s32 0, %v764
      %v766 = vrot.slane %v761, %v765
      %v768 = vadd.f32 %v752, %v766
      %v769 = vadd.f32 %v753, %v766
      %v770 = vadd.f32 %v754, %v766
      %v771 = vadd.f32 %v755, %v766
      %v772 = vadd.f32 %v756, %v766
      %v773 = vadd.f32 %v757, %v766
      %v774 = vadd.f32 %v758, %v766
      %v775 = vadd.f32 %v759, %v766
      %v776 = vadd.f32 %v760, %v766
      %v777 = vmul.f32 %v768, 0.5
      %v778 = vmul.f32 %v769, 0.5
      %v779 = vmul.f32 %v770, 0.5
      %v780 = vmul.f32 %v771, 0.5
      %v781 = vmul.f32 %v772, 0.5
      %v782 = vmul.f32 %v773, 0.5
      %v783 = vmul.f32 %v774, 0.5
      %v784 = vmul.f32 %v775, 0.5
      %v785 = vmul.f32 %v776, 0.5
      %v786 = vmul.f32 %v768, 0.044715
      %v787 = vmul.f32 %v769, 0.044715
      %v788 = vmul.f32 %v770, 0.044715
      %v789 = vmul.f32 %v771, 0.044715
      %v790 = vmul.f32 %v772, 0.044715
      %v791 = vmul.f32 %v773, 0.044715
      %v792 = vmul.f32 %v774, 0.044715
      %v793 = vmul.f32 %v775, 0.044715
      %v794 = vmul.f32 %v776, 0.044715
      %v795 = vmul.f32 %v786, %v768
      %v796 = vmul.f32 %v787, %v769
      %v797 = vmul.f32 %v788, %v770
      %v798 = vmul.f32 %v789, %v771
      %v799 = vmul.f32 %v790, %v772
      %v800 = vmul.f32 %v791, %v773
      %v801 = vmul.f32 %v792, %v774
      %v802 = vmul.f32 %v793, %v775
      %v803 = vmul.f32 %v794, %v776
      %v804 = vmul.f32 %v795, %v768
      %v805 = vmul.f32 %v796, %v769
      %v806 = vmul.f32 %v797, %v770
      %v807 = vmul.f32 %v798, %v771
      %v808 = vmul.f32 %v799, %v772
      %v809 = vmul.f32 %v800, %v773
      %v810 = vmul.f32 %v801, %v774
      %v811 = vmul.f32 %v802, %v775
      %v812 = vmul.f32 %v803, %v776
      %v813 = vadd.f32 %v768, %v804
      %v814 = vadd.f32 %v769, %v805
      %v815 = vadd.f32 %v770, %v806
      %v816 = vadd.f32 %v771, %v807
      %v817 = vadd.f32 %v772, %v808
      %v818 = vadd.f32 %v773, %v809
      %v819 = vadd.f32 %v774, %v810
      %v820 = vadd.f32 %v775, %v811
      %v821 = vadd.f32 %v776, %v812
      %v822 = vmul.f32 %v813, 0.7978846
      %v823 = vmul.f32 %v814, 0.7978846
      %v824 = vmul.f32 %v815, 0.7978846
      %v825 = vmul.f32 %v816, 0.7978846
      %v826 = vmul.f32 %v817, 0.7978846
      %v827 = vmul.f32 %v818, 0.7978846
      %v828 = vmul.f32 %v819, 0.7978846
      %v829 = vmul.f32 %v820, 0.7978846
      %v830 = vmul.f32 %v821, 0.7978846
      %v831 = vtanh.pop %v822
      %v832 = vtanh.pop %v823
      %v833 = vtanh.pop %v824
      %v834 = vtanh.pop %v825
      %v835 = vtanh.pop %v826
      %v836 = vtanh.pop %v827
      %v837 = vtanh.pop %v828
      %v838 = vtanh.pop %v829
      %v839 = vtanh.pop %v830
      %v840 = vadd.f32 %v831, 1.0
      %v841 = vadd.f32 %v832, 1.0
      %v842 = vadd.f32 %v833, 1.0
      %v843 = vadd.f32 %v834, 1.0
      %v844 = vadd.f32 %v835, 1.0
      %v845 = vadd.f32 %v836, 1.0
      %v846 = vadd.f32 %v837, 1.0
      %v847 = vadd.f32 %v838, 1.0
      %v848 = vadd.f32 %v839, 1.0
      %v849 = vmul.f32 %v777, %v840
      %v850 = vmul.f32 %v778, %v841
      %v851 = vmul.f32 %v779, %v842
      %v852 = vmul.f32 %v780, %v843
      %v853 = vmul.f32 %v781, %v844
      %v854 = vmul.f32 %v782, %v845
      %v855 = vmul.f32 %v783, %v846
      %v856 = vmul.f32 %v784, %v847
      %v857 = vmul.f32 %v785, %v848
      %v858 = vpack.c.bf16 %v850, %v849
      %v859 = vpack.c.bf16 %v852, %v851
      %v860 = vpack.c.bf16 %v854, %v853
      %v861 = vpack.c.bf16 %v856, %v855
      %v862 = vpack.c.bf16 %v857, %v857
      %v863 = vunpack.c.l.bf16 %v858
      %v864 = vunpack.c.h.bf16 %v858
      %v865 = vunpack.c.l.bf16 %v859
      %v866 = vunpack.c.h.bf16 %v859
      %v867 = vunpack.c.l.bf16 %v860
      %v868 = vunpack.c.h.bf16 %v860
      %v869 = vunpack.c.l.bf16 %v861
      %v870 = vunpack.c.h.bf16 %v861
      %v871 = vunpack.c.l.bf16 %v862
      %v872 = vmul.f32 %v863, %v863
      %v873 = vmul.f32 %v864, %v864
      %v874 = vmul.f32 %v865, %v865
      %v875 = vmul.f32 %v866, %v866
      %v876 = vmul.f32 %v867, %v867
      %v877 = vmul.f32 %v868, %v868
      %v878 = vmul.f32 %v869, %v869
      %v879 = vmul.f32 %v870, %v870
      %v880 = vmul.f32 %v871, %v871
      %vm881 = vcmask 261120
      %v882 = vsel %vm881, %v872, 0.0
      %883 = vadd.xlane.f32.xlu0 %v882
      %v884 = vpop.xlane.xlu0 %883
      %v885 = vsel %vm881, %v873, 0.0
      %886 = vadd.xlane.f32.xlu0 %v885
      %v887 = vpop.xlane.xlu0 %886
      %v888 = vsel %vm881, %v874, 0.0
      %889 = vadd.xlane.f32.xlu0 %v888
      %v890 = vpop.xlane.xlu0 %889
      %v891 = vsel %vm881, %v875, 0.0
      %892 = vadd.xlane.f32.xlu0 %v891
      %v893 = vpop.xlane.xlu0 %892
      %v894 = vsel %vm881, %v876, 0.0
      %895 = vadd.xlane.f32.xlu0 %v894
      %v896 = vpop.xlane.xlu0 %895
      %v897 = vsel %vm881, %v877, 0.0
      %898 = vadd.xlane.f32.xlu0 %v897
      %v899 = vpop.xlane.xlu0 %898
      %v900 = vsel %vm881, %v878, 0.0
      %901 = vadd.xlane.f32.xlu0 %v900
      %v902 = vpop.xlane.xlu0 %901
      %v903 = vsel %vm881, %v879, 0.0
      %904 = vadd.xlane.f32.xlu0 %v903
      %v905 = vpop.xlane.xlu0 %904
      %vm906 = vcmask 253952
      %v907 = vsel %vm906, %v880, 0.0
      %908 = vadd.xlane.f32.xlu0 %v907
      %v909 = vpop.xlane.xlu0 %908
      %v911 = vsel %vm881, 1.0, 0
      %v914 = vsel %vm881, %v872, 0
      %v917 = vsel %vm881, %v873, 0
      %v920 = vsel %vm881, %v874, 0
      %v923 = vsel %vm881, %v875, 0
      %v926 = vsel %vm881, %v876, 0
      %v929 = vsel %vm881, %v877, 0
      %v932 = vsel %vm881, %v878, 0
      %v935 = vsel %vm881, %v879, 0
      %v938 = vsel %vm881, %v880, 0
      %940 = vmatprep.subr.mxu0 0.0
      %941 = vmatpush1.xpose.msra.mxu0 %v914
      %942 = vmatprep.subr.mxu0 0.0
      %943 = vmatpush1.xpose.msra.mxu0 %v917
      %944 = vmatprep.subr.mxu0 0.0
      %945 = vmatpush1.xpose.msra.mxu0 %v920
      %946 = vmatprep.subr.mxu0 0.0
      %947 = vmatpush1.xpose.msra.mxu0 %v923
      %948 = vmatprep.subr.mxu0 0.0
      %949 = vmatpush1.xpose.msra.mxu0 %v926
      %950 = vmatprep.subr.mxu0 0.0
      %951 = vmatpush1.xpose.msra.mxu0 %v929
      %952 = vmatprep.subr.mxu0 0.0
      %953 = vmatpush1.xpose.msra.mxu0 %v932
      %954 = vmatprep.subr.mxu0 0.0
      %955 = vmatpush1.xpose.msra.mxu0 %v935
      %956 = vmatprep.subr.mxu0 0.0
      %957 = vmatpush1.xpose.msra.mxu0 %v938
      %958 = vmatprep.subr.mxu0 0.0
      %959 = vmatpush1.xpose.msra.mxu0 0.0
      %960 = vmatprep.subr.mxu0 0.0
      %961 = vmatpush1.xpose.msra.mxu0 0.0
      %962 = vmatprep.subr.mxu0 0.0
      %963 = vmatpush1.xpose.msra.mxu0 0.0
      %964 = vmatprep.subr.mxu0 0.0
      %965 = vmatpush1.xpose.msra.mxu0 0.0
      %966 = vmatprep.subr.mxu0 0.0
      %967 = vmatpush1.xpose.msra.mxu0 0.0
      %968 = vmatprep.subr.mxu0 0.0
      %969 = vmatpush1.xpose.msra.mxu0 0.0
      %970 = vmatprep.subr.mxu0 0.0
      %971 = vmatpush1.xpose.msra.mxu0 0.0
      %972 = vmatprep.subr.mxu0 0.0
      %973 = vmatpush1.xpose.msra.mxu0 0.0
      %974 = vmatprep.subr.mxu0 0.0
      %975 = vmatpush1.xpose.msra.mxu0 0.0
      %976 = vmatprep.subr.mxu0 0.0
      %977 = vmatpush1.xpose.msra.mxu0 0.0
      %978 = vmatprep.subr.mxu0 0.0
      %979 = vmatpush1.xpose.msra.mxu0 0.0
      %980 = vmatprep.subr.mxu0 0.0
      %981 = vmatpush1.xpose.msra.mxu0 0.0
      %982 = vmatprep.subr.mxu0 0.0
      %983 = vmatpush1.xpose.msra.mxu0 0.0
      %984 = vmatprep.subr.mxu0 0.0
      %985 = vmatpush1.xpose.msra.mxu0 0.0
      %986 = vmatprep.subr.mxu0 0.0
      %987 = vmatpush1.xpose.msra.mxu0 0.0
      %988 = vmatprep.subr.mxu0 0.0
      %989 = vmatpush1.xpose.msra.mxu0 0.0
      %990 = vmatprep.subr.mxu0 0.0
      %991 = vmatpush1.xpose.msra.mxu0 0.0
      %992 = vmatprep.subr.mxu0 0.0
      %993 = vmatpush1.xpose.msra.mxu0 0.0
      %994 = vmatprep.subr.mxu0 0.0
      %995 = vmatpush1.xpose.msra.mxu0 0.0
      %996 = vmatprep.subr.mxu0 0.0
      %997 = vmatpush1.xpose.msra.mxu0 0.0
      %998 = vmatprep.subr.mxu0 0.0
      %999 = vmatpush1.xpose.msra.mxu0 0.0
      %1000 = vmatprep.subr.mxu0 0.0
      %1001 = vmatpush1.xpose.msra.mxu0 0.0
      %1002 = vmatprep.subr.mxu0 0.0
      %1003 = vmatpush1.xpose.msra.mxu0 0.0
      %1004 = vmatprep.mubr.f32.mxu0 0.0
      %1005 = vmatmul.mubr.f32.gmra.mrb[0].mxu0 %v911
      %v1006 = vpop.f32.mrb[0].mxu0
      %v1007 = vadd.f32 0.0, %v1006
      %v1008 = vpop.f32.mrb[0].mxu0
      %1009 = vmatprep.mubr.f32.mxu0 0.0
      %1010 = vmatmul.mubr.f32.gmra.mrb[0].mxu0 %v911
      %v1011 = vpop.f32.mrb[0].mxu0
      %v1012 = vadd.f32 0.0, %v1011
      %v1013 = vpop.f32.mrb[0].mxu0
      %1014 = vmatprep.mubr.f32.mxu0 0.0
      %1015 = vmatmul.mubr.f32.gmra.mrb[0].mxu0 %v911
      %v1016 = vpop.f32.mrb[0].mxu0
      %v1017 = vadd.f32 0.0, %v1016
      %v1018 = vpop.f32.mrb[0].mxu0
      %1019 = vmatprep.mubr.f32.mxu0 0.0
      %1020 = vmatmul.mubr.f32.gmra.mrb[0].mxu0 %v911
      %v1021 = vpop.f32.mrb[0].mxu0
      %v1022 = vadd.f32 0.0, %v1021
      %v1023 = vpop.f32.mrb[0].mxu0
      %1024 = vmatprep.mubr.f32.mxu0 0.0
      %1025 = vmatmul.mubr.f32.gmra.mrb[0].mxu0 %v911
      %v1026 = vpop.f32.mrb[0].mxu0
      %v1027 = vadd.f32 0.0, %v1026
      %v1028 = vpop.f32.mrb[0].mxu0
      %1029 = vmatprep.mubr.f32.mxu0 0.0
      %1030 = vmatmul.mubr.f32.gmra.mrb[0].mxu0 %v911
      %v1031 = vpop.f32.mrb[0].mxu0
      %v1032 = vadd.f32 0.0, %v1031
      %v1033 = vpop.f32.mrb[0].mxu0
      %1034 = vmatprep.mubr.f32.mxu0 0.0
      %1035 = vmatmul.mubr.f32.gmra.mrb[0].mxu0 %v911
      %v1036 = vpop.f32.mrb[0].mxu0
      %v1037 = vadd.f32 0.0, %v1036
      %v1038 = vpop.f32.mrb[0].mxu0
      %1039 = vmatprep.mubr.f32.mxu0 0.0
      %1040 = vmatmul.mubr.f32.gmra.mrb[0].mxu0 %v911
      %v1041 = vpop.f32.mrb[0].mxu0
      %v1042 = vadd.f32 0.0, %v1041
      %v1043 = vpop.f32.mrb[0].mxu0
      %1044 = vmatprep.mubr.f32.mxu0 0.0
      %1045 = vmatmul.mubr.f32.gmra.mrb[0].mxu0 %v911
      %v1046 = vpop.f32.mrb[0].mxu0
      %v1047 = vadd.f32 0.0, %v1046
      %v1048 = vpop.f32.mrb[0].mxu0
      %1049 = vdwg.mxu0
      %v1051 = vsel %vm881, %v858, 0
      %v1054 = vsel %vm881, %v859, 0
      %v1057 = vsel %vm881, %v860, 0
      %v1060 = vsel %vm881, %v861, 0
      %v1063 = vsel %vm881, %v862, 0
      %1065 = vmatprep.subr.bf16.mxu0 0
      %1066 = vmatpush1.bf16.xpose.msra.mxu0 %v1051
      %1067 = vmatprep.subr.bf16.mxu0 0
      %1068 = vmatpush1.bf16.xpose.msra.mxu0 %v1054
      %1069 = vmatprep.subr.bf16.mxu0 0
      %1070 = vmatpush1.bf16.xpose.msra.mxu0 %v1057
      %1071 = vmatprep.subr.bf16.mxu0 0
      %1072 = vmatpush1.bf16.xpose.msra.mxu0 %v1060
      %1073 = vmatprep.subr.bf16.mxu0 0
      %1074 = vmatpush1.bf16.xpose.msra.mxu0 %v1063
      %1075 = vmatprep.subr.bf16.mxu0 0
      %1076 = vmatpush1.bf16.xpose.msra.mxu0 0
      %1077 = vmatprep.subr.bf16.mxu0 0
      %1078 = vmatpush1.bf16.xpose.msra.mxu0 0
      %1079 = vmatprep.subr.bf16.mxu0 0
      %1080 = vmatpush1.bf16.xpose.msra.mxu0 0
      %1081 = vmatprep.subr.bf16.mxu0 0
      %1082 = vmatpush1.bf16.xpose.msra.mxu0 0
      %1083 = vmatprep.subr.bf16.mxu0 0
      %1084 = vmatpush1.bf16.xpose.msra.mxu0 0
      %1085 = vmatprep.subr.bf16.mxu0 0
      %1086 = vmatpush1.bf16.xpose.msra.mxu0 0
      %1087 = vmatprep.subr.bf16.mxu0 0
      %1088 = vmatpush1.bf16.xpose.msra.mxu0 0
      %1089 = vmatprep.subr.bf16.mxu0 0
      %1090 = vmatpush1.bf16.xpose.msra.mxu0 0
      %1091 = vmatprep.subr.bf16.mxu0 0
      %1092 = vmatpush1.bf16.xpose.msra.mxu0 0
      %1093 = vmatprep.subr.bf16.mxu0 0
      %1094 = vmatpush1.bf16.xpose.msra.mxu0 0
      %1095 = vmatprep.subr.bf16.mxu0 0
      %1096 = vmatpush1.bf16.xpose.msra.mxu0 0
      %1097 = vmatprep.mubr.bf16.mxu0 0
      %1098 = vmatmul.mubr.bf16.gmra.mrb[0].mxu0 %v1051
      %v1099 = vpop.f32.mrb[0].mxu0
      %v1100 = vadd.f32 0.0, %v1099
      %v1101 = vpop.f32.mrb[0].mxu0
      %v1102 = vpop.f32.mrb[0].mxu0
      %v1103 = vadd.f32 0.0, %v1102
      %v1104 = vpop.f32.mrb[0].mxu0
      %1105 = vmatprep.mubr.bf16.mxu0 0
      %1106 = vmatmul.mubr.bf16.gmra.mrb[0].mxu0 %v1054
      %v1107 = vpop.f32.mrb[0].mxu0
      %v1108 = vadd.f32 0.0, %v1107
      %v1109 = vpop.f32.mrb[0].mxu0
      %v1110 = vpop.f32.mrb[0].mxu0
      %v1111 = vadd.f32 0.0, %v1110
      %v1112 = vpop.f32.mrb[0].mxu0
      %1113 = vmatprep.mubr.bf16.mxu0 0
      %1114 = vmatmul.mubr.bf16.gmra.mrb[0].mxu0 %v1057
      %v1115 = vpop.f32.mrb[0].mxu0
      %v1116 = vadd.f32 0.0, %v1115
      %v1117 = vpop.f32.mrb[0].mxu0
      %v1118 = vpop.f32.mrb[0].mxu0
      %v1119 = vadd.f32 0.0, %v1118
      %v1120 = vpop.f32.mrb[0].mxu0
      %1121 = vmatprep.mubr.bf16.mxu0 0
      %1122 = vmatmul.mubr.bf16.gmra.mrb[0].mxu0 %v1060
      %v1123 = vpop.f32.mrb[0].mxu0
      %v1124 = vadd.f32 0.0, %v1123
      %v1125 = vpop.f32.mrb[0].mxu0
      %v1126 = vpop.f32.mrb[0].mxu0
      %v1127 = vadd.f32 0.0, %v1126
      %v1128 = vpop.f32.mrb[0].mxu0
      %1129 = vmatprep.mubr.bf16.mxu0 0
      %1130 = vmatmul.mubr.bf16.gmra.mrb[0].mxu0 %v1063
      %v1131 = vpop.f32.mrb[0].mxu0
      %v1132 = vadd.f32 0.0, %v1131
      %v1133 = vpop.f32.mrb[0].mxu0
      %v1134 = vpop.f32.mrb[0].mxu0
      %v1135 = vpop.f32.mrb[0].mxu0
      %1136 = vdwg.mxu0
      %v1137 = vmul.f32 %v884, 0.5
      %v1138 = vmul.f32 %v887, 0.5
      %v1139 = vmul.f32 %v890, 0.5
      %v1140 = vmul.f32 %v893, 0.5
      %v1141 = vmul.f32 %v896, 0.5
      %v1142 = vmul.f32 %v899, 0.5
      %v1143 = vmul.f32 %v902, 0.5
      %v1144 = vmul.f32 %v905, 0.5
      %v1145 = vmul.f32 %v909, 0.5
      %v1146 = vsub.f32 %v1100, %v1137
      %v1147 = vsub.f32 %v1103, %v1138
      %v1148 = vsub.f32 %v1108, %v1139
      %v1149 = vsub.f32 %v1111, %v1140
      %v1150 = vsub.f32 %v1116, %v1141
      %v1151 = vsub.f32 %v1119, %v1142
      %v1152 = vsub.f32 %v1124, %v1143
      %v1153 = vsub.f32 %v1127, %v1144
      %v1154 = vsub.f32 %v1132, %v1145
      %v1155 = vmul.f32 %v1007, 0.5
      %v1156 = vmul.f32 %v1012, 0.5
      %v1157 = vmul.f32 %v1017, 0.5
      %v1158 = vmul.f32 %v1022, 0.5
      %v1159 = vmul.f32 %v1027, 0.5
      %v1160 = vmul.f32 %v1032, 0.5
      %v1161 = vmul.f32 %v1037, 0.5
      %v1162 = vmul.f32 %v1042, 0.5
      %v1163 = vmul.f32 %v1047, 0.5
      %v1164 = vsub.f32 %v1146, %v1155
      %v1165 = vsub.f32 %v1147, %v1156
      %v1166 = vsub.f32 %v1148, %v1157
      %v1167 = vsub.f32 %v1149, %v1158
      %v1168 = vsub.f32 %v1150, %v1159
      %v1169 = vsub.f32 %v1151, %v1160
      %v1170 = vsub.f32 %v1152, %v1161
      %v1171 = vsub.f32 %v1153, %v1162
      %v1172 = vsub.f32 %v1154, %v1163
      %v1173 = vmul.f32 %v1164, 1.442695
      %v1174 = vpow.pop %v1173
      %v1175 = vmul.f32 %v1165, 1.442695
      %v1176 = vpow.pop %v1175
      %v1177 = vmul.f32 %v1166, 1.442695
      %v1178 = vpow.pop %v1177
      %v1179 = vmul.f32 %v1167, 1.442695
      %v1180 = vpow.pop %v1179
      %v1181 = vmul.f32 %v1168, 1.442695
      %v1182 = vpow.pop %v1181
      %v1183 = vmul.f32 %v1169, 1.442695
      %v1184 = vpow.pop %v1183
      %v1185 = vmul.f32 %v1170, 1.442695
      %v1186 = vpow.pop %v1185
      %v1187 = vmul.f32 %v1171, 1.442695
      %v1188 = vpow.pop %v1187
      %v1189 = vmul.f32 %v1172, 1.442695
      %v1190 = vpow.pop %v1189
      %v1191 = vld [vmem:[%s6] sm:$0xf]
      %v1192 = vld [vmem:[%s6 + $0x4] sm:$0xf]
      %v1193 = vld [vmem:[%s6 + $0x8] sm:$0xf]
      %v1194 = vld [vmem:[%s6 + $0xc] sm:$0xf]
      %v1195 = vld [vmem:[%s6 + $0x10] sm:$0xf]
      %v1196 = vld [vmem:[%s6 + $0x14] sm:$0xf]
      %v1197 = vld [vmem:[%s6 + $0x18] sm:$0xf]
      %v1198 = vld [vmem:[%s6 + $0x1c] sm:$0xf]
      %v1199 = vld [vmem:[%s6 + $0x20] sm:$0x1]
      %v1200 = vunpack.c.l.bf16 %v1191
      %v1201 = vunpack.c.l.bf16 %v1192
      %v1202 = vunpack.c.l.bf16 %v1193
      %v1203 = vunpack.c.l.bf16 %v1194
      %v1204 = vunpack.c.l.bf16 %v1195
      %v1205 = vunpack.c.l.bf16 %v1196
      %v1206 = vunpack.c.l.bf16 %v1197
      %v1207 = vunpack.c.l.bf16 %v1198
      %v1208 = vunpack.c.l.bf16 %v1199
      %v1209 = vadd.f32 %v1174, %v1200
      %v1210 = vadd.f32 %v1176, %v1201
      %v1211 = vadd.f32 %v1178, %v1202
      %v1212 = vadd.f32 %v1180, %v1203
      %v1213 = vadd.f32 %v1182, %v1204
      %v1214 = vadd.f32 %v1184, %v1205
      %v1215 = vadd.f32 %v1186, %v1206
      %v1216 = vadd.f32 %v1188, %v1207
      %v1217 = vadd.f32 %v1190, %v1208
      %v1218 = vpack.c.bf16 %v1210, %v1209
      %v1219 = vpack.c.bf16 %v1212, %v1211
      %v1220 = vpack.c.bf16 %v1214, %v1213
      %v1221 = vpack.c.bf16 %v1216, %v1215
      %v1222 = vpack.c.bf16 %v1217, %v1217
      %v1223 = vld [vmem:[%s293] sm:$0xf]
      %v1224 = vld [vmem:[%s293 + $0x4] sm:$0xf]
      %v1225 = vld [vmem:[%s293 + $0x8] sm:$0xf]
      %v1226 = vld [vmem:[%s293 + $0xc] sm:$0xf]
      %v1227 = vld [vmem:[%s293 + $0x10] sm:$0xf]
      %v1228 = vld [vmem:[%s293 + $0x14] sm:$0xf]
      %v1229 = vld [vmem:[%s293 + $0x18] sm:$0xf]
      %v1230 = vld [vmem:[%s293 + $0x1c] sm:$0xf]
      %v1231 = vld [vmem:[%s293 + $0x20] sm:$0x1]
      %v1241 = vunpack.c.l.b16 %v1223
      %v1242 = vunpack.c.l.b16 %v1224
      %v1243 = vunpack.c.l.b16 %v1225
      %v1244 = vunpack.c.l.b16 %v1226
      %v1245 = vunpack.c.l.b16 %v1227
      %v1246 = vunpack.c.l.b16 %v1228
      %v1247 = vunpack.c.l.b16 %v1229
      %v1248 = vunpack.c.l.b16 %v1230
      %v1249 = vunpack.c.l.b16 %v1231
      %v1250 = vpack.c.b16 %v1242, %v1241
      %v1251 = vpack.c.b16 %v1244, %v1243
      %v1252 = vpack.c.b16 %v1246, %v1245
      %v1253 = vpack.c.b16 %v1248, %v1247
      %v1254 = vpack.c.b16 %v1249, %v1249
      %vm1259 = vcmask 531456
      %v1261 = vsel %vm1259, %v1218, 0
      %v1264 = vsel %vm1259, %v1219, 0
      %v1267 = vsel %vm1259, %v1220, 0
      %v1270 = vsel %vm1259, %v1221, 0
      %v1273 = vsel %vm1259, %v1222, 0
      %vm1275 = vcmask 1040384
      %v1276 = vsel 0, 4294967295, 65535
      %v1277 = vsel %vm1275, %v1276, 0
      %v1279 = vand.u32 %v1254, %v1277
      %1281 = vmatprep.subr.bf16.mxu0 0
      %1282 = vmatpush1.bf16.msra.mxu0 %v1250
      %1283 = vmatprep.subr.bf16.mxu0 0
      %1284 = vmatpush1.bf16.msra.mxu0 %v1251
      %1285 = vmatprep.subr.bf16.mxu0 0
      %1286 = vmatpush1.bf16.msra.mxu0 %v1252
      %1287 = vmatprep.subr.bf16.mxu0 0
      %1288 = vmatpush1.bf16.msra.mxu0 %v1253
      %1289 = vmatprep.subr.bf16.mxu0 0
      %1290 = vmatpush1.bf16.msra.mxu0 %v1279
      %1291 = vmatprep.subr.bf16.mxu0 0
      %1292 = vmatpush1.bf16.msra.mxu0 0
      %1293 = vmatprep.subr.bf16.mxu0 0
      %1294 = vmatpush1.bf16.msra.mxu0 0
      %1295 = vmatprep.subr.bf16.mxu0 0
      %1296 = vmatpush1.bf16.msra.mxu0 0
      %1297 = vmatprep.subr.bf16.mxu0 0
      %1298 = vmatpush1.bf16.msra.mxu0 0
      %1299 = vmatprep.subr.bf16.mxu0 0
      %1300 = vmatpush1.bf16.msra.mxu0 0
      %1301 = vmatprep.subr.bf16.mxu0 0
      %1302 = vmatpush1.bf16.msra.mxu0 0
      %1303 = vmatprep.subr.bf16.mxu0 0
      %1304 = vmatpush1.bf16.msra.mxu0 0
      %1305 = vmatprep.subr.bf16.mxu0 0
      %1306 = vmatpush1.bf16.msra.mxu0 0
      %1307 = vmatprep.subr.bf16.mxu0 0
      %1308 = vmatpush1.bf16.msra.mxu0 0
      %1309 = vmatprep.subr.bf16.mxu0 0
      %1310 = vmatpush1.bf16.msra.mxu0 0
      %1311 = vmatprep.subr.bf16.mxu0 0
      %1312 = vmatpush1.bf16.msra.mxu0 0
      %1313 = vmatprep.mubr.bf16.mxu0 0
      %1314 = vmatmul.mubr.bf16.gmra.mrb[0].mxu0 %v1261
      %v1315 = vpop.f32.mrb[0].mxu0
      %v1316 = vadd.f32 0.0, %v1315
      %v1317 = vpop.f32.mrb[0].mxu0
      %v1318 = vpop.f32.mrb[0].mxu0
      %v1319 = vadd.f32 0.0, %v1318
      %v1320 = vpop.f32.mrb[0].mxu0
      %1321 = vmatprep.mubr.bf16.mxu0 0
      %1322 = vmatmul.mubr.bf16.gmra.mrb[0].mxu0 %v1264
      %v1323 = vpop.f32.mrb[0].mxu0
      %v1324 = vadd.f32 0.0, %v1323
      %v1325 = vpop.f32.mrb[0].mxu0
      %v1326 = vpop.f32.mrb[0].mxu0
      %v1327 = vadd.f32 0.0, %v1326
      %v1328 = vpop.f32.mrb[0].mxu0
      %1329 = vmatprep.mubr.bf16.mxu0 0
      %1330 = vmatmul.mubr.bf16.gmra.mrb[0].mxu0 %v1267
      %v1331 = vpop.f32.mrb[0].mxu0
      %v1332 = vadd.f32 0.0, %v1331
      %v1333 = vpop.f32.mrb[0].mxu0
      %v1334 = vpop.f32.mrb[0].mxu0
      %v1335 = vadd.f32 0.0, %v1334
      %v1336 = vpop.f32.mrb[0].mxu0
      %1337 = vmatprep.mubr.bf16.mxu0 0
      %1338 = vmatmul.mubr.bf16.gmra.mrb[0].mxu0 %v1270
      %v1339 = vpop.f32.mrb[0].mxu0
      %v1340 = vadd.f32 0.0, %v1339
      %v1341 = vpop.f32.mrb[0].mxu0
      %v1342 = vpop.f32.mrb[0].mxu0
      %v1343 = vadd.f32 0.0, %v1342
      %v1344 = vpop.f32.mrb[0].mxu0
      %1345 = vmatprep.mubr.bf16.mxu0 0
      %1346 = vmatmul.mubr.bf16.gmra.mrb[0].mxu0 %v1273
      %v1347 = vpop.f32.mrb[0].mxu0
      %v1348 = vadd.f32 0.0, %v1347
      %v1349 = vpop.f32.mrb[0].mxu0
      %v1350 = vpop.f32.mrb[0].mxu0
      %v1351 = vpop.f32.mrb[0].mxu0
      %1352 = vdwg.mxu0
      %1353 = vrot.lane.b32.xlu0 %v872, 96
      %v1354 = vpop.permute.xlu0 %1353
      %1355 = vrot.lane.b32.xlu0 %v873, 96
      %v1356 = vpop.permute.xlu0 %1355
      %1357 = vrot.lane.b32.xlu0 %v874, 96
      %v1358 = vpop.permute.xlu0 %1357
      %1359 = vrot.lane.b32.xlu0 %v875, 96
      %v1360 = vpop.permute.xlu0 %1359
      %1361 = vrot.lane.b32.xlu0 %v876, 96
      %v1362 = vpop.permute.xlu0 %1361
      %1363 = vrot.lane.b32.xlu0 %v877, 96
      %v1364 = vpop.permute.xlu0 %1363
      %1365 = vrot.lane.b32.xlu0 %v878, 96
      %v1366 = vpop.permute.xlu0 %1365
      %1367 = vrot.lane.b32.xlu0 %v879, 96
      %v1368 = vpop.permute.xlu0 %1367
      %1369 = vrot.lane.b32.xlu0 %v880, 96
      %v1370 = vpop.permute.xlu0 %1369
      %v1380 = vsel %vm881, %v1354, 0.0
      %1381 = vadd.xlane.f32.xlu0 %v1380
      %v1382 = vpop.xlane.xlu0 %1381
      %v1383 = vsel %vm881, %v1356, 0.0
      %1384 = vadd.xlane.f32.xlu0 %v1383
      %v1385 = vpop.xlane.xlu0 %1384
      %v1386 = vsel %vm881, %v1358, 0.0
      %1387 = vadd.xlane.f32.xlu0 %v1386
      %v1388 = vpop.xlane.xlu0 %1387
      %v1389 = vsel %vm881, %v1360, 0.0
      %1390 = vadd.xlane.f32.xlu0 %v1389
      %v1391 = vpop.xlane.xlu0 %1390
      %v1392 = vsel %vm881, %v1362, 0.0
      %1393 = vadd.xlane.f32.xlu0 %v1392
      %v1394 = vpop.xlane.xlu0 %1393
      %v1395 = vsel %vm881, %v1364, 0.0
      %1396 = vadd.xlane.f32.xlu0 %v1395
      %v1397 = vpop.xlane.xlu0 %1396
      %v1398 = vsel %vm881, %v1366, 0.0
      %1399 = vadd.xlane.f32.xlu0 %v1398
      %v1400 = vpop.xlane.xlu0 %1399
      %v1401 = vsel %vm881, %v1368, 0.0
      %1402 = vadd.xlane.f32.xlu0 %v1401
      %v1403 = vpop.xlane.xlu0 %1402
      %v1404 = vsel %vm906, %v1370, 0.0
      %1405 = vadd.xlane.f32.xlu0 %v1404
      %v1406 = vpop.xlane.xlu0 %1405
      %v1407 = vsel %vm881, %v1354, 0
      %v1409 = vsel %vm881, %v1356, 0
      %v1411 = vsel %vm881, %v1358, 0
      %v1413 = vsel %vm881, %v1360, 0
      %v1415 = vsel %vm881, %v1362, 0
      %v1417 = vsel %vm881, %v1364, 0
      %v1419 = vsel %vm881, %v1366, 0
      %v1421 = vsel %vm881, %v1368, 0
      %v1423 = vsel %vm881, %v1370, 0
      %1425 = vmatprep.subr.mxu0 0.0
      %1426 = vmatpush1.xpose.msra.mxu0 %v1407
      %1427 = vmatprep.subr.mxu0 0.0
      %1428 = vmatpush1.xpose.msra.mxu0 %v1409
      %1429 = vmatprep.subr.mxu0 0.0
      %1430 = vmatpush1.xpose.msra.mxu0 %v1411
      %1431 = vmatprep.subr.mxu0 0.0
      %1432 = vmatpush1.xpose.msra.mxu0 %v1413
      %1433 = vmatprep.subr.mxu0 0.0
      %1434 = vmatpush1.xpose.msra.mxu0 %v1415
      %1435 = vmatprep.subr.mxu0 0.0
      %1436 = vmatpush1.xpose.msra.mxu0 %v1417
      %1437 = vmatprep.subr.mxu0 0.0
      %1438 = vmatpush1.xpose.msra.mxu0 %v1419
      %1439 = vmatprep.subr.mxu0 0.0
      %1440 = vmatpush1.xpose.msra.mxu0 %v1421
      %1441 = vmatprep.subr.mxu0 0.0
      %1442 = vmatpush1.xpose.msra.mxu0 %v1423
      %1443 = vmatprep.subr.mxu0 0.0
      %1444 = vmatpush1.xpose.msra.mxu0 0.0
      %1445 = vmatprep.subr.mxu0 0.0
      %1446 = vmatpush1.xpose.msra.mxu0 0.0
      %1447 = vmatprep.subr.mxu0 0.0
      %1448 = vmatpush1.xpose.msra.mxu0 0.0
      %1449 = vmatprep.subr.mxu0 0.0
      %1450 = vmatpush1.xpose.msra.mxu0 0.0
      %1451 = vmatprep.subr.mxu0 0.0
      %1452 = vmatpush1.xpose.msra.mxu0 0.0
      %1453 = vmatprep.subr.mxu0 0.0
      %1454 = vmatpush1.xpose.msra.mxu0 0.0
      %1455 = vmatprep.subr.mxu0 0.0
      %1456 = vmatpush1.xpose.msra.mxu0 0.0
      %1457 = vmatprep.subr.mxu0 0.0
      %1458 = vmatpush1.xpose.msra.mxu0 0.0
      %1459 = vmatprep.subr.mxu0 0.0
      %1460 = vmatpush1.xpose.msra.mxu0 0.0
      %1461 = vmatprep.subr.mxu0 0.0
      %1462 = vmatpush1.xpose.msra.mxu0 0.0
      %1463 = vmatprep.subr.mxu0 0.0
      %1464 = vmatpush1.xpose.msra.mxu0 0.0
      %1465 = vmatprep.subr.mxu0 0.0
      %1466 = vmatpush1.xpose.msra.mxu0 0.0
      %1467 = vmatprep.subr.mxu0 0.0
      %1468 = vmatpush1.xpose.msra.mxu0 0.0
      %1469 = vmatprep.subr.mxu0 0.0
      %1470 = vmatpush1.xpose.msra.mxu0 0.0
      %1471 = vmatprep.subr.mxu0 0.0
      %1472 = vmatpush1.xpose.msra.mxu0 0.0
      %1473 = vmatprep.subr.mxu0 0.0
      %1474 = vmatpush1.xpose.msra.mxu0 0.0
      %1475 = vmatprep.subr.mxu0 0.0
      %1476 = vmatpush1.xpose.msra.mxu0 0.0
      %1477 = vmatprep.subr.mxu0 0.0
      %1478 = vmatpush1.xpose.msra.mxu0 0.0
      %1479 = vmatprep.subr.mxu0 0.0
      %1480 = vmatpush1.xpose.msra.mxu0 0.0
      %1481 = vmatprep.subr.mxu0 0.0
      %1482 = vmatpush1.xpose.msra.mxu0 0.0
      %1483 = vmatprep.subr.mxu0 0.0
      %1484 = vmatpush1.xpose.msra.mxu0 0.0
      %1485 = vmatprep.subr.mxu0 0.0
      %1486 = vmatpush1.xpose.msra.mxu0 0.0
      %1487 = vmatprep.subr.mxu0 0.0
      %1488 = vmatpush1.xpose.msra.mxu0 0.0
      %1489 = vmatprep.mubr.f32.mxu0 0.0
      %1490 = vmatmul.mubr.f32.gmra.mrb[0].mxu0 %v911
      %v1491 = vpop.f32.mrb[0].mxu0
      %v1492 = vadd.f32 0.0, %v1491
      %v1493 = vpop.f32.mrb[0].mxu0
      %1494 = vmatprep.mubr.f32.mxu0 0.0
      %1495 = vmatmul.mubr.f32.gmra.mrb[0].mxu0 %v911
      %v1496 = vpop.f32.mrb[0].mxu0
      %v1497 = vadd.f32 0.0, %v1496
      %v1498 = vpop.f32.mrb[0].mxu0
      %1499 = vmatprep.mubr.f32.mxu0 0.0
      %1500 = vmatmul.mubr.f32.gmra.mrb[0].mxu0 %v911
      %v1501 = vpop.f32.mrb[0].mxu0
      %v1502 = vadd.f32 0.0, %v1501
      %v1503 = vpop.f32.mrb[0].mxu0
      %1504 = vmatprep.mubr.f32.mxu0 0.0
      %1505 = vmatmul.mubr.f32.gmra.mrb[0].mxu0 %v911
      %v1506 = vpop.f32.mrb[0].mxu0
      %v1507 = vadd.f32 0.0, %v1506
      %v1508 = vpop.f32.mrb[0].mxu0
      %1509 = vmatprep.mubr.f32.mxu0 0.0
      %1510 = vmatmul.mubr.f32.gmra.mrb[0].mxu0 %v911
      %v1511 = vpop.f32.mrb[0].mxu0
      %v1512 = vadd.f32 0.0, %v1511
      %v1513 = vpop.f32.mrb[0].mxu0
      %1514 = vmatprep.mubr.f32.mxu0 0.0
      %1515 = vmatmul.mubr.f32.gmra.mrb[0].mxu0 %v911
      %v1516 = vpop.f32.mrb[0].mxu0
      %v1517 = vadd.f32 0.0, %v1516
      %v1518 = vpop.f32.mrb[0].mxu0
      %1519 = vmatprep.mubr.f32.mxu0 0.0
      %1520 = vmatmul.mubr.f32.gmra.mrb[0].mxu0 %v911
      %v1521 = vpop.f32.mrb[0].mxu0
      %v1522 = vadd.f32 0.0, %v1521
      %v1523 = vpop.f32.mrb[0].mxu0
      %1524 = vmatprep.mubr.f32.mxu0 0.0
      %1525 = vmatmul.mubr.f32.gmra.mrb[0].mxu0 %v911
      %v1526 = vpop.f32.mrb[0].mxu0
      %v1527 = vadd.f32 0.0, %v1526
      %v1528 = vpop.f32.mrb[0].mxu0
      %1529 = vmatprep.mubr.f32.mxu0 0.0
      %1530 = vmatmul.mubr.f32.gmra.mrb[0].mxu0 %v911
      %v1531 = vpop.f32.mrb[0].mxu0
      %v1532 = vadd.f32 0.0, %v1531
      %v1533 = vpop.f32.mrb[0].mxu0
      %1534 = vdwg.mxu0
      %1540 = vrot.lane.b32.xlu0 %v858, 96
      %v1541 = vpop.permute.xlu0 %1540
      %1542 = vrot.lane.b32.xlu0 %v859, 96
      %v1543 = vpop.permute.xlu0 %1542
      %1544 = vrot.lane.b32.xlu0 %v860, 96
      %v1545 = vpop.permute.xlu0 %1544
      %1546 = vrot.lane.b32.xlu0 %v861, 96
      %v1547 = vpop.permute.xlu0 %1546
      %1548 = vrot.lane.b32.xlu0 %v862, 96
      %v1549 = vpop.permute.xlu0 %1548
      %v1551 = vsel %vm881, %v1541, 0
      %v1554 = vsel %vm881, %v1543, 0
      %v1557 = vsel %vm881, %v1545, 0
      %v1560 = vsel %vm881, %v1547, 0
      %v1563 = vsel %vm881, %v1549, 0
      %1565 = vmatprep.subr.bf16.mxu0 0
      %1566 = vmatpush1.bf16.xpose.msra.mxu0 %v1551
      %1567 = vmatprep.subr.bf16.mxu0 0
      %1568 = vmatpush1.bf16.xpose.msra.mxu0 %v1554
      %1569 = vmatprep.subr.bf16.mxu0 0
      %1570 = vmatpush1.bf16.xpose.msra.mxu0 %v1557
      %1571 = vmatprep.subr.bf16.mxu0 0
      %1572 = vmatpush1.bf16.xpose.msra.mxu0 %v1560
      %1573 = vmatprep.subr.bf16.mxu0 0
      %1574 = vmatpush1.bf16.xpose.msra.mxu0 %v1563
      %1575 = vmatprep.subr.bf16.mxu0 0
      %1576 = vmatpush1.bf16.xpose.msra.mxu0 0
      %1577 = vmatprep.subr.bf16.mxu0 0
      %1578 = vmatpush1.bf16.xpose.msra.mxu0 0
      %1579 = vmatprep.subr.bf16.mxu0 0
      %1580 = vmatpush1.bf16.xpose.msra.mxu0 0
      %1581 = vmatprep.subr.bf16.mxu0 0
      %1582 = vmatpush1.bf16.xpose.msra.mxu0 0
      %1583 = vmatprep.subr.bf16.mxu0 0
      %1584 = vmatpush1.bf16.xpose.msra.mxu0 0
      %1585 = vmatprep.subr.bf16.mxu0 0
      %1586 = vmatpush1.bf16.xpose.msra.mxu0 0
      %1587 = vmatprep.subr.bf16.mxu0 0
      %1588 = vmatpush1.bf16.xpose.msra.mxu0 0
      %1589 = vmatprep.subr.bf16.mxu0 0
      %1590 = vmatpush1.bf16.xpose.msra.mxu0 0
      %1591 = vmatprep.subr.bf16.mxu0 0
      %1592 = vmatpush1.bf16.xpose.msra.mxu0 0
      %1593 = vmatprep.subr.bf16.mxu0 0
      %1594 = vmatpush1.bf16.xpose.msra.mxu0 0
      %1595 = vmatprep.subr.bf16.mxu0 0
      %1596 = vmatpush1.bf16.xpose.msra.mxu0 0
      %1597 = vmatprep.mubr.bf16.mxu0 0
      %1598 = vmatmul.mubr.bf16.gmra.mrb[0].mxu0 %v1551
      %v1599 = vpop.f32.mrb[0].mxu0
      %v1600 = vadd.f32 0.0, %v1599
      %v1601 = vpop.f32.mrb[0].mxu0
      %v1602 = vpop.f32.mrb[0].mxu0
      %v1603 = vadd.f32 0.0, %v1602
      %v1604 = vpop.f32.mrb[0].mxu0
      %1605 = vmatprep.mubr.bf16.mxu0 0
      %1606 = vmatmul.mubr.bf16.gmra.mrb[0].mxu0 %v1554
      %v1607 = vpop.f32.mrb[0].mxu0
      %v1608 = vadd.f32 0.0, %v1607
      %v1609 = vpop.f32.mrb[0].mxu0
      %v1610 = vpop.f32.mrb[0].mxu0
      %v1611 = vadd.f32 0.0, %v1610
      %v1612 = vpop.f32.mrb[0].mxu0
      %1613 = vmatprep.mubr.bf16.mxu0 0
      %1614 = vmatmul.mubr.bf16.gmra.mrb[0].mxu0 %v1557
      %v1615 = vpop.f32.mrb[0].mxu0
      %v1616 = vadd.f32 0.0, %v1615
      %v1617 = vpop.f32.mrb[0].mxu0
      %v1618 = vpop.f32.mrb[0].mxu0
      %v1619 = vadd.f32 0.0, %v1618
      %v1620 = vpop.f32.mrb[0].mxu0
      %1621 = vmatprep.mubr.bf16.mxu0 0
      %1622 = vmatmul.mubr.bf16.gmra.mrb[0].mxu0 %v1560
      %v1623 = vpop.f32.mrb[0].mxu0
      %v1624 = vadd.f32 0.0, %v1623
      %v1625 = vpop.f32.mrb[0].mxu0
      %v1626 = vpop.f32.mrb[0].mxu0
      %v1627 = vadd.f32 0.0, %v1626
      %v1628 = vpop.f32.mrb[0].mxu0
      %1629 = vmatprep.mubr.bf16.mxu0 0
      %1630 = vmatmul.mubr.bf16.gmra.mrb[0].mxu0 %v1563
      %v1631 = vpop.f32.mrb[0].mxu0
      %v1632 = vadd.f32 0.0, %v1631
      %v1633 = vpop.f32.mrb[0].mxu0
      %v1634 = vpop.f32.mrb[0].mxu0
      %v1635 = vpop.f32.mrb[0].mxu0
      %1636 = vdwg.mxu0
      %v1637 = vmul.f32 %v1382, 0.5
      %v1638 = vmul.f32 %v1385, 0.5
      %v1639 = vmul.f32 %v1388, 0.5
      %v1640 = vmul.f32 %v1391, 0.5
      %v1641 = vmul.f32 %v1394, 0.5
      %v1642 = vmul.f32 %v1397, 0.5
      %v1643 = vmul.f32 %v1400, 0.5
      %v1644 = vmul.f32 %v1403, 0.5
      %v1645 = vmul.f32 %v1406, 0.5
      %v1646 = vsub.f32 %v1600, %v1637
      %v1647 = vsub.f32 %v1603, %v1638
      %v1648 = vsub.f32 %v1608, %v1639
      %v1649 = vsub.f32 %v1611, %v1640
      %v1650 = vsub.f32 %v1616, %v1641
      %v1651 = vsub.f32 %v1619, %v1642
      %v1652 = vsub.f32 %v1624, %v1643
      %v1653 = vsub.f32 %v1627, %v1644
      %v1654 = vsub.f32 %v1632, %v1645
      %v1655 = vmul.f32 %v1492, 0.5
      %v1656 = vmul.f32 %v1497, 0.5
      %v1657 = vmul.f32 %v1502, 0.5
      %v1658 = vmul.f32 %v1507, 0.5
      %v1659 = vmul.f32 %v1512, 0.5
      %v1660 = vmul.f32 %v1517, 0.5
      %v1661 = vmul.f32 %v1522, 0.5
      %v1662 = vmul.f32 %v1527, 0.5
      %v1663 = vmul.f32 %v1532, 0.5
      %v1664 = vsub.f32 %v1646, %v1655
      %v1665 = vsub.f32 %v1647, %v1656
      %v1666 = vsub.f32 %v1648, %v1657
      %v1667 = vsub.f32 %v1649, %v1658
      %v1668 = vsub.f32 %v1650, %v1659
      %v1669 = vsub.f32 %v1651, %v1660
      %v1670 = vsub.f32 %v1652, %v1661
      %v1671 = vsub.f32 %v1653, %v1662
      %v1672 = vsub.f32 %v1654, %v1663
      %v1673 = vmul.f32 %v1664, 1.442695
      %v1674 = vpow.pop %v1673
      %v1675 = vmul.f32 %v1665, 1.442695
      %v1676 = vpow.pop %v1675
      %v1677 = vmul.f32 %v1666, 1.442695
      %v1678 = vpow.pop %v1677
      %v1679 = vmul.f32 %v1667, 1.442695
      %v1680 = vpow.pop %v1679
      %v1681 = vmul.f32 %v1668, 1.442695
      %v1682 = vpow.pop %v1681
      %v1683 = vmul.f32 %v1669, 1.442695
      %v1684 = vpow.pop %v1683
      %v1685 = vmul.f32 %v1670, 1.442695
      %v1686 = vpow.pop %v1685
      %v1687 = vmul.f32 %v1671, 1.442695
      %v1688 = vpow.pop %v1687
      %v1689 = vmul.f32 %v1672, 1.442695
      %v1690 = vpow.pop %v1689
      %s1691 = scalar_lea.vmem %s6, 36
      %v1692 = vld [vmem:[%s1691] sm:$0xf]
      %v1693 = vld [vmem:[%s1691 + $0x4] sm:$0xf]
      %v1694 = vld [vmem:[%s1691 + $0x8] sm:$0xf]
      %v1695 = vld [vmem:[%s1691 + $0xc] sm:$0xf]
      %v1696 = vld [vmem:[%s1691 + $0x10] sm:$0xf]
      %v1697 = vld [vmem:[%s1691 + $0x14] sm:$0xf]
      %v1698 = vld [vmem:[%s1691 + $0x18] sm:$0xf]
      %v1699 = vld [vmem:[%s1691 + $0x1c] sm:$0xf]
      %v1700 = vld [vmem:[%s1691 + $0x20] sm:$0x1]
      %v1701 = vunpack.c.l.bf16 %v1692
      %v1702 = vunpack.c.l.bf16 %v1693
      %v1703 = vunpack.c.l.bf16 %v1694
      %v1704 = vunpack.c.l.bf16 %v1695
      %v1705 = vunpack.c.l.bf16 %v1696
      %v1706 = vunpack.c.l.bf16 %v1697
      %v1707 = vunpack.c.l.bf16 %v1698
      %v1708 = vunpack.c.l.bf16 %v1699
      %v1709 = vunpack.c.l.bf16 %v1700
      %v1710 = vadd.f32 %v1674, %v1701
      %v1711 = vadd.f32 %v1676, %v1702
      %v1712 = vadd.f32 %v1678, %v1703
      %v1713 = vadd.f32 %v1680, %v1704
      %v1714 = vadd.f32 %v1682, %v1705
      %v1715 = vadd.f32 %v1684, %v1706
      %v1716 = vadd.f32 %v1686, %v1707
      %v1717 = vadd.f32 %v1688, %v1708
      %v1718 = vadd.f32 %v1690, %v1709
      %v1719 = vpack.c.bf16 %v1711, %v1710
      %v1720 = vpack.c.bf16 %v1713, %v1712
      %v1721 = vpack.c.bf16 %v1715, %v1714
      %v1722 = vpack.c.bf16 %v1717, %v1716
      %v1723 = vpack.c.bf16 %v1718, %v1718
      %s1724 = scalar_lea.vmem %s293, 36
      %v1725 = vld [vmem:[%s1724] sm:$0xf]
      %v1726 = vld [vmem:[%s1724 + $0x4] sm:$0xf]
      %v1727 = vld [vmem:[%s1724 + $0x8] sm:$0xf]
      %v1728 = vld [vmem:[%s1724 + $0xc] sm:$0xf]
      %v1729 = vld [vmem:[%s1724 + $0x10] sm:$0xf]
      %v1730 = vld [vmem:[%s1724 + $0x14] sm:$0xf]
      %v1731 = vld [vmem:[%s1724 + $0x18] sm:$0xf]
      %v1732 = vld [vmem:[%s1724 + $0x1c] sm:$0xf]
      %v1733 = vld [vmem:[%s1724 + $0x20] sm:$0x1]
      %v1743 = vunpack.c.l.b16 %v1725
      %v1744 = vunpack.c.l.b16 %v1726
      %v1745 = vunpack.c.l.b16 %v1727
      %v1746 = vunpack.c.l.b16 %v1728
      %v1747 = vunpack.c.l.b16 %v1729
      %v1748 = vunpack.c.l.b16 %v1730
      %v1749 = vunpack.c.l.b16 %v1731
      %v1750 = vunpack.c.l.b16 %v1732
      %v1751 = vunpack.c.l.b16 %v1733
      %v1752 = vpack.c.b16 %v1744, %v1743
      %v1753 = vpack.c.b16 %v1746, %v1745
      %v1754 = vpack.c.b16 %v1748, %v1747
      %v1755 = vpack.c.b16 %v1750, %v1749
      %v1756 = vpack.c.b16 %v1751, %v1751
      %v1762 = vsel %vm1259, %v1719, 0
      %v1765 = vsel %vm1259, %v1720, 0
      %v1768 = vsel %vm1259, %v1721, 0
      %v1771 = vsel %vm1259, %v1722, 0
      %v1774 = vsel %vm1259, %v1723, 0
      %v1777 = vand.u32 %v1756, %v1277
      %1779 = vmatprep.subr.bf16.mxu0 0
      %1780 = vmatpush1.bf16.msra.mxu0 %v1752
      %1781 = vmatprep.subr.bf16.mxu0 0
      %1782 = vmatpush1.bf16.msra.mxu0 %v1753
      %1783 = vmatprep.subr.bf16.mxu0 0
      %1784 = vmatpush1.bf16.msra.mxu0 %v1754
      %1785 = vmatprep.subr.bf16.mxu0 0
      %1786 = vmatpush1.bf16.msra.mxu0 %v1755
      %1787 = vmatprep.subr.bf16.mxu0 0
      %1788 = vmatpush1.bf16.msra.mxu0 %v1777
      %1789 = vmatprep.subr.bf16.mxu0 0
      %1790 = vmatpush1.bf16.msra.mxu0 0
      %1791 = vmatprep.subr.bf16.mxu0 0
      %1792 = vmatpush1.bf16.msra.mxu0 0
      %1793 = vmatprep.subr.bf16.mxu0 0
      %1794 = vmatpush1.bf16.msra.mxu0 0
      %1795 = vmatprep.subr.bf16.mxu0 0
      %1796 = vmatpush1.bf16.msra.mxu0 0
      %1797 = vmatprep.subr.bf16.mxu0 0
      %1798 = vmatpush1.bf16.msra.mxu0 0
      %1799 = vmatprep.subr.bf16.mxu0 0
      %1800 = vmatpush1.bf16.msra.mxu0 0
      %1801 = vmatprep.subr.bf16.mxu0 0
      %1802 = vmatpush1.bf16.msra.mxu0 0
      %1803 = vmatprep.subr.bf16.mxu0 0
      %1804 = vmatpush1.bf16.msra.mxu0 0
      %1805 = vmatprep.subr.bf16.mxu0 0
      %1806 = vmatpush1.bf16.msra.mxu0 0
      %1807 = vmatprep.subr.bf16.mxu0 0
      %1808 = vmatpush1.bf16.msra.mxu0 0
      %1809 = vmatprep.subr.bf16.mxu0 0
      %1810 = vmatpush1.bf16.msra.mxu0 0
      %1811 = vmatprep.mubr.bf16.mxu0 0
      %1812 = vmatmul.mubr.bf16.gmra.mrb[0].mxu0 %v1762
      %v1813 = vpop.f32.mrb[0].mxu0
      %v1814 = vadd.f32 0.0, %v1813
      %v1815 = vpop.f32.mrb[0].mxu0
      %v1816 = vpop.f32.mrb[0].mxu0
      %v1817 = vadd.f32 0.0, %v1816
      %v1818 = vpop.f32.mrb[0].mxu0
      %1819 = vmatprep.mubr.bf16.mxu0 0
      %1820 = vmatmul.mubr.bf16.gmra.mrb[0].mxu0 %v1765
      %v1821 = vpop.f32.mrb[0].mxu0
      %v1822 = vadd.f32 0.0, %v1821
      %v1823 = vpop.f32.mrb[0].mxu0
      %v1824 = vpop.f32.mrb[0].mxu0
      %v1825 = vadd.f32 0.0, %v1824
      %v1826 = vpop.f32.mrb[0].mxu0
      %1827 = vmatprep.mubr.bf16.mxu0 0
      %1828 = vmatmul.mubr.bf16.gmra.mrb[0].mxu0 %v1768
      %v1829 = vpop.f32.mrb[0].mxu0
      %v1830 = vadd.f32 0.0, %v1829
      %v1831 = vpop.f32.mrb[0].mxu0
      %v1832 = vpop.f32.mrb[0].mxu0
      %v1833 = vadd.f32 0.0, %v1832
      %v1834 = vpop.f32.mrb[0].mxu0
      %1835 = vmatprep.mubr.bf16.mxu0 0
      %1836 = vmatmul.mubr.bf16.gmra.mrb[0].mxu0 %v1771
      %v1837 = vpop.f32.mrb[0].mxu0
      %v1838 = vadd.f32 0.0, %v1837
      %v1839 = vpop.f32.mrb[0].mxu0
      %v1840 = vpop.f32.mrb[0].mxu0
      %v1841 = vadd.f32 0.0, %v1840
      %v1842 = vpop.f32.mrb[0].mxu0
      %1843 = vmatprep.mubr.bf16.mxu0 0
      %1844 = vmatmul.mubr.bf16.gmra.mrb[0].mxu0 %v1774
      %v1845 = vpop.f32.mrb[0].mxu0
      %v1846 = vadd.f32 0.0, %v1845
      %v1847 = vpop.f32.mrb[0].mxu0
      %v1848 = vpop.f32.mrb[0].mxu0
      %v1849 = vpop.f32.mrb[0].mxu0
      %1850 = vdwg.mxu0
      %1851 = vrot.lane.b32.xlu0 %v872, 64
      %v1852 = vpop.permute.xlu0 %1851
      %1853 = vrot.lane.b32.xlu0 %v873, 64
      %v1854 = vpop.permute.xlu0 %1853
      %1855 = vrot.lane.b32.xlu0 %v874, 64
      %v1856 = vpop.permute.xlu0 %1855
      %1857 = vrot.lane.b32.xlu0 %v875, 64
      %v1858 = vpop.permute.xlu0 %1857
      %1859 = vrot.lane.b32.xlu0 %v876, 64
      %v1860 = vpop.permute.xlu0 %1859
      %1861 = vrot.lane.b32.xlu0 %v877, 64
      %v1862 = vpop.permute.xlu0 %1861
      %1863 = vrot.lane.b32.xlu0 %v878, 64
      %v1864 = vpop.permute.xlu0 %1863
      %1865 = vrot.lane.b32.xlu0 %v879, 64
      %v1866 = vpop.permute.xlu0 %1865
      %1867 = vrot.lane.b32.xlu0 %v880, 64
      %v1868 = vpop.permute.xlu0 %1867
      %v1878 = vsel %vm881, %v1852, 0.0
      %1879 = vadd.xlane.f32.xlu0 %v1878
      %v1880 = vpop.xlane.xlu0 %1879
      %v1881 = vsel %vm881, %v1854, 0.0
      %1882 = vadd.xlane.f32.xlu0 %v1881
      %v1883 = vpop.xlane.xlu0 %1882
      %v1884 = vsel %vm881, %v1856, 0.0
      %1885 = vadd.xlane.f32.xlu0 %v1884
      %v1886 = vpop.xlane.xlu0 %1885
      %v1887 = vsel %vm881, %v1858, 0.0
      %1888 = vadd.xlane.f32.xlu0 %v1887
      %v1889 = vpop.xlane.xlu0 %1888
      %v1890 = vsel %vm881, %v1860, 0.0
      %1891 = vadd.xlane.f32.xlu0 %v1890
      %v1892 = vpop.xlane.xlu0 %1891
      %v1893 = vsel %vm881, %v1862, 0.0
      %1894 = vadd.xlane.f32.xlu0 %v1893
      %v1895 = vpop.xlane.xlu0 %1894
      %v1896 = vsel %vm881, %v1864, 0.0
      %1897 = vadd.xlane.f32.xlu0 %v1896
      %v1898 = vpop.xlane.xlu0 %1897
      %v1899 = vsel %vm881, %v1866, 0.0
      %1900 = vadd.xlane.f32.xlu0 %v1899
      %v1901 = vpop.xlane.xlu0 %1900
      %v1902 = vsel %vm906, %v1868, 0.0
      %1903 = vadd.xlane.f32.xlu0 %v1902
      %v1904 = vpop.xlane.xlu0 %1903
      %v1905 = vsel %vm881, %v1852, 0
      %v1907 = vsel %vm881, %v1854, 0
      %v1909 = vsel %vm881, %v1856, 0
      %v1911 = vsel %vm881, %v1858, 0
      %v1913 = vsel %vm881, %v1860, 0
      %v1915 = vsel %vm881, %v1862, 0
      %v1917 = vsel %vm881, %v1864, 0
      %v1919 = vsel %vm881, %v1866, 0
      %v1921 = vsel %vm881, %v1868, 0
      %1923 = vmatprep.subr.mxu0 0.0
      %1924 = vmatpush1.xpose.msra.mxu0 %v1905
      %1925 = vmatprep.subr.mxu0 0.0
      %1926 = vmatpush1.xpose.msra.mxu0 %v1907
      %1927 = vmatprep.subr.mxu0 0.0
      %1928 = vmatpush1.xpose.msra.mxu0 %v1909
      %1929 = vmatprep.subr.mxu0 0.0
      %1930 = vmatpush1.xpose.msra.mxu0 %v1911
      %1931 = vmatprep.subr.mxu0 0.0
      %1932 = vmatpush1.xpose.msra.mxu0 %v1913
      %1933 = vmatprep.subr.mxu0 0.0
      %1934 = vmatpush1.xpose.msra.mxu0 %v1915
      %1935 = vmatprep.subr.mxu0 0.0
      %1936 = vmatpush1.xpose.msra.mxu0 %v1917
      %1937 = vmatprep.subr.mxu0 0.0
      %1938 = vmatpush1.xpose.msra.mxu0 %v1919
      %1939 = vmatprep.subr.mxu0 0.0
      %1940 = vmatpush1.xpose.msra.mxu0 %v1921
      %1941 = vmatprep.subr.mxu0 0.0
      %1942 = vmatpush1.xpose.msra.mxu0 0.0
      %1943 = vmatprep.subr.mxu0 0.0
      %1944 = vmatpush1.xpose.msra.mxu0 0.0
      %1945 = vmatprep.subr.mxu0 0.0
      %1946 = vmatpush1.xpose.msra.mxu0 0.0
      %1947 = vmatprep.subr.mxu0 0.0
      %1948 = vmatpush1.xpose.msra.mxu0 0.0
      %1949 = vmatprep.subr.mxu0 0.0
      %1950 = vmatpush1.xpose.msra.mxu0 0.0
      %1951 = vmatprep.subr.mxu0 0.0
      %1952 = vmatpush1.xpose.msra.mxu0 0.0
      %1953 = vmatprep.subr.mxu0 0.0
      %1954 = vmatpush1.xpose.msra.mxu0 0.0
      %1955 = vmatprep.subr.mxu0 0.0
      %1956 = vmatpush1.xpose.msra.mxu0 0.0
      %1957 = vmatprep.subr.mxu0 0.0
      %1958 = vmatpush1.xpose.msra.mxu0 0.0
      %1959 = vmatprep.subr.mxu0 0.0
      %1960 = vmatpush1.xpose.msra.mxu0 0.0
      %1961 = vmatprep.subr.mxu0 0.0
      %1962 = vmatpush1.xpose.msra.mxu0 0.0
      %1963 = vmatprep.subr.mxu0 0.0
      %1964 = vmatpush1.xpose.msra.mxu0 0.0
      %1965 = vmatprep.subr.mxu0 0.0
      %1966 = vmatpush1.xpose.msra.mxu0 0.0
      %1967 = vmatprep.subr.mxu0 0.0
      %1968 = vmatpush1.xpose.msra.mxu0 0.0
      %1969 = vmatprep.subr.mxu0 0.0
      %1970 = vmatpush1.xpose.msra.mxu0 0.0
      %1971 = vmatprep.subr.mxu0 0.0
      %1972 = vmatpush1.xpose.msra.mxu0 0.0
      %1973 = vmatprep.subr.mxu0 0.0
      %1974 = vmatpush1.xpose.msra.mxu0 0.0
      %1975 = vmatprep.subr.mxu0 0.0
      %1976 = vmatpush1.xpose.msra.mxu0 0.0
      %1977 = vmatprep.subr.mxu0 0.0
      %1978 = vmatpush1.xpose.msra.mxu0 0.0
      %1979 = vmatprep.subr.mxu0 0.0
      %1980 = vmatpush1.xpose.msra.mxu0 0.0
      %1981 = vmatprep.subr.mxu0 0.0
      %1982 = vmatpush1.xpose.msra.mxu0 0.0
      %1983 = vmatprep.subr.mxu0 0.0
      %1984 = vmatpush1.xpose.msra.mxu0 0.0
      %1985 = vmatprep.subr.mxu0 0.0
      %1986 = vmatpush1.xpose.msra.mxu0 0.0
      %1987 = vmatprep.mubr.f32.mxu0 0.0
      %1988 = vmatmul.mubr.f32.gmra.mrb[0].mxu0 %v911
      %v1989 = vpop.f32.mrb[0].mxu0
      %v1990 = vadd.f32 0.0, %v1989
      %v1991 = vpop.f32.mrb[0].mxu0
      %1992 = vmatprep.mubr.f32.mxu0 0.0
      %1993 = vmatmul.mubr.f32.gmra.mrb[0].mxu0 %v911
      %v1994 = vpop.f32.mrb[0].mxu0
      %v1995 = vadd.f32 0.0, %v1994
      %v1996 = vpop.f32.mrb[0].mxu0
      %1997 = vmatprep.mubr.f32.mxu0 0.0
      %1998 = vmatmul.mubr.f32.gmra.mrb[0].mxu0 %v911
      %v1999 = vpop.f32.mrb[0].mxu0
      %v2000 = vadd.f32 0.0, %v1999
      %v2001 = vpop.f32.mrb[0].mxu0
      %2002 = vmatprep.mubr.f32.mxu0 0.0
      %2003 = vmatmul.mubr.f32.gmra.mrb[0].mxu0 %v911
      %v2004 = vpop.f32.mrb[0].mxu0
      %v2005 = vadd.f32 0.0, %v2004
      %v2006 = vpop.f32.mrb[0].mxu0
      %2007 = vmatprep.mubr.f32.mxu0 0.0
      %2008 = vmatmul.mubr.f32.gmra.mrb[0].mxu0 %v911
      %v2009 = vpop.f32.mrb[0].mxu0
      %v2010 = vadd.f32 0.0, %v2009
      %v2011 = vpop.f32.mrb[0].mxu0
      %2012 = vmatprep.mubr.f32.mxu0 0.0
      %2013 = vmatmul.mubr.f32.gmra.mrb[0].mxu0 %v911
      %v2014 = vpop.f32.mrb[0].mxu0
      %v2015 = vadd.f32 0.0, %v2014
      %v2016 = vpop.f32.mrb[0].mxu0
      %2017 = vmatprep.mubr.f32.mxu0 0.0
      %2018 = vmatmul.mubr.f32.gmra.mrb[0].mxu0 %v911
      %v2019 = vpop.f32.mrb[0].mxu0
      %v2020 = vadd.f32 0.0, %v2019
      %v2021 = vpop.f32.mrb[0].mxu0
      %2022 = vmatprep.mubr.f32.mxu0 0.0
      %2023 = vmatmul.mubr.f32.gmra.mrb[0].mxu0 %v911
      %v2024 = vpop.f32.mrb[0].mxu0
      %v2025 = vadd.f32 0.0, %v2024
      %v2026 = vpop.f32.mrb[0].mxu0
      %2027 = vmatprep.mubr.f32.mxu0 0.0
      %2028 = vmatmul.mubr.f32.gmra.mrb[0].mxu0 %v911
      %v2029 = vpop.f32.mrb[0].mxu0
      %v2030 = vadd.f32 0.0, %v2029
      %v2031 = vpop.f32.mrb[0].mxu0
      %2032 = vdwg.mxu0
      %2033 = vrot.lane.b32.xlu0 %v858, 64
      %v2034 = vpop.permute.xlu0 %2033
      %2035 = vrot.lane.b32.xlu0 %v859, 64
      %v2036 = vpop.permute.xlu0 %2035
      %2037 = vrot.lane.b32.xlu0 %v860, 64
      %v2038 = vpop.permute.xlu0 %2037
      %2039 = vrot.lane.b32.xlu0 %v861, 64
      %v2040 = vpop.permute.xlu0 %2039
      %2041 = vrot.lane.b32.xlu0 %v862, 64
      %v2042 = vpop.permute.xlu0 %2041
      %v2044 = vsel %vm881, %v2034, 0
      %v2047 = vsel %vm881, %v2036, 0
      %v2050 = vsel %vm881, %v2038, 0
      %v2053 = vsel %vm881, %v2040, 0
      %v2056 = vsel %vm881, %v2042, 0
      %2058 = vmatprep.subr.bf16.mxu0 0
      %2059 = vmatpush1.bf16.xpose.msra.mxu0 %v2044
      %2060 = vmatprep.subr.bf16.mxu0 0
      %2061 = vmatpush1.bf16.xpose.msra.mxu0 %v2047
      %2062 = vmatprep.subr.bf16.mxu0 0
      %2063 = vmatpush1.bf16.xpose.msra.mxu0 %v2050
      %2064 = vmatprep.subr.bf16.mxu0 0
      %2065 = vmatpush1.bf16.xpose.msra.mxu0 %v2053
      %2066 = vmatprep.subr.bf16.mxu0 0
      %2067 = vmatpush1.bf16.xpose.msra.mxu0 %v2056
      %2068 = vmatprep.subr.bf16.mxu0 0
      %2069 = vmatpush1.bf16.xpose.msra.mxu0 0
      %2070 = vmatprep.subr.bf16.mxu0 0
      %2071 = vmatpush1.bf16.xpose.msra.mxu0 0
      %2072 = vmatprep.subr.bf16.mxu0 0
      %2073 = vmatpush1.bf16.xpose.msra.mxu0 0
      %2074 = vmatprep.subr.bf16.mxu0 0
      %2075 = vmatpush1.bf16.xpose.msra.mxu0 0
      %2076 = vmatprep.subr.bf16.mxu0 0
      %2077 = vmatpush1.bf16.xpose.msra.mxu0 0
      %2078 = vmatprep.subr.bf16.mxu0 0
      %2079 = vmatpush1.bf16.xpose.msra.mxu0 0
      %2080 = vmatprep.subr.bf16.mxu0 0
      %2081 = vmatpush1.bf16.xpose.msra.mxu0 0
      %2082 = vmatprep.subr.bf16.mxu0 0
      %2083 = vmatpush1.bf16.xpose.msra.mxu0 0
      %2084 = vmatprep.subr.bf16.mxu0 0
      %2085 = vmatpush1.bf16.xpose.msra.mxu0 0
      %2086 = vmatprep.subr.bf16.mxu0 0
      %2087 = vmatpush1.bf16.xpose.msra.mxu0 0
      %2088 = vmatprep.subr.bf16.mxu0 0
      %2089 = vmatpush1.bf16.xpose.msra.mxu0 0
      %2090 = vmatprep.mubr.bf16.mxu0 0
      %2091 = vmatmul.mubr.bf16.gmra.mrb[0].mxu0 %v2044
      %v2092 = vpop.f32.mrb[0].mxu0
      %v2093 = vadd.f32 0.0, %v2092
      %v2094 = vpop.f32.mrb[0].mxu0
      %v2095 = vpop.f32.mrb[0].mxu0
      %v2096 = vadd.f32 0.0, %v2095
      %v2097 = vpop.f32.mrb[0].mxu0
      %2098 = vmatprep.mubr.bf16.mxu0 0
      %2099 = vmatmul.mubr.bf16.gmra.mrb[0].mxu0 %v2047
      %v2100 = vpop.f32.mrb[0].mxu0
      %v2101 = vadd.f32 0.0, %v2100
      %v2102 = vpop.f32.mrb[0].mxu0
      %v2103 = vpop.f32.mrb[0].mxu0
      %v2104 = vadd.f32 0.0, %v2103
      %v2105 = vpop.f32.mrb[0].mxu0
      %2106 = vmatprep.mubr.bf16.mxu0 0
      %2107 = vmatmul.mubr.bf16.gmra.mrb[0].mxu0 %v2050
      %v2108 = vpop.f32.mrb[0].mxu0
      %v2109 = vadd.f32 0.0, %v2108
      %v2110 = vpop.f32.mrb[0].mxu0
      %v2111 = vpop.f32.mrb[0].mxu0
      %v2112 = vadd.f32 0.0, %v2111
      %v2113 = vpop.f32.mrb[0].mxu0
      %2114 = vmatprep.mubr.bf16.mxu0 0
      %2115 = vmatmul.mubr.bf16.gmra.mrb[0].mxu0 %v2053
      %v2116 = vpop.f32.mrb[0].mxu0
      %v2117 = vadd.f32 0.0, %v2116
      %v2118 = vpop.f32.mrb[0].mxu0
      %v2119 = vpop.f32.mrb[0].mxu0
      %v2120 = vadd.f32 0.0, %v2119
      %v2121 = vpop.f32.mrb[0].mxu0
      %2122 = vmatprep.mubr.bf16.mxu0 0
      %2123 = vmatmul.mubr.bf16.gmra.mrb[0].mxu0 %v2056
      %v2124 = vpop.f32.mrb[0].mxu0
      %v2125 = vadd.f32 0.0, %v2124
      %v2126 = vpop.f32.mrb[0].mxu0
      %v2127 = vpop.f32.mrb[0].mxu0
      %v2128 = vpop.f32.mrb[0].mxu0
      %2129 = vdwg.mxu0
      %v2130 = vmul.f32 %v1880, 0.5
      %v2131 = vmul.f32 %v1883, 0.5
      %v2132 = vmul.f32 %v1886, 0.5
      %v2133 = vmul.f32 %v1889, 0.5
      %v2134 = vmul.f32 %v1892, 0.5
      %v2135 = vmul.f32 %v1895, 0.5
      %v2136 = vmul.f32 %v1898, 0.5
      %v2137 = vmul.f32 %v1901, 0.5
      %v2138 = vmul.f32 %v1904, 0.5
      %v2139 = vsub.f32 %v2093, %v2130
      %v2140 = vsub.f32 %v2096, %v2131
      %v2141 = vsub.f32 %v2101, %v2132
      %v2142 = vsub.f32 %v2104, %v2133
      %v2143 = vsub.f32 %v2109, %v2134
      %v2144 = vsub.f32 %v2112, %v2135
      %v2145 = vsub.f32 %v2117, %v2136
      %v2146 = vsub.f32 %v2120, %v2137
      %v2147 = vsub.f32 %v2125, %v2138
      %v2148 = vmul.f32 %v1990, 0.5
      %v2149 = vmul.f32 %v1995, 0.5
      %v2150 = vmul.f32 %v2000, 0.5
      %v2151 = vmul.f32 %v2005, 0.5
      %v2152 = vmul.f32 %v2010, 0.5
      %v2153 = vmul.f32 %v2015, 0.5
      %v2154 = vmul.f32 %v2020, 0.5
      %v2155 = vmul.f32 %v2025, 0.5
      %v2156 = vmul.f32 %v2030, 0.5
      %v2157 = vsub.f32 %v2139, %v2148
      %v2158 = vsub.f32 %v2140, %v2149
      %v2159 = vsub.f32 %v2141, %v2150
      %v2160 = vsub.f32 %v2142, %v2151
      %v2161 = vsub.f32 %v2143, %v2152
      %v2162 = vsub.f32 %v2144, %v2153
      %v2163 = vsub.f32 %v2145, %v2154
      %v2164 = vsub.f32 %v2146, %v2155
      %v2165 = vsub.f32 %v2147, %v2156
      %v2166 = vmul.f32 %v2157, 1.442695
      %v2167 = vpow.pop %v2166
      %v2168 = vmul.f32 %v2158, 1.442695
      %v2169 = vpow.pop %v2168
      %v2170 = vmul.f32 %v2159, 1.442695
      %v2171 = vpow.pop %v2170
      %v2172 = vmul.f32 %v2160, 1.442695
      %v2173 = vpow.pop %v2172
      %v2174 = vmul.f32 %v2161, 1.442695
      %v2175 = vpow.pop %v2174
      %v2176 = vmul.f32 %v2162, 1.442695
      %v2177 = vpow.pop %v2176
      %v2178 = vmul.f32 %v2163, 1.442695
      %v2179 = vpow.pop %v2178
      %v2180 = vmul.f32 %v2164, 1.442695
      %v2181 = vpow.pop %v2180
      %v2182 = vmul.f32 %v2165, 1.442695
      %v2183 = vpow.pop %v2182
      %s2184 = scalar_lea.vmem %s6, 72
      %v2185 = vld [vmem:[%s2184] sm:$0xf]
      %v2186 = vld [vmem:[%s2184 + $0x4] sm:$0xf]
      %v2187 = vld [vmem:[%s2184 + $0x8] sm:$0xf]
      %v2188 = vld [vmem:[%s2184 + $0xc] sm:$0xf]
      %v2189 = vld [vmem:[%s2184 + $0x10] sm:$0xf]
      %v2190 = vld [vmem:[%s2184 + $0x14] sm:$0xf]
      %v2191 = vld [vmem:[%s2184 + $0x18] sm:$0xf]
      %v2192 = vld [vmem:[%s2184 + $0x1c] sm:$0xf]
      %v2193 = vld [vmem:[%s2184 + $0x20] sm:$0x1]
      %v2194 = vunpack.c.l.bf16 %v2185
      %v2195 = vunpack.c.l.bf16 %v2186
      %v2196 = vunpack.c.l.bf16 %v2187
      %v2197 = vunpack.c.l.bf16 %v2188
      %v2198 = vunpack.c.l.bf16 %v2189
      %v2199 = vunpack.c.l.bf16 %v2190
      %v2200 = vunpack.c.l.bf16 %v2191
      %v2201 = vunpack.c.l.bf16 %v2192
      %v2202 = vunpack.c.l.bf16 %v2193
      %v2203 = vadd.f32 %v2167, %v2194
      %v2204 = vadd.f32 %v2169, %v2195
      %v2205 = vadd.f32 %v2171, %v2196
      %v2206 = vadd.f32 %v2173, %v2197
      %v2207 = vadd.f32 %v2175, %v2198
      %v2208 = vadd.f32 %v2177, %v2199
      %v2209 = vadd.f32 %v2179, %v2200
      %v2210 = vadd.f32 %v2181, %v2201
      %v2211 = vadd.f32 %v2183, %v2202
      %v2212 = vpack.c.bf16 %v2204, %v2203
      %v2213 = vpack.c.bf16 %v2206, %v2205
      %v2214 = vpack.c.bf16 %v2208, %v2207
      %v2215 = vpack.c.bf16 %v2210, %v2209
      %v2216 = vpack.c.bf16 %v2211, %v2211
      %s2217 = scalar_lea.vmem %s293, 72
      %v2218 = vld [vmem:[%s2217] sm:$0xf]
      %v2219 = vld [vmem:[%s2217 + $0x4] sm:$0xf]
      %v2220 = vld [vmem:[%s2217 + $0x8] sm:$0xf]
      %v2221 = vld [vmem:[%s2217 + $0xc] sm:$0xf]
      %v2222 = vld [vmem:[%s2217 + $0x10] sm:$0xf]
      %v2223 = vld [vmem:[%s2217 + $0x14] sm:$0xf]
      %v2224 = vld [vmem:[%s2217 + $0x18] sm:$0xf]
      %v2225 = vld [vmem:[%s2217 + $0x1c] sm:$0xf]
      %v2226 = vld [vmem:[%s2217 + $0x20] sm:$0x1]
      %v2236 = vunpack.c.l.b16 %v2218
      %v2237 = vunpack.c.l.b16 %v2219
      %v2238 = vunpack.c.l.b16 %v2220
      %v2239 = vunpack.c.l.b16 %v2221
      %v2240 = vunpack.c.l.b16 %v2222
      %v2241 = vunpack.c.l.b16 %v2223
      %v2242 = vunpack.c.l.b16 %v2224
      %v2243 = vunpack.c.l.b16 %v2225
      %v2244 = vunpack.c.l.b16 %v2226
      %v2245 = vpack.c.b16 %v2237, %v2236
      %v2246 = vpack.c.b16 %v2239, %v2238
      %v2247 = vpack.c.b16 %v2241, %v2240
      %v2248 = vpack.c.b16 %v2243, %v2242
      %v2249 = vpack.c.b16 %v2244, %v2244
      %v2255 = vsel %vm1259, %v2212, 0
      %v2258 = vsel %vm1259, %v2213, 0
      %v2261 = vsel %vm1259, %v2214, 0
      %v2264 = vsel %vm1259, %v2215, 0
      %v2267 = vsel %vm1259, %v2216, 0
      %v2270 = vand.u32 %v2249, %v1277
      %2272 = vmatprep.subr.bf16.mxu0 0
      %2273 = vmatpush1.bf16.msra.mxu0 %v2245
      %2274 = vmatprep.subr.bf16.mxu0 0
      %2275 = vmatpush1.bf16.msra.mxu0 %v2246
      %2276 = vmatprep.subr.bf16.mxu0 0
      %2277 = vmatpush1.bf16.msra.mxu0 %v2247
      %2278 = vmatprep.subr.bf16.mxu0 0
      %2279 = vmatpush1.bf16.msra.mxu0 %v2248
      %2280 = vmatprep.subr.bf16.mxu0 0
      %2281 = vmatpush1.bf16.msra.mxu0 %v2270
      %2282 = vmatprep.subr.bf16.mxu0 0
      %2283 = vmatpush1.bf16.msra.mxu0 0
      %2284 = vmatprep.subr.bf16.mxu0 0
      %2285 = vmatpush1.bf16.msra.mxu0 0
      %2286 = vmatprep.subr.bf16.mxu0 0
      %2287 = vmatpush1.bf16.msra.mxu0 0
      %2288 = vmatprep.subr.bf16.mxu0 0
      %2289 = vmatpush1.bf16.msra.mxu0 0
      %2290 = vmatprep.subr.bf16.mxu0 0
      %2291 = vmatpush1.bf16.msra.mxu0 0
      %2292 = vmatprep.subr.bf16.mxu0 0
      %2293 = vmatpush1.bf16.msra.mxu0 0
      %2294 = vmatprep.subr.bf16.mxu0 0
      %2295 = vmatpush1.bf16.msra.mxu0 0
      %2296 = vmatprep.subr.bf16.mxu0 0
      %2297 = vmatpush1.bf16.msra.mxu0 0
      %2298 = vmatprep.subr.bf16.mxu0 0
      %2299 = vmatpush1.bf16.msra.mxu0 0
      %2300 = vmatprep.subr.bf16.mxu0 0
      %2301 = vmatpush1.bf16.msra.mxu0 0
      %2302 = vmatprep.subr.bf16.mxu0 0
      %2303 = vmatpush1.bf16.msra.mxu0 0
      %2304 = vmatprep.mubr.bf16.mxu0 0
      %2305 = vmatmul.mubr.bf16.gmra.mrb[0].mxu0 %v2255
      %v2306 = vpop.f32.mrb[0].mxu0
      %v2307 = vadd.f32 0.0, %v2306
      %v2308 = vpop.f32.mrb[0].mxu0
      %v2309 = vpop.f32.mrb[0].mxu0
      %v2310 = vadd.f32 0.0, %v2309
      %v2311 = vpop.f32.mrb[0].mxu0
      %2312 = vmatprep.mubr.bf16.mxu0 0
      %2313 = vmatmul.mubr.bf16.gmra.mrb[0].mxu0 %v2258
      %v2314 = vpop.f32.mrb[0].mxu0
      %v2315 = vadd.f32 0.0, %v2314
      %v2316 = vpop.f32.mrb[0].mxu0
      %v2317 = vpop.f32.mrb[0].mxu0
      %v2318 = vadd.f32 0.0, %v2317
      %v2319 = vpop.f32.mrb[0].mxu0
      %2320 = vmatprep.mubr.bf16.mxu0 0
      %2321 = vmatmul.mubr.bf16.gmra.mrb[0].mxu0 %v2261
      %v2322 = vpop.f32.mrb[0].mxu0
      %v2323 = vadd.f32 0.0, %v2322
      %v2324 = vpop.f32.mrb[0].mxu0
      %v2325 = vpop.f32.mrb[0].mxu0
      %v2326 = vadd.f32 0.0, %v2325
      %v2327 = vpop.f32.mrb[0].mxu0
      %2328 = vmatprep.mubr.bf16.mxu0 0
      %2329 = vmatmul.mubr.bf16.gmra.mrb[0].mxu0 %v2264
      %v2330 = vpop.f32.mrb[0].mxu0
      %v2331 = vadd.f32 0.0, %v2330
      %v2332 = vpop.f32.mrb[0].mxu0
      %v2333 = vpop.f32.mrb[0].mxu0
      %v2334 = vadd.f32 0.0, %v2333
      %v2335 = vpop.f32.mrb[0].mxu0
      %2336 = vmatprep.mubr.bf16.mxu0 0
      %2337 = vmatmul.mubr.bf16.gmra.mrb[0].mxu0 %v2267
      %v2338 = vpop.f32.mrb[0].mxu0
      %v2339 = vadd.f32 0.0, %v2338
      %v2340 = vpop.f32.mrb[0].mxu0
      %v2341 = vpop.f32.mrb[0].mxu0
      %v2342 = vpop.f32.mrb[0].mxu0
      %2343 = vdwg.mxu0
      %2344 = vrot.lane.b32.xlu0 %v872, 32
      %v2345 = vpop.permute.xlu0 %2344
      %2346 = vrot.lane.b32.xlu0 %v873, 32
      %v2347 = vpop.permute.xlu0 %2346
      %2348 = vrot.lane.b32.xlu0 %v874, 32
      %v2349 = vpop.permute.xlu0 %2348
      %2350 = vrot.lane.b32.xlu0 %v875, 32
      %v2351 = vpop.permute.xlu0 %2350
      %2352 = vrot.lane.b32.xlu0 %v876, 32
      %v2353 = vpop.permute.xlu0 %2352
      %2354 = vrot.lane.b32.xlu0 %v877, 32
      %v2355 = vpop.permute.xlu0 %2354
      %2356 = vrot.lane.b32.xlu0 %v878, 32
      %v2357 = vpop.permute.xlu0 %2356
      %2358 = vrot.lane.b32.xlu0 %v879, 32
      %v2359 = vpop.permute.xlu0 %2358
      %2360 = vrot.lane.b32.xlu0 %v880, 32
      %v2361 = vpop.permute.xlu0 %2360
      %v2371 = vsel %vm881, %v2345, 0.0
      %2372 = vadd.xlane.f32.xlu0 %v2371
      %v2373 = vpop.xlane.xlu0 %2372
      %v2374 = vsel %vm881, %v2347, 0.0
      %2375 = vadd.xlane.f32.xlu0 %v2374
      %v2376 = vpop.xlane.xlu0 %2375
      %v2377 = vsel %vm881, %v2349, 0.0
      %2378 = vadd.xlane.f32.xlu0 %v2377
      %v2379 = vpop.xlane.xlu0 %2378
      %v2380 = vsel %vm881, %v2351, 0.0
      %2381 = vadd.xlane.f32.xlu0 %v2380
      %v2382 = vpop.xlane.xlu0 %2381
      %v2383 = vsel %vm881, %v2353, 0.0
      %2384 = vadd.xlane.f32.xlu0 %v2383
      %v2385 = vpop.xlane.xlu0 %2384
      %v2386 = vsel %vm881, %v2355, 0.0
      %2387 = vadd.xlane.f32.xlu0 %v2386
      %v2388 = vpop.xlane.xlu0 %2387
      %v2389 = vsel %vm881, %v2357, 0.0
      %2390 = vadd.xlane.f32.xlu0 %v2389
      %v2391 = vpop.xlane.xlu0 %2390
      %v2392 = vsel %vm881, %v2359, 0.0
      %2393 = vadd.xlane.f32.xlu0 %v2392
      %v2394 = vpop.xlane.xlu0 %2393
      %v2395 = vsel %vm906, %v2361, 0.0
      %2396 = vadd.xlane.f32.xlu0 %v2395
      %v2397 = vpop.xlane.xlu0 %2396
      %v2398 = vsel %vm881, %v2345, 0
      %v2400 = vsel %vm881, %v2347, 0
      %v2402 = vsel %vm881, %v2349, 0
      %v2404 = vsel %vm881, %v2351, 0
      %v2406 = vsel %vm881, %v2353, 0
      %v2408 = vsel %vm881, %v2355, 0
      %v2410 = vsel %vm881, %v2357, 0
      %v2412 = vsel %vm881, %v2359, 0
      %v2414 = vsel %vm881, %v2361, 0
      %2416 = vmatprep.subr.mxu0 0.0
      %2417 = vmatpush1.xpose.msra.mxu0 %v2398
      %2418 = vmatprep.subr.mxu0 0.0
      %2419 = vmatpush1.xpose.msra.mxu0 %v2400
      %2420 = vmatprep.subr.mxu0 0.0
      %2421 = vmatpush1.xpose.msra.mxu0 %v2402
      %2422 = vmatprep.subr.mxu0 0.0
      %2423 = vmatpush1.xpose.msra.mxu0 %v2404
      %2424 = vmatprep.subr.mxu0 0.0
      %2425 = vmatpush1.xpose.msra.mxu0 %v2406
      %2426 = vmatprep.subr.mxu0 0.0
      %2427 = vmatpush1.xpose.msra.mxu0 %v2408
      %2428 = vmatprep.subr.mxu0 0.0
      %2429 = vmatpush1.xpose.msra.mxu0 %v2410
      %2430 = vmatprep.subr.mxu0 0.0
      %2431 = vmatpush1.xpose.msra.mxu0 %v2412
      %2432 = vmatprep.subr.mxu0 0.0
      %2433 = vmatpush1.xpose.msra.mxu0 %v2414
      %2434 = vmatprep.subr.mxu0 0.0
      %2435 = vmatpush1.xpose.msra.mxu0 0.0
      %2436 = vmatprep.subr.mxu0 0.0
      %2437 = vmatpush1.xpose.msra.mxu0 0.0
      %2438 = vmatprep.subr.mxu0 0.0
      %2439 = vmatpush1.xpose.msra.mxu0 0.0
      %2440 = vmatprep.subr.mxu0 0.0
      %2441 = vmatpush1.xpose.msra.mxu0 0.0
      %2442 = vmatprep.subr.mxu0 0.0
      %2443 = vmatpush1.xpose.msra.mxu0 0.0
      %2444 = vmatprep.subr.mxu0 0.0
      %2445 = vmatpush1.xpose.msra.mxu0 0.0
      %2446 = vmatprep.subr.mxu0 0.0
      %2447 = vmatpush1.xpose.msra.mxu0 0.0
      %2448 = vmatprep.subr.mxu0 0.0
      %2449 = vmatpush1.xpose.msra.mxu0 0.0
      %2450 = vmatprep.subr.mxu0 0.0
      %2451 = vmatpush1.xpose.msra.mxu0 0.0
      %2452 = vmatprep.subr.mxu0 0.0
      %2453 = vmatpush1.xpose.msra.mxu0 0.0
      %2454 = vmatprep.subr.mxu0 0.0
      %2455 = vmatpush1.xpose.msra.mxu0 0.0
      %2456 = vmatprep.subr.mxu0 0.0
      %2457 = vmatpush1.xpose.msra.mxu0 0.0
      %2458 = vmatprep.subr.mxu0 0.0
      %2459 = vmatpush1.xpose.msra.mxu0 0.0
      %2460 = vmatprep.subr.mxu0 0.0
      %2461 = vmatpush1.xpose.msra.mxu0 0.0
      %2462 = vmatprep.subr.mxu0 0.0
      %2463 = vmatpush1.xpose.msra.mxu0 0.0
      %2464 = vmatprep.subr.mxu0 0.0
      %2465 = vmatpush1.xpose.msra.mxu0 0.0
      %2466 = vmatprep.subr.mxu0 0.0
      %2467 = vmatpush1.xpose.msra.mxu0 0.0
      %2468 = vmatprep.subr.mxu0 0.0
      %2469 = vmatpush1.xpose.msra.mxu0 0.0
      %2470 = vmatprep.subr.mxu0 0.0
      %2471 = vmatpush1.xpose.msra.mxu0 0.0
      %2472 = vmatprep.subr.mxu0 0.0
      %2473 = vmatpush1.xpose.msra.mxu0 0.0
      %2474 = vmatprep.subr.mxu0 0.0
      %2475 = vmatpush1.xpose.msra.mxu0 0.0
      %2476 = vmatprep.subr.mxu0 0.0
      %2477 = vmatpush1.xpose.msra.mxu0 0.0
      %2478 = vmatprep.subr.mxu0 0.0
      %2479 = vmatpush1.xpose.msra.mxu0 0.0
      %2480 = vmatprep.mubr.f32.mxu0 0.0
      %2481 = vmatmul.mubr.f32.gmra.mrb[0].mxu0 %v911
      %v2482 = vpop.f32.mrb[0].mxu0
      %v2483 = vadd.f32 0.0, %v2482
      %v2484 = vpop.f32.mrb[0].mxu0
      %2485 = vmatprep.mubr.f32.mxu0 0.0
      %2486 = vmatmul.mubr.f32.gmra.mrb[0].mxu0 %v911
      %v2487 = vpop.f32.mrb[0].mxu0
      %v2488 = vadd.f32 0.0, %v2487
      %v2489 = vpop.f32.mrb[0].mxu0
      %2490 = vmatprep.mubr.f32.mxu0 0.0
      %2491 = vmatmul.mubr.f32.gmra.mrb[0].mxu0 %v911
      %v2492 = vpop.f32.mrb[0].mxu0
      %v2493 = vadd.f32 0.0, %v2492
      %v2494 = vpop.f32.mrb[0].mxu0
      %2495 = vmatprep.mubr.f32.mxu0 0.0
      %2496 = vmatmul.mubr.f32.gmra.mrb[0].mxu0 %v911
      %v2497 = vpop.f32.mrb[0].mxu0
      %v2498 = vadd.f32 0.0, %v2497
      %v2499 = vpop.f32.mrb[0].mxu0
      %2500 = vmatprep.mubr.f32.mxu0 0.0
      %2501 = vmatmul.mubr.f32.gmra.mrb[0].mxu0 %v911
      %v2502 = vpop.f32.mrb[0].mxu0
      %v2503 = vadd.f32 0.0, %v2502
      %v2504 = vpop.f32.mrb[0].mxu0
      %2505 = vmatprep.mubr.f32.mxu0 0.0
      %2506 = vmatmul.mubr.f32.gmra.mrb[0].mxu0 %v911
      %v2507 = vpop.f32.mrb[0].mxu0
      %v2508 = vadd.f32 0.0, %v2507
      %v2509 = vpop.f32.mrb[0].mxu0
      %2510 = vmatprep.mubr.f32.mxu0 0.0
      %2511 = vmatmul.mubr.f32.gmra.mrb[0].mxu0 %v911
      %v2512 = vpop.f32.mrb[0].mxu0
      %v2513 = vadd.f32 0.0, %v2512
      %v2514 = vpop.f32.mrb[0].mxu0
      %2515 = vmatprep.mubr.f32.mxu0 0.0
      %2516 = vmatmul.mubr.f32.gmra.mrb[0].mxu0 %v911
      %v2517 = vpop.f32.mrb[0].mxu0
      %v2518 = vadd.f32 0.0, %v2517
      %v2519 = vpop.f32.mrb[0].mxu0
      %2520 = vmatprep.mubr.f32.mxu0 0.0
      %2521 = vmatmul.mubr.f32.gmra.mrb[0].mxu0 %v911
      %v2522 = vpop.f32.mrb[0].mxu0
      %v2523 = vadd.f32 0.0, %v2522
      %v2524 = vpop.f32.mrb[0].mxu0
      %2525 = vdwg.mxu0
      %2526 = vrot.lane.b32.xlu0 %v858, 32
      %v2527 = vpop.permute.xlu0 %2526
      %2528 = vrot.lane.b32.xlu0 %v859, 32
      %v2529 = vpop.permute.xlu0 %2528
      %2530 = vrot.lane.b32.xlu0 %v860, 32
      %v2531 = vpop.permute.xlu0 %2530
      %2532 = vrot.lane.b32.xlu0 %v861, 32
      %v2533 = vpop.permute.xlu0 %2532
      %2534 = vrot.lane.b32.xlu0 %v862, 32
      %v2535 = vpop.permute.xlu0 %2534
      %v2537 = vsel %vm881, %v2527, 0
      %v2540 = vsel %vm881, %v2529, 0
      %v2543 = vsel %vm881, %v2531, 0
      %v2546 = vsel %vm881, %v2533, 0
      %v2549 = vsel %vm881, %v2535, 0
      %2551 = vmatprep.subr.bf16.mxu0 0
      %2552 = vmatpush1.bf16.xpose.msra.mxu0 %v2537
      %2553 = vmatprep.subr.bf16.mxu0 0
      %2554 = vmatpush1.bf16.xpose.msra.mxu0 %v2540
      %2555 = vmatprep.subr.bf16.mxu0 0
      %2556 = vmatpush1.bf16.xpose.msra.mxu0 %v2543
      %2557 = vmatprep.subr.bf16.mxu0 0
      %2558 = vmatpush1.bf16.xpose.msra.mxu0 %v2546
      %2559 = vmatprep.subr.bf16.mxu0 0
      %2560 = vmatpush1.bf16.xpose.msra.mxu0 %v2549
      %2561 = vmatprep.subr.bf16.mxu0 0
      %2562 = vmatpush1.bf16.xpose.msra.mxu0 0
      %2563 = vmatprep.subr.bf16.mxu0 0
      %2564 = vmatpush1.bf16.xpose.msra.mxu0 0
      %2565 = vmatprep.subr.bf16.mxu0 0
      %2566 = vmatpush1.bf16.xpose.msra.mxu0 0
      %2567 = vmatprep.subr.bf16.mxu0 0
      %2568 = vmatpush1.bf16.xpose.msra.mxu0 0
      %2569 = vmatprep.subr.bf16.mxu0 0
      %2570 = vmatpush1.bf16.xpose.msra.mxu0 0
      %2571 = vmatprep.subr.bf16.mxu0 0
      %2572 = vmatpush1.bf16.xpose.msra.mxu0 0
      %2573 = vmatprep.subr.bf16.mxu0 0
      %2574 = vmatpush1.bf16.xpose.msra.mxu0 0
      %2575 = vmatprep.subr.bf16.mxu0 0
      %2576 = vmatpush1.bf16.xpose.msra.mxu0 0
      %2577 = vmatprep.subr.bf16.mxu0 0
      %2578 = vmatpush1.bf16.xpose.msra.mxu0 0
      %2579 = vmatprep.subr.bf16.mxu0 0
      %2580 = vmatpush1.bf16.xpose.msra.mxu0 0
      %2581 = vmatprep.subr.bf16.mxu0 0
      %2582 = vmatpush1.bf16.xpose.msra.mxu0 0
      %2583 = vmatprep.mubr.bf16.mxu0 0
      %2584 = vmatmul.mubr.bf16.gmra.mrb[0].mxu0 %v2537
      %v2585 = vpop.f32.mrb[0].mxu0
      %v2586 = vadd.f32 0.0, %v2585
      %v2587 = vpop.f32.mrb[0].mxu0
      %v2588 = vpop.f32.mrb[0].mxu0
      %v2589 = vadd.f32 0.0, %v2588
      %v2590 = vpop.f32.mrb[0].mxu0
      %2591 = vmatprep.mubr.bf16.mxu0 0
      %2592 = vmatmul.mubr.bf16.gmra.mrb[0].mxu0 %v2540
      %v2593 = vpop.f32.mrb[0].mxu0
      %v2594 = vadd.f32 0.0, %v2593
      %v2595 = vpop.f32.mrb[0].mxu0
      %v2596 = vpop.f32.mrb[0].mxu0
      %v2597 = vadd.f32 0.0, %v2596
      %v2598 = vpop.f32.mrb[0].mxu0
      %2599 = vmatprep.mubr.bf16.mxu0 0
      %2600 = vmatmul.mubr.bf16.gmra.mrb[0].mxu0 %v2543
      %v2601 = vpop.f32.mrb[0].mxu0
      %v2602 = vadd.f32 0.0, %v2601
      %v2603 = vpop.f32.mrb[0].mxu0
      %v2604 = vpop.f32.mrb[0].mxu0
      %v2605 = vadd.f32 0.0, %v2604
      %v2606 = vpop.f32.mrb[0].mxu0
      %2607 = vmatprep.mubr.bf16.mxu0 0
      %2608 = vmatmul.mubr.bf16.gmra.mrb[0].mxu0 %v2546
      %v2609 = vpop.f32.mrb[0].mxu0
      %v2610 = vadd.f32 0.0, %v2609
      %v2611 = vpop.f32.mrb[0].mxu0
      %v2612 = vpop.f32.mrb[0].mxu0
      %v2613 = vadd.f32 0.0, %v2612
      %v2614 = vpop.f32.mrb[0].mxu0
      %2615 = vmatprep.mubr.bf16.mxu0 0
      %2616 = vmatmul.mubr.bf16.gmra.mrb[0].mxu0 %v2549
      %v2617 = vpop.f32.mrb[0].mxu0
      %v2618 = vadd.f32 0.0, %v2617
      %v2619 = vpop.f32.mrb[0].mxu0
      %v2620 = vpop.f32.mrb[0].mxu0
      %v2621 = vpop.f32.mrb[0].mxu0
      %2622 = vdwg.mxu0
      %v2623 = vmul.f32 %v2373, 0.5
      %v2624 = vmul.f32 %v2376, 0.5
      %v2625 = vmul.f32 %v2379, 0.5
      %v2626 = vmul.f32 %v2382, 0.5
      %v2627 = vmul.f32 %v2385, 0.5
      %v2628 = vmul.f32 %v2388, 0.5
      %v2629 = vmul.f32 %v2391, 0.5
      %v2630 = vmul.f32 %v2394, 0.5
      %v2631 = vmul.f32 %v2397, 0.5
      %v2632 = vsub.f32 %v2586, %v2623
      %v2633 = vsub.f32 %v2589, %v2624
      %v2634 = vsub.f32 %v2594, %v2625
      %v2635 = vsub.f32 %v2597, %v2626
      %v2636 = vsub.f32 %v2602, %v2627
      %v2637 = vsub.f32 %v2605, %v2628
      %v2638 = vsub.f32 %v2610, %v2629
      %v2639 = vsub.f32 %v2613, %v2630
      %v2640 = vsub.f32 %v2618, %v2631
      %v2641 = vmul.f32 %v2483, 0.5
      %v2642 = vmul.f32 %v2488, 0.5
      %v2643 = vmul.f32 %v2493, 0.5
      %v2644 = vmul.f32 %v2498, 0.5
      %v2645 = vmul.f32 %v2503, 0.5
      %v2646 = vmul.f32 %v2508, 0.5
      %v2647 = vmul.f32 %v2513, 0.5
      %v2648 = vmul.f32 %v2518, 0.5
      %v2649 = vmul.f32 %v2523, 0.5
      %v2650 = vsub.f32 %v2632, %v2641
      %v2651 = vsub.f32 %v2633, %v2642
      %v2652 = vsub.f32 %v2634, %v2643
      %v2653 = vsub.f32 %v2635, %v2644
      %v2654 = vsub.f32 %v2636, %v2645
      %v2655 = vsub.f32 %v2637, %v2646
      %v2656 = vsub.f32 %v2638, %v2647
      %v2657 = vsub.f32 %v2639, %v2648
      %v2658 = vsub.f32 %v2640, %v2649
      %v2659 = vmul.f32 %v2650, 1.442695
      %v2660 = vpow.pop %v2659
      %v2661 = vmul.f32 %v2651, 1.442695
      %v2662 = vpow.pop %v2661
      %v2663 = vmul.f32 %v2652, 1.442695
      %v2664 = vpow.pop %v2663
      %v2665 = vmul.f32 %v2653, 1.442695
      %v2666 = vpow.pop %v2665
      %v2667 = vmul.f32 %v2654, 1.442695
      %v2668 = vpow.pop %v2667
      %v2669 = vmul.f32 %v2655, 1.442695
      %v2670 = vpow.pop %v2669
      %v2671 = vmul.f32 %v2656, 1.442695
      %v2672 = vpow.pop %v2671
      %v2673 = vmul.f32 %v2657, 1.442695
      %v2674 = vpow.pop %v2673
      %v2675 = vmul.f32 %v2658, 1.442695
      %v2676 = vpow.pop %v2675
      %s2677 = scalar_lea.vmem %s6, 108
      %v2678 = vld [vmem:[%s2677] sm:$0xf]
      %v2679 = vld [vmem:[%s2677 + $0x4] sm:$0xf]
      %v2680 = vld [vmem:[%s2677 + $0x8] sm:$0xf]
      %v2681 = vld [vmem:[%s2677 + $0xc] sm:$0xf]
      %v2682 = vld [vmem:[%s2677 + $0x10] sm:$0xf]
      %v2683 = vld [vmem:[%s2677 + $0x14] sm:$0xf]
      %v2684 = vld [vmem:[%s2677 + $0x18] sm:$0xf]
      %v2685 = vld [vmem:[%s2677 + $0x1c] sm:$0xf]
      %v2686 = vld [vmem:[%s2677 + $0x20] sm:$0x1]
      %v2687 = vunpack.c.l.bf16 %v2678
      %v2688 = vunpack.c.l.bf16 %v2679
      %v2689 = vunpack.c.l.bf16 %v2680
      %v2690 = vunpack.c.l.bf16 %v2681
      %v2691 = vunpack.c.l.bf16 %v2682
      %v2692 = vunpack.c.l.bf16 %v2683
      %v2693 = vunpack.c.l.bf16 %v2684
      %v2694 = vunpack.c.l.bf16 %v2685
      %v2695 = vunpack.c.l.bf16 %v2686
      %v2696 = vadd.f32 %v2660, %v2687
      %v2697 = vadd.f32 %v2662, %v2688
      %v2698 = vadd.f32 %v2664, %v2689
      %v2699 = vadd.f32 %v2666, %v2690
      %v2700 = vadd.f32 %v2668, %v2691
      %v2701 = vadd.f32 %v2670, %v2692
      %v2702 = vadd.f32 %v2672, %v2693
      %v2703 = vadd.f32 %v2674, %v2694
      %v2704 = vadd.f32 %v2676, %v2695
      %v2705 = vpack.c.bf16 %v2697, %v2696
      %v2706 = vpack.c.bf16 %v2699, %v2698
      %v2707 = vpack.c.bf16 %v2701, %v2700
      %v2708 = vpack.c.bf16 %v2703, %v2702
      %v2709 = vpack.c.bf16 %v2704, %v2704
      %s2710 = scalar_lea.vmem %s293, 108
      %v2711 = vld [vmem:[%s2710] sm:$0xf]
      %v2712 = vld [vmem:[%s2710 + $0x4] sm:$0xf]
      %v2713 = vld [vmem:[%s2710 + $0x8] sm:$0xf]
      %v2714 = vld [vmem:[%s2710 + $0xc] sm:$0xf]
      %v2715 = vld [vmem:[%s2710 + $0x10] sm:$0xf]
      %v2716 = vld [vmem:[%s2710 + $0x14] sm:$0xf]
      %v2717 = vld [vmem:[%s2710 + $0x18] sm:$0xf]
      %v2718 = vld [vmem:[%s2710 + $0x1c] sm:$0xf]
      %v2719 = vld [vmem:[%s2710 + $0x20] sm:$0x1]
      %v2729 = vunpack.c.l.b16 %v2711
      %v2730 = vunpack.c.l.b16 %v2712
      %v2731 = vunpack.c.l.b16 %v2713
      %v2732 = vunpack.c.l.b16 %v2714
      %v2733 = vunpack.c.l.b16 %v2715
      %v2734 = vunpack.c.l.b16 %v2716
      %v2735 = vunpack.c.l.b16 %v2717
      %v2736 = vunpack.c.l.b16 %v2718
      %v2737 = vunpack.c.l.b16 %v2719
      %v2738 = vpack.c.b16 %v2730, %v2729
      %v2739 = vpack.c.b16 %v2732, %v2731
      %v2740 = vpack.c.b16 %v2734, %v2733
      %v2741 = vpack.c.b16 %v2736, %v2735
      %v2742 = vpack.c.b16 %v2737, %v2737
      %v2748 = vsel %vm1259, %v2705, 0
      %v2751 = vsel %vm1259, %v2706, 0
      %v2754 = vsel %vm1259, %v2707, 0
      %v2757 = vsel %vm1259, %v2708, 0
      %v2760 = vsel %vm1259, %v2709, 0
      %v2763 = vand.u32 %v2742, %v1277
      %2765 = vmatprep.subr.bf16.mxu0 0
      %2766 = vmatpush1.bf16.msra.mxu0 %v2738
      %2767 = vmatprep.subr.bf16.mxu0 0
      %2768 = vmatpush1.bf16.msra.mxu0 %v2739
      %2769 = vmatprep.subr.bf16.mxu0 0
      %2770 = vmatpush1.bf16.msra.mxu0 %v2740
      %2771 = vmatprep.subr.bf16.mxu0 0
      %2772 = vmatpush1.bf16.msra.mxu0 %v2741
      %2773 = vmatprep.subr.bf16.mxu0 0
      %2774 = vmatpush1.bf16.msra.mxu0 %v2763
      %2775 = vmatprep.subr.bf16.mxu0 0
      %2776 = vmatpush1.bf16.msra.mxu0 0
      %2777 = vmatprep.subr.bf16.mxu0 0
      %2778 = vmatpush1.bf16.msra.mxu0 0
      %2779 = vmatprep.subr.bf16.mxu0 0
      %2780 = vmatpush1.bf16.msra.mxu0 0
      %2781 = vmatprep.subr.bf16.mxu0 0
      %2782 = vmatpush1.bf16.msra.mxu0 0
      %2783 = vmatprep.subr.bf16.mxu0 0
      %2784 = vmatpush1.bf16.msra.mxu0 0
      %2785 = vmatprep.subr.bf16.mxu0 0
      %2786 = vmatpush1.bf16.msra.mxu0 0
      %2787 = vmatprep.subr.bf16.mxu0 0
      %2788 = vmatpush1.bf16.msra.mxu0 0
      %2789 = vmatprep.subr.bf16.mxu0 0
      %2790 = vmatpush1.bf16.msra.mxu0 0
      %2791 = vmatprep.subr.bf16.mxu0 0
      %2792 = vmatpush1.bf16.msra.mxu0 0
      %2793 = vmatprep.subr.bf16.mxu0 0
      %2794 = vmatpush1.bf16.msra.mxu0 0
      %2795 = vmatprep.subr.bf16.mxu0 0
      %2796 = vmatpush1.bf16.msra.mxu0 0
      %2797 = vmatprep.mubr.bf16.mxu0 0
      %2798 = vmatmul.mubr.bf16.gmra.mrb[0].mxu0 %v2748
      %v2799 = vpop.f32.mrb[0].mxu0
      %v2800 = vadd.f32 0.0, %v2799
      %v2801 = vpop.f32.mrb[0].mxu0
      %v2802 = vpop.f32.mrb[0].mxu0
      %v2803 = vadd.f32 0.0, %v2802
      %v2804 = vpop.f32.mrb[0].mxu0
      %2805 = vmatprep.mubr.bf16.mxu0 0
      %2806 = vmatmul.mubr.bf16.gmra.mrb[0].mxu0 %v2751
      %v2807 = vpop.f32.mrb[0].mxu0
      %v2808 = vadd.f32 0.0, %v2807
      %v2809 = vpop.f32.mrb[0].mxu0
      %v2810 = vpop.f32.mrb[0].mxu0
      %v2811 = vadd.f32 0.0, %v2810
      %v2812 = vpop.f32.mrb[0].mxu0
      %2813 = vmatprep.mubr.bf16.mxu0 0
      %2814 = vmatmul.mubr.bf16.gmra.mrb[0].mxu0 %v2754
      %v2815 = vpop.f32.mrb[0].mxu0
      %v2816 = vadd.f32 0.0, %v2815
      %v2817 = vpop.f32.mrb[0].mxu0
      %v2818 = vpop.f32.mrb[0].mxu0
      %v2819 = vadd.f32 0.0, %v2818
      %v2820 = vpop.f32.mrb[0].mxu0
      %2821 = vmatprep.mubr.bf16.mxu0 0
      %2822 = vmatmul.mubr.bf16.gmra.mrb[0].mxu0 %v2757
      %v2823 = vpop.f32.mrb[0].mxu0
      %v2824 = vadd.f32 0.0, %v2823
      %v2825 = vpop.f32.mrb[0].mxu0
      %v2826 = vpop.f32.mrb[0].mxu0
      %v2827 = vadd.f32 0.0, %v2826
      %v2828 = vpop.f32.mrb[0].mxu0
      %2829 = vmatprep.mubr.bf16.mxu0 0
      %2830 = vmatmul.mubr.bf16.gmra.mrb[0].mxu0 %v2760
      %v2831 = vpop.f32.mrb[0].mxu0
      %v2832 = vadd.f32 0.0, %v2831
      %v2833 = vpop.f32.mrb[0].mxu0
      %v2834 = vpop.f32.mrb[0].mxu0
      %v2835 = vpop.f32.mrb[0].mxu0
      %2836 = vdwg.mxu0
      %2846 = vrot.lane.b32.xlu0 %v1814, 32
      %v2847 = vpop.permute.xlu0 %2846
      %2848 = vrot.lane.b32.xlu0 %v1817, 32
      %v2849 = vpop.permute.xlu0 %2848
      %2850 = vrot.lane.b32.xlu0 %v1822, 32
      %v2851 = vpop.permute.xlu0 %2850
      %2852 = vrot.lane.b32.xlu0 %v1825, 32
      %v2853 = vpop.permute.xlu0 %2852
      %2854 = vrot.lane.b32.xlu0 %v1830, 32
      %v2855 = vpop.permute.xlu0 %2854
      %2856 = vrot.lane.b32.xlu0 %v1833, 32
      %v2857 = vpop.permute.xlu0 %2856
      %2858 = vrot.lane.b32.xlu0 %v1838, 32
      %v2859 = vpop.permute.xlu0 %2858
      %2860 = vrot.lane.b32.xlu0 %v1841, 32
      %v2861 = vpop.permute.xlu0 %2860
      %2862 = vrot.lane.b32.xlu0 %v1846, 32
      %v2863 = vpop.permute.xlu0 %2862
      %2882 = vrot.lane.b32.xlu0 %v2307, 64
      %v2883 = vpop.permute.xlu0 %2882
      %2884 = vrot.lane.b32.xlu0 %v2310, 64
      %v2885 = vpop.permute.xlu0 %2884
      %2886 = vrot.lane.b32.xlu0 %v2315, 64
      %v2887 = vpop.permute.xlu0 %2886
      %2888 = vrot.lane.b32.xlu0 %v2318, 64
      %v2889 = vpop.permute.xlu0 %2888
      %2890 = vrot.lane.b32.xlu0 %v2323, 64
      %v2891 = vpop.permute.xlu0 %2890
      %2892 = vrot.lane.b32.xlu0 %v2326, 64
      %v2893 = vpop.permute.xlu0 %2892
      %2894 = vrot.lane.b32.xlu0 %v2331, 64
      %v2895 = vpop.permute.xlu0 %2894
      %2896 = vrot.lane.b32.xlu0 %v2334, 64
      %v2897 = vpop.permute.xlu0 %2896
      %2898 = vrot.lane.b32.xlu0 %v2339, 64
      %v2899 = vpop.permute.xlu0 %2898
      %2918 = vrot.lane.b32.xlu0 %v2800, 96
      %v2919 = vpop.permute.xlu0 %2918
      %2920 = vrot.lane.b32.xlu0 %v2803, 96
      %v2921 = vpop.permute.xlu0 %2920
      %2922 = vrot.lane.b32.xlu0 %v2808, 96
      %v2923 = vpop.permute.xlu0 %2922
      %2924 = vrot.lane.b32.xlu0 %v2811, 96
      %v2925 = vpop.permute.xlu0 %2924
      %2926 = vrot.lane.b32.xlu0 %v2816, 96
      %v2927 = vpop.permute.xlu0 %2926
      %2928 = vrot.lane.b32.xlu0 %v2819, 96
      %v2929 = vpop.permute.xlu0 %2928
      %2930 = vrot.lane.b32.xlu0 %v2824, 96
      %v2931 = vpop.permute.xlu0 %2930
      %2932 = vrot.lane.b32.xlu0 %v2827, 96
      %v2933 = vpop.permute.xlu0 %2932
      %2934 = vrot.lane.b32.xlu0 %v2832, 96
      %v2935 = vpop.permute.xlu0 %2934
      %v2945 = vsel %vm881, %v1316, %v2847
      %v2946 = vsel %vm881, %v1319, %v2849
      %v2947 = vsel %vm881, %v1324, %v2851
      %v2948 = vsel %vm881, %v1327, %v2853
      %v2949 = vsel %vm881, %v1332, %v2855
      %v2950 = vsel %vm881, %v1335, %v2857
      %v2951 = vsel %vm881, %v1340, %v2859
      %v2952 = vsel %vm881, %v1343, %v2861
      %v2953 = vsel %vm881, %v1348, %v2863
      %vm2954 = vcmask 523264
      %v2955 = vsel %vm2954, %v2945, %v2883
      %v2956 = vsel %vm2954, %v2946, %v2885
      %v2957 = vsel %vm2954, %v2947, %v2887
      %v2958 = vsel %vm2954, %v2948, %v2889
      %v2959 = vsel %vm2954, %v2949, %v2891
      %v2960 = vsel %vm2954, %v2950, %v2893
      %v2961 = vsel %vm2954, %v2951, %v2895
      %v2962 = vsel %vm2954, %v2952, %v2897
      %v2963 = vsel %vm2954, %v2953, %v2899
      %vm2964 = vcmask 785408
      %v2965 = vsel %vm2964, %v2955, %v2919
      %v2966 = vsel %vm2964, %v2956, %v2921
      %v2967 = vsel %vm2964, %v2957, %v2923
      %v2968 = vsel %vm2964, %v2958, %v2925
      %v2969 = vsel %vm2964, %v2959, %v2927
      %v2970 = vsel %vm2964, %v2960, %v2929
      %v2971 = vsel %vm2964, %v2961, %v2931
      %v2972 = vsel %vm2964, %v2962, %v2933
      %v2973 = vsel %vm2964, %v2963, %v2935
      %2974 = vst [vmem:[%s298] sm:$0xff] %v2965
      %2975 = vst [vmem:[%s298 + $0x8] sm:$0xff] %v2966
      %2976 = vst [vmem:[%s298 + $0x10] sm:$0xff] %v2967
      %2977 = vst [vmem:[%s298 + $0x18] sm:$0xff] %v2968
      %2978 = vst [vmem:[%s298 + $0x20] sm:$0xff] %v2969
      %2979 = vst [vmem:[%s298 + $0x28] sm:$0xff] %v2970
      %2980 = vst [vmem:[%s298 + $0x30] sm:$0xff] %v2971
      %2981 = vst [vmem:[%s298 + $0x38] sm:$0xff] %v2972
      %2982 = vst [vmem:[%s298 + $0x40] sm:$0x1] %v2973
      %p2983 = scmp.lt.s32.totalorder %s18, 1
      %s2984 = scalar_select %p2983, %s18, 1
      %s2985 = smul.addr %s2984, 9
      %s2986 = smul.addr %s2985, 8
      %s2987 = scalar_lea.vmem %s7, %s2986
      // Predicated region
      $region49: #{tpu_custom_call.1} parent=47 // pred_check
        %p2988 = pneg %p193
      $region50: #{tpu_custom_call.1} parent=47 // pred_check_branch
        %2990 = sbr.rel (%p2988) target = $region52
      $region51: #{tpu_custom_call.1} parent=47 // pred_region
        _
      $region52: #{tpu_custom_call.1} parent=47 // pred_fallthru
        _
    $region48: #{tpu_custom_call.1} parent=5 // pred_fallthru
      _
    %p2991 = scmp.le.s32.totalorder 2, %s13
    // Predicated region
    $region53: #{tpu_custom_call.1} parent=5 // pred_check
      %p2992 = pneg %p2991
    $region54: #{tpu_custom_call.1} parent=5 // pred_check_branch
      %2994 = sbr.rel (%p2992) target = $region56
    $region55: #{tpu_custom_call.1} parent=5 // pred_region
      %s2995 = ssub.s32 %s13, 2
      // Predicated region
      $region57: #{tpu_custom_call.1} parent=55 // pred_check
        %p2996 = pneg %p199
      $region58: #{tpu_custom_call.1} parent=55 // pred_check_branch
        %2998 = sbr.rel (%p2996) target = $region60
      $region59: #{tpu_custom_call.1} parent=55 // pred_region
        %p2999 = scmp.lt.s32.totalorder %s19, 1
        %s3000 = scalar_select %p2999, %s19, 1
        %s3001 = smul.addr %s3000, 9
        %s3002 = smul.addr %s3001, 8
        %s3003 = scalar_lea.vmem %s7, %s3002
      $region60: #{tpu_custom_call.1} parent=55 // pred_fallthru
        _
    $region56: #{tpu_custom_call.1} parent=5 // pred_fallthru
      _
  $region6: #{tpu_custom_call.1} parent=0 // loop_footer
    %s17 = sadd.s32 1, %s13
  $region7: #{tpu_custom_call.1} parent=0 // loop_footer_branch
    %12 = sbr.rel target = $region3
  $region8: #{tpu_custom_call.1} parent=0 // loop_exit
    _

</llo_original>
